<compile_context>
chip_gen: v6e
topology: v6e:2x2x1
jax: 0.10.0
libtpu: 0.0.40
codegen_flags: <defaults>
</compile_context>

<pallas_src>
import functools

import jax
import jax.numpy as jnp
from jax import lax
from jax.experimental import pallas as pl
from jax.experimental.pallas import tpu as pltpu


_VMEM_LIMIT_BYTES = 64 * 1024 * 1024  # raise scoped VMEM (v5e default 16 MiB); still <= v7x physical.


def _compiler_params():
    return pltpu.CompilerParams(
        dimension_semantics=("parallel", "parallel"),
        vmem_limit_bytes=_VMEM_LIMIT_BYTES,
    )


# ---------------------------------------------------------------------------
# shared in-kernel helpers
# ---------------------------------------------------------------------------
def _mask_pad_rows(win, t, num_tiles):
    """Zero the first/last halo row of the (TH+2)-row window when it is the conv
    zero-padding ring (image top for tile 0, image bottom for the last tile)."""
    rows = lax.broadcasted_iota(jnp.int32, (win.shape[0], 1, 1), 0)
    valid = jnp.logical_and(
        jnp.logical_or(rows > 0, t > 0),
        jnp.logical_or(rows < win.shape[0] - 1, t < num_tiles - 1),
    )
    return jnp.where(valid, win, jnp.zeros_like(win))


def _conv3x3_from_window(win, w_mat, b):
    """3x3 conv (stride 1, pad 1) + bias + ReLU for one row tile.

    win:   (TH+2, Wd, C) rows r0-1 .. r0+TH of the image (pad rows already zeroed),
           columns unpadded (zero columns are added here).
    w_mat: (9*C, Cout) im2col weights, (ky, kx, c)-major.
    b:     (Cout,)
    Returns (TH, Wd, Cout) in f32.
    """
    R, Wd, C = win.shape
    TH = R - 2
    zcol = jnp.zeros((R, 1, C), win.dtype)
    winp = jnp.concatenate([zcol, win, zcol], axis=1)          # (R, Wd+2, C)
    # im2col: the 9 shifted slabs are built once and contracted in ONE matmul
    # with K = 9*C (instead of 9 small matmuls + running accumulator).
    slabs = [winp[ky:ky + TH, kx:kx + Wd, :]
             for ky in range(3) for kx in range(3)]
    patch = jnp.concatenate(slabs, axis=-1)                    # (TH, Wd, 9*C)
    acc = jnp.einsum("hwc,co->hwo", patch.astype(w_mat.dtype), w_mat,
                     preferred_element_type=jnp.float32)
    return jnp.maximum(acc + b.astype(jnp.float32), 0.0)


# ---------------------------------------------------------------------------
# Kernel 1: ConvTranspose2d(k=2, s=2).  Each x row tile produces output rows in
# the layout (i, kh, j, kw*Cup+oc); the wrapper's reshape to interleaved NHWC
# (N, 2H, 2W, Cup) is a free row-major reshape -> no extra HBM round trip.
# ---------------------------------------------------------------------------
def _upsample_kernel(x_ref, w0_ref, w1_ref, b_ref, o_ref):
    x = x_ref[0].astype(w0_ref.dtype)                          # (TxH, W, Cx)
    y0 = jnp.einsum("hwc,cf->hwf", x, w0_ref[...],             # kh = 0 taps
                    preferred_element_type=jnp.float32)
    y1 = jnp.einsum("hwc,cf->hwf", x, w1_ref[...],             # kh = 1 taps
                    preferred_element_type=jnp.float32)
    y = jnp.stack([y0, y1], axis=1) + b_ref[0]                 # (TxH, 2, W, 2*Cup)
    o_ref[...] = y[None].astype(o_ref.dtype)


def upsample2x2(x, w0, w1, b2, *, x_row_tile):
    """x: (N, H, W, Cx) NHWC.  Returns interleaved NHWC (N, 2H, 2W, Cup)."""
    N, H, W, Cx = x.shape
    C2 = w0.shape[1]                                           # 2 * Cup
    TxH = x_row_tile
    assert H % TxH == 0
    out5 = pl.pallas_call(
        _upsample_kernel,
        out_shape=jax.ShapeDtypeStruct((N, H, 2, W, C2), x.dtype),
        grid=(N, H // TxH),
        in_specs=[
            pl.BlockSpec((1, TxH, W, Cx), lambda n, t: (n, t, 0, 0)),
            pl.BlockSpec((Cx, C2), lambda n, t: (0, 0)),
            pl.BlockSpec((Cx, C2), lambda n, t: (0, 0)),
            pl.BlockSpec((1, C2), lambda n, t: (0, 0)),
        ],
        out_specs=pl.BlockSpec((1, TxH, 2, W, C2), lambda n, t: (n, t, 0, 0, 0)),
        compiler_params=_compiler_params(),
    )(x, w0, w1, b2)
    # Free (metadata-only) reshape: (N, H, 2, W, 2, Cup) -> (N, 2H, 2W, Cup).
    return out5.reshape(N, 2 * H, 2 * W, C2 // 2)


# ---------------------------------------------------------------------------
# Kernels 2 & 3: row-tiled 3x3 conv (+ in-kernel channel concat for conv1).
# Halo rows come from two extra 1-row BlockSpecs with clamped index maps; the
# clamped duplicates are zeroed in-kernel when they are the conv pad ring.
# ---------------------------------------------------------------------------
def _halo_row_specs(shape, TH):
    _, Hy, Wy, C = shape
    main = pl.BlockSpec((1, TH, Wy, C), lambda n, t: (n, t, 0, 0))
    above = pl.BlockSpec((1, 1, Wy, C),
                         lambda n, t: (n, jnp.maximum(t * TH - 1, 0), 0, 0))
    below = pl.BlockSpec((1, 1, Wy, C),
                         lambda n, t: (n, jnp.minimum((t + 1) * TH, Hy - 1), 0, 0))
    return main, above, below


def _cat_conv3x3_relu_kernel(um_ref, ua_ref, ub_ref, bm_ref, ba_ref, bb_ref,
                             w_ref, b_ref, o_ref):
    t = pl.program_id(1)
    num_t = pl.num_programs(1)
    uwin = jnp.concatenate([ua_ref[0], um_ref[0], ub_ref[0]], axis=0)  # (TH+2, 2W, Cup)
    bwin = jnp.concatenate([ba_ref[0], bm_ref[0], bb_ref[0]], axis=0)  # (TH+2, 2W, Cb)
    win = jnp.concatenate([uwin, bwin], axis=-1)                       # channel concat in VMEM
    win = _mask_pad_rows(win, t, num_t)
    out = _conv3x3_from_window(win, w_ref[...], b_ref[0])
    # TODO: for very narrow Cout a lane-dense (TH, 2W*Cout) output view would
    # avoid masked partial stores; skipped here for clarity.
    o_ref[...] = out[None].astype(o_ref.dtype)


def _conv3x3_relu_kernel(xm_ref, xa_ref, xb_ref, w_ref, b_ref, o_ref):
    t = pl.program_id(1)
    num_t = pl.num_programs(1)
    win = jnp.concatenate([xa_ref[0], xm_ref[0], xb_ref[0]], axis=0)
    win = _mask_pad_rows(win, t, num_t)
    out = _conv3x3_from_window(win, w_ref[...], b_ref[0])
    o_ref[...] = out[None].astype(o_ref.dtype)


def cat_conv3x3_relu(up, bridge, w_mat, b, *, row_tile):
    N, Hy, Wy, Cup = up.shape
    Cb = bridge.shape[-1]
    Cout = w_mat.shape[1]
    TH = row_tile
    assert Hy % TH == 0 and TH % 2 == 0
    um, ua, ub = _halo_row_specs(up.shape, TH)
    bm, ba, bb = _halo_row_specs(bridge.shape, TH)
    return pl.pallas_call(
        _cat_conv3x3_relu_kernel,
        out_shape=jax.ShapeDtypeStruct((N, Hy, Wy, Cout), up.dtype),
        grid=(N, Hy // TH),
        in_specs=[um, ua, ub, bm, ba, bb,
                  pl.BlockSpec((9 * (Cup + Cb), Cout), lambda n, t: (0, 0)),
                  pl.BlockSpec((1, Cout), lambda n, t: (0, 0))],
        out_specs=pl.BlockSpec((1, TH, Wy, Cout), lambda n, t: (n, t, 0, 0)),
        compiler_params=_compiler_params(),
    )(up, up, up, bridge, bridge, bridge, w_mat, b)


def conv3x3_relu(x, w_mat, b, *, row_tile):
    N, Hy, Wy, C = x.shape
    Cout = w_mat.shape[1]
    TH = row_tile
    assert Hy % TH == 0 and TH % 2 == 0
    xm, xa, xb = _halo_row_specs(x.shape, TH)
    return pl.pallas_call(
        _conv3x3_relu_kernel,
        out_shape=jax.ShapeDtypeStruct((N, Hy, Wy, Cout), x.dtype),
        grid=(N, Hy // TH),
        in_specs=[xm, xa, xb,
                  pl.BlockSpec((9 * C, Cout), lambda n, t: (0, 0)),
                  pl.BlockSpec((1, Cout), lambda n, t: (0, 0))],
        out_specs=pl.BlockSpec((1, TH, Wy, Cout), lambda n, t: (n, t, 0, 0)),
        compiler_params=_compiler_params(),
    )(x, x, x, w_mat, b)


# ---------------------------------------------------------------------------
# Parameter repacking (hoisted: run once, not per forward call).
# ---------------------------------------------------------------------------
def prepare_params(params, compute_dtype=None):
    """PyTorch layouts in: up_w (Cx,Cup,2,2), up_b (Cup,), c*_w (Cout,Cin,3,3), c*_b (Cout,).
    compute_dtype: optionally cast matmul weights (e.g. jnp.bfloat16 on v6e/v7x);
    activations are cast to match inside the kernels, accumulation stays f32."""
    wup = params["up_w"]
    Cx, Cup = wup.shape[0], wup.shape[1]
    w_t = jnp.transpose(wup, (2, 0, 3, 1))            # (kh, c, kw, oc)
    up_w0 = w_t[0].reshape(Cx, 2 * Cup)               # f2 = kw*Cup + oc
    up_w1 = w_t[1].reshape(Cx, 2 * Cup)
    up_b = jnp.tile(params["up_b"], 2)[None]          # (1, 2*Cup)

    def conv_mat(w):
        cout, cin = w.shape[0], w.shape[1]
        return jnp.transpose(w, (2, 3, 1, 0)).reshape(9 * cin, cout)  # (ky,kx,c)-major

    c1_w, c2_w = conv_mat(params["c1_w"]), conv_mat(params["c2_w"])
    c1_b, c2_b = params["c1_b"][None], params["c2_b"][None]
    if compute_dtype is not None:
        up_w0, up_w1 = up_w0.astype(compute_dtype), up_w1.astype(compute_dtype)
        c1_w, c2_w = c1_w.astype(compute_dtype), c2_w.astype(compute_dtype)
    return dict(up_w0=up_w0, up_w1=up_w1, up_b=up_b,
                c1_w=c1_w, c1_b=c1_b, c2_w=c2_w, c2_b=c2_b)


def _default_row_tile(h2, w2, cin, cout, budget_bytes=6 * 1024 * 1024):
    """Pick TH so ~(input + 9x im2col + output) f32 stays well inside scoped VMEM
    (re-derive per generation: v7x has 64 MiB physical / 32 MiB scoped default)."""
    per_row = w2 * (10 * cin + cout) * 4
    th = int(min(h2, max(2, budget_bytes // max(per_row, 1))))
    th -= th % 2
    th = max(th, 2)
    while h2 % th:
        th -= 2
    return th


# ---------------------------------------------------------------------------
# Forward passes.
# ---------------------------------------------------------------------------
def up_block_forward_nhwc(x, bridge, prep, *, row_tile=None):
    """NHWC end-to-end path (use this inside a full decoder to avoid layout churn)."""
    N, H, W, Cx = x.shape
    H2, W2 = 2 * H, 2 * W
    assert bridge.shape[1] == H2 and bridge.shape[2] == W2
    Cup = prep["up_w0"].shape[1] // 2
    Cb = bridge.shape[-1]
    C1 = prep["c1_w"].shape[1]
    if row_tile is None:
        row_tile = _default_row_tile(H2, W2, Cup + Cb, C1)
    x_row_tile = max(1, row_tile // 2)
    while H % x_row_tile:
        x_row_tile -= 1

    up = upsample2x2(x, prep["up_w0"], prep["up_w1"], prep["up_b"],
                     x_row_tile=x_row_tile)
    y = cat_conv3x3_relu(up, bridge, prep["c1_w"], prep["c1_b"], row_tile=row_tile)
    y = conv3x3_relu(y, prep["c2_w"], prep["c2_b"], row_tile=row_tile)
    return y


def up_block_forward(x_nchw, bridge_nchw, prep, *, row_tile=None):
    # NCHW wrapper only for PyTorch interface parity; the decoder hot path
    # should stay NHWC (up_block_forward_nhwc) so these transposes run once per model.
    x = jnp.transpose(x_nchw, (0, 2, 3, 1))
    bridge = jnp.transpose(bridge_nchw, (0, 2, 3, 1))
    y = up_block_forward_nhwc(x, bridge, prep, row_tile=row_tile)
    return jnp.transpose(y, (0, 3, 1, 2))


# ---------------------------------------------------------------------------
# Pure-JAX reference (same math, no Pallas) for the correctness check.
# ---------------------------------------------------------------------------
def _ref_forward(x_nchw, bridge_nchw, params):
    N, Cx, H, W = x_nchw.shape
    Cup = params["up_w"].shape[1]
    t = jnp.einsum("ncij,cokl->nijklo", x_nchw, params["up_w"]) + params["up_b"]
    up = jnp.transpose(t, (0, 1, 3, 2, 4, 5)).reshape(N, 2 * H, 2 * W, Cup)
    x = jnp.concatenate([up, jnp.transpose(bridge_nchw, (0, 2, 3, 1))], axis=-1)

    def conv(xh, w, b):
        n, h, ww, _ = xh.shape
        co = w.shape[0]
        xp = jnp.pad(xh, ((0, 0), (1, 1), (1, 1), (0, 0)))
        out = jnp.zeros((n, h, ww, co), jnp.float32)
        for ky in range(3):
            for kx in range(3):
                out = out + jnp.einsum("nhwc,oc->nhwo",
                                       xp[:, ky:ky + h, kx:kx + ww, :],
                                       w[:, :, ky, kx])
        return jnp.maximum(out + b, 0.0)

    x = conv(x, params["c1_w"], params["c1_b"])
    x = conv(x, params["c2_w"], params["c2_b"])
    return jnp.transpose(x, (0, 3, 1, 2))


if __name__ == "__main__":
    # Small shapes: x (N=2, C=8, 8, 8), bridge (2, 8, 16, 16)
    N, C_x, H, W = 2, 8, 8, 8
    C_up, C_bridge, C_out = 8, 8, 8

    key = jax.random.PRNGKey(0)
    ks = jax.random.split(key, 8)
    params = {
        "up_w": 0.1 * jax.random.normal(ks[0], (C_x, C_up, 2, 2), jnp.float32),
        "up_b": 0.1 * jax.random.normal(ks[1], (C_up,), jnp.float32),
        "c1_w": 0.1 * jax.random.normal(ks[2], (C_out, C_up + C_bridge, 3, 3), jnp.float32),
        "c1_b": 0.1 * jax.random.normal(ks[3], (C_out,), jnp.float32),
        "c2_w": 0.1 * jax.random.normal(ks[4], (C_out, C_out, 3, 3), jnp.float32),
        "c2_b": 0.1 * jax.random.normal(ks[5], (C_out,), jnp.float32),
    }
    x = jax.random.normal(ks[6], (N, C_x, H, W), jnp.float32)
    bridge = jax.random.normal(ks[7], (N, C_bridge, 2 * H, 2 * W), jnp.float32)

    prep = prepare_params(params)  # weight repack hoisted out of the per-call path

    fwd = jax.jit(functools.partial(up_block_forward, row_tile=8))
    out = jax.block_until_ready(fwd(x, bridge, prep))

    ref = _ref_forward(x, bridge, params)
    assert out.shape == (N, C_out, 2 * H, 2 * W), out.shape
    err = float(jnp.max(jnp.abs(out - ref)))
    assert jnp.allclose(out, ref, rtol=1e-4, atol=1e-3), err

    print("KERNEL_OK")
</pallas_src>

<mosaic_0001>
module attributes {stable_mosaic.version = 11 : i64} {
  func.func @_upsample_kernel(%arg0: i32, %arg1: i32, %arg2: memref<1x4x8x8xf32, #tpu.memory_space<vmem>>, %arg3: memref<8x16xf32, #tpu.memory_space<vmem>>, %arg4: memref<8x16xf32, #tpu.memory_space<vmem>>, %arg5: memref<1x16xf32, #tpu.memory_space<vmem>>, %arg6: memref<1x4x2x8x16xf32, #tpu.memory_space<vmem>>) attributes {dimension_semantics = [#tpu.dimension_semantics<parallel>, #tpu.dimension_semantics<parallel>], iteration_bounds = array<i64: 2, 2>, scalar_prefetch = 0 : i64, scratch_operands = 0 : i64, tpu.core_type = #tpu.core_type<tc>, window_params = [{transform_indices = @transform_0, window_bounds = array<i64: 1, 4, 8, 8>}, {pipeline_mode = #tpu.pipeline_mode<synchronous>, transform_indices = @transform_1, window_bounds = array<i64: 8, 16>}, {pipeline_mode = #tpu.pipeline_mode<synchronous>, transform_indices = @transform_2, window_bounds = array<i64: 8, 16>}, {pipeline_mode = #tpu.pipeline_mode<synchronous>, transform_indices = @transform_3, window_bounds = array<i64: 1, 16>}, {transform_indices = @transform_4, window_bounds = array<i64: 1, 4, 2, 8, 16>}]} {
    %c0 = arith.constant 0 : index
    %c0_0 = arith.constant 0 : index
    %c0_1 = arith.constant 0 : index
    %c0_2 = arith.constant 0 : index
    %0 = vector.load %arg2[%c0, %c0_0, %c0_1, %c0_2] : memref<1x4x8x8xf32, #tpu.memory_space<vmem>>, vector<1x4x8x8xf32>
    %1 = vector.shape_cast %0 : vector<1x4x8x8xf32> to vector<4x8x8xf32>
    %c0_3 = arith.constant 0 : index
    %c0_4 = arith.constant 0 : index
    %2 = vector.load %arg3[%c0_3, %c0_4] : memref<8x16xf32, #tpu.memory_space<vmem>>, vector<8x16xf32>
    "tpu.trace_start"() <{level = 10 : i32, message = "hwc,cf->hwf"}> : () -> ()
    %cst = arith.constant dense<0.000000e+00> : vector<4x8x16xf32>
    %3 = tpu.matmul %1, %2, %cst {dimension_numbers = #tpu.dot_dimension_numbers<[2], [0], [0, 1], [1], [0, 0, 0, 1, 1, 1], [], []>} : vector<4x8x8xf32>, vector<8x16xf32>, vector<4x8x16xf32> -> vector<4x8x16xf32>
    "tpu.trace_stop"() : () -> ()
    %c0_5 = arith.constant 0 : index
    %c0_6 = arith.constant 0 : index
    %4 = vector.load %arg4[%c0_5, %c0_6] : memref<8x16xf32, #tpu.memory_space<vmem>>, vector<8x16xf32>
    "tpu.trace_start"() <{level = 10 : i32, message = "hwc,cf->hwf"}> : () -> ()
    %cst_7 = arith.constant dense<0.000000e+00> : vector<4x8x16xf32>
    %5 = tpu.matmul %1, %4, %cst_7 {dimension_numbers = #tpu.dot_dimension_numbers<[2], [0], [0, 1], [1], [0, 0, 0, 1, 1, 1], [], []>} : vector<4x8x8xf32>, vector<8x16xf32>, vector<4x8x16xf32> -> vector<4x8x16xf32>
    "tpu.trace_stop"() : () -> ()
    %6 = vector.shape_cast %3 : vector<4x8x16xf32> to vector<4x1x8x16xf32>
    %7 = vector.shape_cast %5 : vector<4x8x16xf32> to vector<4x1x8x16xf32>
    %8 = tpu.concatenate %6, %7 in 1 : vector<4x1x8x16xf32>, vector<4x1x8x16xf32> -> vector<4x2x8x16xf32>
    %c0_8 = arith.constant 0 : index
    %c0_9 = arith.constant 0 : index
    %9 = vector.load %arg5[%c0_8, %c0_9] : memref<1x16xf32, #tpu.memory_space<vmem>>, vector<1x16xf32>
    %10 = vector.shape_cast %9 : vector<1x16xf32> to vector<16xf32>
    %11 = vector.shape_cast %10 : vector<16xf32> to vector<1x1x1x16xf32>
    %12 = vector.broadcast %11 : vector<1x1x1x16xf32> to vector<4x2x8x16xf32>
    %13 = arith.addf %8, %12 : vector<4x2x8x16xf32>
    %14 = vector.shape_cast %13 : vector<4x2x8x16xf32> to vector<1x4x2x8x16xf32>
    %c0_10 = arith.constant 0 : index
    %c0_11 = arith.constant 0 : index
    %c0_12 = arith.constant 0 : index
    %c0_13 = arith.constant 0 : index
    %c0_14 = arith.constant 0 : index
    %15 = vector.load %arg6[%c0_10, %c0_11, %c0_12, %c0_13, %c0_14] : memref<1x4x2x8x16xf32, #tpu.memory_space<vmem>>, vector<1x4x2x8x16xf32>
    tpu.vector_store %arg6[%c0_10, %c0_11, %c0_12, %c0_13, %c0_14], %14 {strides = array<i32>} : memref<1x4x2x8x16xf32, #tpu.memory_space<vmem>>, vector<1x4x2x8x16xf32>,
    return
  }
  func.func @transform_0(%arg0: i32, %arg1: i32) -> (i32, i32, i32, i32) {
    %c0_i32 = arith.constant 0 : i32
    %c0_i32_0 = arith.constant 0 : i32
    %c0_i32_1 = arith.constant 0 : i32
    return %arg0, %arg1, %c0_i32, %c0_i32_0 : i32, i32, i32, i32
  }
  func.func @transform_1(%arg0: i32, %arg1: i32) -> (i32, i32) {
    %c0_i32 = arith.constant 0 : i32
    %c0_i32_0 = arith.constant 0 : i32
    %c0_i32_1 = arith.constant 0 : i32
    return %c0_i32, %c0_i32_0 : i32, i32
  }
  func.func @transform_2(%arg0: i32, %arg1: i32) -> (i32, i32) {
    %c0_i32 = arith.constant 0 : i32
    %c0_i32_0 = arith.constant 0 : i32
    %c0_i32_1 = arith.constant 0 : i32
    return %c0_i32, %c0_i32_0 : i32, i32
  }
  func.func @transform_3(%arg0: i32, %arg1: i32) -> (i32, i32) {
    %c0_i32 = arith.constant 0 : i32
    %c0_i32_0 = arith.constant 0 : i32
    %c0_i32_1 = arith.constant 0 : i32
    return %c0_i32, %c0_i32_0 : i32, i32
  }
  func.func @transform_4(%arg0: i32, %arg1: i32) -> (i32, i32, i32, i32, i32) {
    %c0_i32 = arith.constant 0 : i32
    %c0_i32_0 = arith.constant 0 : i32
    %c0_i32_1 = arith.constant 0 : i32
    %c0_i32_2 = arith.constant 0 : i32
    return %arg0, %arg1, %c0_i32, %c0_i32_0, %c0_i32_1 : i32, i32, i32, i32, i32
  }
}

module attributes {stable_mosaic.version = 11 : i64} {
  func.func @_cat_conv3x3_relu_kernel(%arg0: i32, %arg1: i32, %arg2: memref<1x8x16x8xf32, #tpu.memory_space<vmem>>, %arg3: memref<1x1x16x8xf32, #tpu.memory_space<vmem>>, %arg4: memref<1x1x16x8xf32, #tpu.memory_space<vmem>>, %arg5: memref<1x8x16x8xf32, #tpu.memory_space<vmem>>, %arg6: memref<1x1x16x8xf32, #tpu.memory_space<vmem>>, %arg7: memref<1x1x16x8xf32, #tpu.memory_space<vmem>>, %arg8: memref<144x8xf32, #tpu.memory_space<vmem>>, %arg9: memref<1x8xf32, #tpu.memory_space<vmem>>, %arg10: memref<1x8x16x8xf32, #tpu.memory_space<vmem>>) attributes {dimension_semantics = [#tpu.dimension_semantics<parallel>, #tpu.dimension_semantics<parallel>], iteration_bounds = array<i64: 2, 2>, scalar_prefetch = 0 : i64, scratch_operands = 0 : i64, tpu.core_type = #tpu.core_type<tc>, window_params = [{transform_indices = @transform_0, window_bounds = array<i64: 1, 8, 16, 8>}, {transform_indices = @transform_1, window_bounds = array<i64: 1, 1, 16, 8>}, {transform_indices = @transform_2, window_bounds = array<i64: 1, 1, 16, 8>}, {transform_indices = @transform_3, window_bounds = array<i64: 1, 8, 16, 8>}, {transform_indices = @transform_4, window_bounds = array<i64: 1, 1, 16, 8>}, {transform_indices = @transform_5, window_bounds = array<i64: 1, 1, 16, 8>}, {pipeline_mode = #tpu.pipeline_mode<synchronous>, transform_indices = @transform_6, window_bounds = array<i64: 144, 8>}, {pipeline_mode = #tpu.pipeline_mode<synchronous>, transform_indices = @transform_7, window_bounds = array<i64: 1, 8>}, {transform_indices = @transform_8, window_bounds = array<i64: 1, 8, 16, 8>}]} {
    %c0 = arith.constant 0 : index
    %c0_0 = arith.constant 0 : index
    %c0_1 = arith.constant 0 : index
    %c0_2 = arith.constant 0 : index
    %0 = vector.load %arg3[%c0, %c0_0, %c0_1, %c0_2] : memref<1x1x16x8xf32, #tpu.memory_space<vmem>>, vector<1x1x16x8xf32>
    %1 = vector.shape_cast %0 : vector<1x1x16x8xf32> to vector<1x16x8xf32>
    %c0_3 = arith.constant 0 : index
    %c0_4 = arith.constant 0 : index
    %c0_5 = arith.constant 0 : index
    %c0_6 = arith.constant 0 : index
    %2 = vector.load %arg2[%c0_3, %c0_4, %c0_5, %c0_6] : memref<1x8x16x8xf32, #tpu.memory_space<vmem>>, vector<1x8x16x8xf32>
    %3 = vector.shape_cast %2 : vector<1x8x16x8xf32> to vector<8x16x8xf32>
    %c0_7 = arith.constant 0 : index
    %c0_8 = arith.constant 0 : index
    %c0_9 = arith.constant 0 : index
    %c0_10 = arith.constant 0 : index
    %4 = vector.load %arg4[%c0_7, %c0_8, %c0_9, %c0_10] : memref<1x1x16x8xf32, #tpu.memory_space<vmem>>, vector<1x1x16x8xf32>
    %5 = vector.shape_cast %4 : vector<1x1x16x8xf32> to vector<1x16x8xf32>
    %6 = tpu.concatenate %1, %3, %5 in 0 : vector<1x16x8xf32>, vector<8x16x8xf32>, vector<1x16x8xf32> -> vector<10x16x8xf32>
    %c0_11 = arith.constant 0 : index
    %c0_12 = arith.constant 0 : index
    %c0_13 = arith.constant 0 : index
    %c0_14 = arith.constant 0 : index
    %7 = vector.load %arg6[%c0_11, %c0_12, %c0_13, %c0_14] : memref<1x1x16x8xf32, #tpu.memory_space<vmem>>, vector<1x1x16x8xf32>
    %8 = vector.shape_cast %7 : vector<1x1x16x8xf32> to vector<1x16x8xf32>
    %c0_15 = arith.constant 0 : index
    %c0_16 = arith.constant 0 : index
    %c0_17 = arith.constant 0 : index
    %c0_18 = arith.constant 0 : index
    %9 = vector.load %arg5[%c0_15, %c0_16, %c0_17, %c0_18] : memref<1x8x16x8xf32, #tpu.memory_space<vmem>>, vector<1x8x16x8xf32>
    %10 = vector.shape_cast %9 : vector<1x8x16x8xf32> to vector<8x16x8xf32>
    %c0_19 = arith.constant 0 : index
    %c0_20 = arith.constant 0 : index
    %c0_21 = arith.constant 0 : index
    %c0_22 = arith.constant 0 : index
    %11 = vector.load %arg7[%c0_19, %c0_20, %c0_21, %c0_22] : memref<1x1x16x8xf32, #tpu.memory_space<vmem>>, vector<1x1x16x8xf32>
    %12 = vector.shape_cast %11 : vector<1x1x16x8xf32> to vector<1x16x8xf32>
    %13 = tpu.concatenate %8, %10, %12 in 0 : vector<1x16x8xf32>, vector<8x16x8xf32>, vector<1x16x8xf32> -> vector<10x16x8xf32>
    %14 = tpu.concatenate %6, %13 in 2 : vector<10x16x8xf32>, vector<10x16x8xf32> -> vector<10x16x16xf32>
    %15 = tpu.iota {dimensions = array<i32: 0>} : vector<10x1x1xi32>
    %c0_i32 = arith.constant 0 : i32
    %16 = vector.broadcast %c0_i32 : i32 to vector<10x1x1xi32>
    %17 = arith.cmpi sgt, %15, %16 : vector<10x1x1xi32>
    %c0_i32_23 = arith.constant 0 : i32
    %18 = arith.cmpi sgt, %arg1, %c0_i32_23 : i32
    %19 = vector.broadcast %18 : i1 to vector<10x1x1xi1>
    %20 = arith.ori %17, %19 : vector<10x1x1xi1>
    %c9_i32 = arith.constant 9 : i32
    %21 = vector.broadcast %c9_i32 : i32 to vector<10x1x1xi32>
    %22 = arith.cmpi slt, %15, %21 : vector<10x1x1xi32>
    %c1_i32 = arith.constant 1 : i32
    %23 = arith.cmpi slt, %arg1, %c1_i32 : i32
    %24 = vector.broadcast %23 : i1 to vector<10x1x1xi1>
    %25 = arith.ori %22, %24 : vector<10x1x1xi1>
    %26 = arith.andi %20, %25 : vector<10x1x1xi1>
    %cst = arith.constant 0.000000e+00 : f32
    %27 = vector.broadcast %cst : f32 to vector<10x16x16xf32>
    %28 = vector.shape_cast %26 : vector<10x1x1xi1> to vector<10x1x1xi1>
    %29 = vector.broadcast %28 : vector<10x1x1xi1> to vector<10x16x16xi1>
    %30 = arith.select %29, %14, %27 : vector<10x16x16xi1>, vector<10x16x16xf32>
    %c0_24 = arith.constant 0 : index
    %c0_25 = arith.constant 0 : index
    %31 = vector.load %arg8[%c0_24, %c0_25] : memref<144x8xf32, #tpu.memory_space<vmem>>, vector<144x8xf32>
    %c0_26 = arith.constant 0 : index
    %c0_27 = arith.constant 0 : index
    %32 = vector.load %arg9[%c0_26, %c0_27] : memref<1x8xf32, #tpu.memory_space<vmem>>, vector<1x8xf32>
    %33 = vector.shape_cast %32 : vector<1x8xf32> to vector<8xf32>
    %cst_28 = arith.constant 0.000000e+00 : f32
    %34 = vector.broadcast %cst_28 : f32 to vector<10x1x16xf32>
    %35 = tpu.concatenate %34, %30, %34 in 1 : vector<10x1x16xf32>, vector<10x16x16xf32>, vector<10x1x16xf32> -> vector<10x18x16xf32>
    %36 = vector.extract_strided_slice %35 {offsets = [0, 0, 0], sizes = [8, 16, 16], strides = [1, 1, 1]} : vector<10x18x16xf32> to vector<8x16x16xf32>
    %37 = vector.extract_strided_slice %35 {offsets = [0, 1, 0], sizes = [8, 16, 16], strides = [1, 1, 1]} : vector<10x18x16xf32> to vector<8x16x16xf32>
    %38 = vector.extract_strided_slice %35 {offsets = [0, 2, 0], sizes = [8, 16, 16], strides = [1, 1, 1]} : vector<10x18x16xf32> to vector<8x16x16xf32>
    %39 = vector.extract_strided_slice %35 {offsets = [1, 0, 0], sizes = [8, 16, 16], strides = [1, 1, 1]} : vector<10x18x16xf32> to vector<8x16x16xf32>
    %40 = vector.extract_strided_slice %35 {offsets = [1, 1, 0], sizes = [8, 16, 16], strides = [1, 1, 1]} : vector<10x18x16xf32> to vector<8x16x16xf32>
    %41 = vector.extract_strided_slice %35 {offsets = [1, 2, 0], sizes = [8, 16, 16], strides = [1, 1, 1]} : vector<10x18x16xf32> to vector<8x16x16xf32>
    %42 = vector.extract_strided_slice %35 {offsets = [2, 0, 0], sizes = [8, 16, 16], strides = [1, 1, 1]} : vector<10x18x16xf32> to vector<8x16x16xf32>
    %43 = vector.extract_strided_slice %35 {offsets = [2, 1, 0], sizes = [8, 16, 16], strides = [1, 1, 1]} : vector<10x18x16xf32> to vector<8x16x16xf32>
    %44 = vector.extract_strided_slice %35 {offsets = [2, 2, 0], sizes = [8, 16, 16], strides = [1, 1, 1]} : vector<10x18x16xf32> to vector<8x16x16xf32>
    %45 = tpu.concatenate %36, %37, %38, %39, %40, %41, %42, %43, %44 in 2 : vector<8x16x16xf32>, vector<8x16x16xf32>, vector<8x16x16xf32>, vector<8x16x16xf32>, vector<8x16x16xf32>, vector<8x16x16xf32>, vector<8x16x16xf32>, vector<8x16x16xf32>, vector<8x16x16xf32> -> vector<8x16x144xf32>
    "tpu.trace_start"() <{level = 10 : i32, message = "hwc,co->hwo"}> : () -> ()
    %cst_29 = arith.constant dense<0.000000e+00> : vector<8x16x8xf32>
    %46 = tpu.matmul %45, %31, %cst_29 {dimension_numbers = #tpu.dot_dimension_numbers<[2], [0], [0, 1], [1], [0, 0, 0, 1, 1, 1], [], []>} : vector<8x16x144xf32>, vector<144x8xf32>, vector<8x16x8xf32> -> vector<8x16x8xf32>
    "tpu.trace_stop"() : () -> ()
    %47 = vector.shape_cast %33 : vector<8xf32> to vector<1x1x8xf32>
    %48 = vector.broadcast %47 : vector<1x1x8xf32> to vector<8x16x8xf32>
    %49 = arith.addf %46, %48 : vector<8x16x8xf32>
    %cst_30 = arith.constant 0.000000e+00 : f32
    %50 = vector.broadcast %cst_30 : f32 to vector<8x16x8xf32>
    %51 = arith.maximumf %49, %50 : vector<8x16x8xf32>
    %52 = vector.shape_cast %51 : vector<8x16x8xf32> to vector<1x8x16x8xf32>
    %c0_31 = arith.constant 0 : index
    %c0_32 = arith.constant 0 : index
    %c0_33 = arith.constant 0 : index
    %c0_34 = arith.constant 0 : index
    %53 = vector.load %arg10[%c0_31, %c0_32, %c0_33, %c0_34] : memref<1x8x16x8xf32, #tpu.memory_space<vmem>>, vector<1x8x16x8xf32>
    tpu.vector_store %arg10[%c0_31, %c0_32, %c0_33, %c0_34], %52 {strides = array<i32>} : memref<1x8x16x8xf32, #tpu.memory_space<vmem>>, vector<1x8x16x8xf32>,
    return
  }
  func.func @transform_0(%arg0: i32, %arg1: i32) -> (i32, i32, i32, i32) {
    %c0_i32 = arith.constant 0 : i32
    %c0_i32_0 = arith.constant 0 : i32
    %c0_i32_1 = arith.constant 0 : i32
    return %arg0, %arg1, %c0_i32, %c0_i32_0 : i32, i32, i32, i32
  }
  func.func @transform_1(%arg0: i32, %arg1: i32) -> (i32, i32, i32, i32) {
    %c8_i32 = arith.constant 8 : i32
    %0 = arith.muli %arg1, %c8_i32 : i32
    %c1_i32 = arith.constant 1 : i32
    %1 = arith.subi %0, %c1_i32 : i32
    %c0_i32 = arith.constant 0 : i32
    %2 = arith.maxsi %1, %c0_i32 : i32
    %c0_i32_0 = arith.constant 0 : i32
    %c0_i32_1 = arith.constant 0 : i32
    %c0_i32_2 = arith.constant 0 : i32
    return %arg0, %2, %c0_i32_0, %c0_i32_1 : i32, i32, i32, i32
  }
  func.func @transform_2(%arg0: i32, %arg1: i32) -> (i32, i32, i32, i32) {
    %c1_i32 = arith.constant 1 : i32
    %0 = arith.addi %arg1, %c1_i32 : i32
    %c8_i32 = arith.constant 8 : i32
    %1 = arith.muli %0, %c8_i32 : i32
    %c15_i32 = arith.constant 15 : i32
    %2 = arith.minsi %1, %c15_i32 : i32
    %c0_i32 = arith.constant 0 : i32
    %c0_i32_0 = arith.constant 0 : i32
    %c0_i32_1 = arith.constant 0 : i32
    return %arg0, %2, %c0_i32, %c0_i32_0 : i32, i32, i32, i32
  }
  func.func @transform_3(%arg0: i32, %arg1: i32) -> (i32, i32, i32, i32) {
    %c0_i32 = arith.constant 0 : i32
    %c0_i32_0 = arith.constant 0 : i32
    %c0_i32_1 = arith.constant 0 : i32
    return %arg0, %arg1, %c0_i32, %c0_i32_0 : i32, i32, i32, i32
  }
  func.func @transform_4(%arg0: i32, %arg1: i32) -> (i32, i32, i32, i32) {
    %c8_i32 = arith.constant 8 : i32
    %0 = arith.muli %arg1, %c8_i32 : i32
    %c1_i32 = arith.constant 1 : i32
    %1 = arith.subi %0, %c1_i32 : i32
    %c0_i32 = arith.constant 0 : i32
    %2 = arith.maxsi %1, %c0_i32 : i32
    %c0_i32_0 = arith.constant 0 : i32
    %c0_i32_1 = arith.constant 0 : i32
    %c0_i32_2 = arith.constant 0 : i32
    return %arg0, %2, %c0_i32_0, %c0_i32_1 : i32, i32, i32, i32
  }
  func.func @transform_5(%arg0: i32, %arg1: i32) -> (i32, i32, i32, i32) {
    %c1_i32 = arith.constant 1 : i32
    %0 = arith.addi %arg1, %c1_i32 : i32
    %c8_i32 = arith.constant 8 : i32
    %1 = arith.muli %0, %c8_i32 : i32
    %c15_i32 = arith.constant 15 : i32
    %2 = arith.minsi %1, %c15_i32 : i32
    %c0_i32 = arith.constant 0 : i32
    %c0_i32_0 = arith.constant 0 : i32
    %c0_i32_1 = arith.constant 0 : i32
    return %arg0, %2, %c0_i32, %c0_i32_0 : i32, i32, i32, i32
  }
  func.func @transform_6(%arg0: i32, %arg1: i32) -> (i32, i32) {
    %c0_i32 = arith.constant 0 : i32
    %c0_i32_0 = arith.constant 0 : i32
    %c0_i32_1 = arith.constant 0 : i32
    return %c0_i32, %c0_i32_0 : i32, i32
  }
  func.func @transform_7(%arg0: i32, %arg1: i32) -> (i32, i32) {
    %c0_i32 = arith.constant 0 : i32
    %c0_i32_0 = arith.constant 0 : i32
    %c0_i32_1 = arith.constant 0 : i32
    return %c0_i32, %c0_i32_0 : i32, i32
  }
  func.func @transform_8(%arg0: i32, %arg1: i32) -> (i32, i32, i32, i32) {
    %c0_i32 = arith.constant 0 : i32
    %c0_i32_0 = arith.constant 0 : i32
    %c0_i32_1 = arith.constant 0 : i32
    return %arg0, %arg1, %c0_i32, %c0_i32_0 : i32, i32, i32, i32
  }
}

module attributes {stable_mosaic.version = 11 : i64} {
  func.func @_conv3x3_relu_kernel(%arg0: i32, %arg1: i32, %arg2: memref<1x8x16x8xf32, #tpu.memory_space<vmem>>, %arg3: memref<1x1x16x8xf32, #tpu.memory_space<vmem>>, %arg4: memref<1x1x16x8xf32, #tpu.memory_space<vmem>>, %arg5: memref<72x8xf32, #tpu.memory_space<vmem>>, %arg6: memref<1x8xf32, #tpu.memory_space<vmem>>, %arg7: memref<1x8x16x8xf32, #tpu.memory_space<vmem>>) attributes {dimension_semantics = [#tpu.dimension_semantics<parallel>, #tpu.dimension_semantics<parallel>], iteration_bounds = array<i64: 2, 2>, scalar_prefetch = 0 : i64, scratch_operands = 0 : i64, tpu.core_type = #tpu.core_type<tc>, window_params = [{transform_indices = @transform_0, window_bounds = array<i64: 1, 8, 16, 8>}, {transform_indices = @transform_1, window_bounds = array<i64: 1, 1, 16, 8>}, {transform_indices = @transform_2, window_bounds = array<i64: 1, 1, 16, 8>}, {pipeline_mode = #tpu.pipeline_mode<synchronous>, transform_indices = @transform_3, window_bounds = array<i64: 72, 8>}, {pipeline_mode = #tpu.pipeline_mode<synchronous>, transform_indices = @transform_4, window_bounds = array<i64: 1, 8>}, {transform_indices = @transform_5, window_bounds = array<i64: 1, 8, 16, 8>}]} {
    %c0 = arith.constant 0 : index
    %c0_0 = arith.constant 0 : index
    %c0_1 = arith.constant 0 : index
    %c0_2 = arith.constant 0 : index
    %0 = vector.load %arg3[%c0, %c0_0, %c0_1, %c0_2] : memref<1x1x16x8xf32, #tpu.memory_space<vmem>>, vector<1x1x16x8xf32>
    %1 = vector.shape_cast %0 : vector<1x1x16x8xf32> to vector<1x16x8xf32>
    %c0_3 = arith.constant 0 : index
    %c0_4 = arith.constant 0 : index
    %c0_5 = arith.constant 0 : index
    %c0_6 = arith.constant 0 : index
    %2 = vector.load %arg2[%c0_3, %c0_4, %c0_5, %c0_6] : memref<1x8x16x8xf32, #tpu.memory_space<vmem>>, vector<1x8x16x8xf32>
    %3 = vector.shape_cast %2 : vector<1x8x16x8xf32> to vector<8x16x8xf32>
    %c0_7 = arith.constant 0 : index
    %c0_8 = arith.constant 0 : index
    %c0_9 = arith.constant 0 : index
    %c0_10 = arith.constant 0 : index
    %4 = vector.load %arg4[%c0_7, %c0_8, %c0_9, %c0_10] : memref<1x1x16x8xf32, #tpu.memory_space<vmem>>, vector<1x1x16x8xf32>
    %5 = vector.shape_cast %4 : vector<1x1x16x8xf32> to vector<1x16x8xf32>
    %6 = tpu.concatenate %1, %3, %5 in 0 : vector<1x16x8xf32>, vector<8x16x8xf32>, vector<1x16x8xf32> -> vector<10x16x8xf32>
    %7 = tpu.iota {dimensions = array<i32: 0>} : vector<10x1x1xi32>
    %c0_i32 = arith.constant 0 : i32
    %8 = vector.broadcast %c0_i32 : i32 to vector<10x1x1xi32>
    %9 = arith.cmpi sgt, %7, %8 : vector<10x1x1xi32>
    %c0_i32_11 = arith.constant 0 : i32
    %10 = arith.cmpi sgt, %arg1, %c0_i32_11 : i32
    %11 = vector.broadcast %10 : i1 to vector<10x1x1xi1>
    %12 = arith.ori %9, %11 : vector<10x1x1xi1>
    %c9_i32 = arith.constant 9 : i32
    %13 = vector.broadcast %c9_i32 : i32 to vector<10x1x1xi32>
    %14 = arith.cmpi slt, %7, %13 : vector<10x1x1xi32>
    %c1_i32 = arith.constant 1 : i32
    %15 = arith.cmpi slt, %arg1, %c1_i32 : i32
    %16 = vector.broadcast %15 : i1 to vector<10x1x1xi1>
    %17 = arith.ori %14, %16 : vector<10x1x1xi1>
    %18 = arith.andi %12, %17 : vector<10x1x1xi1>
    %cst = arith.constant 0.000000e+00 : f32
    %19 = vector.broadcast %cst : f32 to vector<10x16x8xf32>
    %20 = vector.shape_cast %18 : vector<10x1x1xi1> to vector<10x1x1xi1>
    %21 = vector.broadcast %20 : vector<10x1x1xi1> to vector<10x16x8xi1>
    %22 = arith.select %21, %6, %19 : vector<10x16x8xi1>, vector<10x16x8xf32>
    %c0_12 = arith.constant 0 : index
    %c0_13 = arith.constant 0 : index
    %23 = vector.load %arg5[%c0_12, %c0_13] : memref<72x8xf32, #tpu.memory_space<vmem>>, vector<72x8xf32>
    %c0_14 = arith.constant 0 : index
    %c0_15 = arith.constant 0 : index
    %24 = vector.load %arg6[%c0_14, %c0_15] : memref<1x8xf32, #tpu.memory_space<vmem>>, vector<1x8xf32>
    %25 = vector.shape_cast %24 : vector<1x8xf32> to vector<8xf32>
    %cst_16 = arith.constant 0.000000e+00 : f32
    %26 = vector.broadcast %cst_16 : f32 to vector<10x1x8xf32>
    %27 = tpu.concatenate %26, %22, %26 in 1 : vector<10x1x8xf32>, vector<10x16x8xf32>, vector<10x1x8xf32> -> vector<10x18x8xf32>
    %28 = vector.extract_strided_slice %27 {offsets = [0, 0, 0], sizes = [8, 16, 8], strides = [1, 1, 1]} : vector<10x18x8xf32> to vector<8x16x8xf32>
    %29 = vector.extract_strided_slice %27 {offsets = [0, 1, 0], sizes = [8, 16, 8], strides = [1, 1, 1]} : vector<10x18x8xf32> to vector<8x16x8xf32>
    %30 = vector.extract_strided_slice %27 {offsets = [0, 2, 0], sizes = [8, 16, 8], strides = [1, 1, 1]} : vector<10x18x8xf32> to vector<8x16x8xf32>
    %31 = vector.extract_strided_slice %27 {offsets = [1, 0, 0], sizes = [8, 16, 8], strides = [1, 1, 1]} : vector<10x18x8xf32> to vector<8x16x8xf32>
    %32 = vector.extract_strided_slice %27 {offsets = [1, 1, 0], sizes = [8, 16, 8], strides = [1, 1, 1]} : vector<10x18x8xf32> to vector<8x16x8xf32>
    %33 = vector.extract_strided_slice %27 {offsets = [1, 2, 0], sizes = [8, 16, 8], strides = [1, 1, 1]} : vector<10x18x8xf32> to vector<8x16x8xf32>
    %34 = vector.extract_strided_slice %27 {offsets = [2, 0, 0], sizes = [8, 16, 8], strides = [1, 1, 1]} : vector<10x18x8xf32> to vector<8x16x8xf32>
    %35 = vector.extract_strided_slice %27 {offsets = [2, 1, 0], sizes = [8, 16, 8], strides = [1, 1, 1]} : vector<10x18x8xf32> to vector<8x16x8xf32>
    %36 = vector.extract_strided_slice %27 {offsets = [2, 2, 0], sizes = [8, 16, 8], strides = [1, 1, 1]} : vector<10x18x8xf32> to vector<8x16x8xf32>
    %37 = tpu.concatenate %28, %29, %30, %31, %32, %33, %34, %35, %36 in 2 : vector<8x16x8xf32>, vector<8x16x8xf32>, vector<8x16x8xf32>, vector<8x16x8xf32>, vector<8x16x8xf32>, vector<8x16x8xf32>, vector<8x16x8xf32>, vector<8x16x8xf32>, vector<8x16x8xf32> -> vector<8x16x72xf32>
    "tpu.trace_start"() <{level = 10 : i32, message = "hwc,co->hwo"}> : () -> ()
    %cst_17 = arith.constant dense<0.000000e+00> : vector<8x16x8xf32>
    %38 = tpu.matmul %37, %23, %cst_17 {dimension_numbers = #tpu.dot_dimension_numbers<[2], [0], [0, 1], [1], [0, 0, 0, 1, 1, 1], [], []>} : vector<8x16x72xf32>, vector<72x8xf32>, vector<8x16x8xf32> -> vector<8x16x8xf32>
    "tpu.trace_stop"() : () -> ()
    %39 = vector.shape_cast %25 : vector<8xf32> to vector<1x1x8xf32>
    %40 = vector.broadcast %39 : vector<1x1x8xf32> to vector<8x16x8xf32>
    %41 = arith.addf %38, %40 : vector<8x16x8xf32>
    %cst_18 = arith.constant 0.000000e+00 : f32
    %42 = vector.broadcast %cst_18 : f32 to vector<8x16x8xf32>
    %43 = arith.maximumf %41, %42 : vector<8x16x8xf32>
    %44 = vector.shape_cast %43 : vector<8x16x8xf32> to vector<1x8x16x8xf32>
    %c0_19 = arith.constant 0 : index
    %c0_20 = arith.constant 0 : index
    %c0_21 = arith.constant 0 : index
    %c0_22 = arith.constant 0 : index
    %45 = vector.load %arg7[%c0_19, %c0_20, %c0_21, %c0_22] : memref<1x8x16x8xf32, #tpu.memory_space<vmem>>, vector<1x8x16x8xf32>
    tpu.vector_store %arg7[%c0_19, %c0_20, %c0_21, %c0_22], %44 {strides = array<i32>} : memref<1x8x16x8xf32, #tpu.memory_space<vmem>>, vector<1x8x16x8xf32>,
    return
  }
  func.func @transform_0(%arg0: i32, %arg1: i32) -> (i32, i32, i32, i32) {
    %c0_i32 = arith.constant 0 : i32
    %c0_i32_0 = arith.constant 0 : i32
    %c0_i32_1 = arith.constant 0 : i32
    return %arg0, %arg1, %c0_i32, %c0_i32_0 : i32, i32, i32, i32
  }
  func.func @transform_1(%arg0: i32, %arg1: i32) -> (i32, i32, i32, i32) {
    %c8_i32 = arith.constant 8 : i32
    %0 = arith.muli %arg1, %c8_i32 : i32
    %c1_i32 = arith.constant 1 : i32
    %1 = arith.subi %0, %c1_i32 : i32
    %c0_i32 = arith.constant 0 : i32
    %2 = arith.maxsi %1, %c0_i32 : i32
    %c0_i32_0 = arith.constant 0 : i32
    %c0_i32_1 = arith.constant 0 : i32
    %c0_i32_2 = arith.constant 0 : i32
    return %arg0, %2, %c0_i32_0, %c0_i32_1 : i32, i32, i32, i32
  }
  func.func @transform_2(%arg0: i32, %arg1: i32) -> (i32, i32, i32, i32) {
    %c1_i32 = arith.constant 1 : i32
    %0 = arith.addi %arg1, %c1_i32 : i32
    %c8_i32 = arith.constant 8 : i32
    %1 = arith.muli %0, %c8_i32 : i32
    %c15_i32 = arith.constant 15 : i32
    %2 = arith.minsi %1, %c15_i32 : i32
    %c0_i32 = arith.constant 0 : i32
    %c0_i32_0 = arith.constant 0 : i32
    %c0_i32_1 = arith.constant 0 : i32
    return %arg0, %2, %c0_i32, %c0_i32_0 : i32, i32, i32, i32
  }
  func.func @transform_3(%arg0: i32, %arg1: i32) -> (i32, i32) {
    %c0_i32 = arith.constant 0 : i32
    %c0_i32_0 = arith.constant 0 : i32
    %c0_i32_1 = arith.constant 0 : i32
    return %c0_i32, %c0_i32_0 : i32, i32
  }
  func.func @transform_4(%arg0: i32, %arg1: i32) -> (i32, i32) {
    %c0_i32 = arith.constant 0 : i32
    %c0_i32_0 = arith.constant 0 : i32
    %c0_i32_1 = arith.constant 0 : i32
    return %c0_i32, %c0_i32_0 : i32, i32
  }
  func.func @transform_5(%arg0: i32, %arg1: i32) -> (i32, i32, i32, i32) {
    %c0_i32 = arith.constant 0 : i32
    %c0_i32_0 = arith.constant 0 : i32
    %c0_i32_1 = arith.constant 0 : i32
    return %arg0, %arg1, %c0_i32, %c0_i32_0 : i32, i32, i32, i32
  }
}

</mosaic_0001>

<llo_original>
// kernel: up_block_forward.3
$region0: #{up_block_forward.3}
  #allocation0 [shape = 'u32[]', space=smem, size = 0x4, offset = 0x4, fixed_abs, tag = 'smem constant byte address 0x4 - core index']
  #allocation1 [shape = 'u32[144,128]{1,0:T(1,128)}', space=vmem, size = 0x12000, scoped, tag = 'internal scratch']
  %s0 = inlined_call_operand.vmem [shape: f32[2,8,8,8], index: 0, kind: input, shape index: {}]
  %s1 = inlined_call_operand.vmem [shape: f32[8,16], index: 1, kind: input, shape index: {}]
  %s2 = inlined_call_operand.vmem [shape: f32[8,16], index: 2, kind: input, shape index: {}]
  %s3 = inlined_call_operand.vmem [shape: f32[1,16], index: 3, kind: input, shape index: {}]
  %s4 = inlined_call_operand.vmem [shape: f32[2,8,2,8,16], index: 4, kind: output, shape index: {}]
  %s5 = sld [smem:[#allocation0]]
  $region49: #{up_block_forward.3} parent=0
    _
  %s7 = ssub.s32 1, %s5
  %s8 = scalar_select 0, %s7, %s5
  loop: start=0, step=1, limit=6
  $region2: #{up_block_forward.3} parent=0 // loop_pre_header
    _
  $region3: #{up_block_forward.3} parent=0 // loop_header
    %s10 = sphi 0, %s14
    %p11 = scmp.ge.s32.totalorder %s10, 6
    %s17 = sphi 0, %s29
    %s18 = sphi 0, %s25
    %s19 = sphi 0, %s17
    %s20 = sphi 0, %s18
    %s21 = sphi 0, %s19
    %s22 = sphi 0, %s20
    %s34 = sphi 0, %s36
    %s37 = sphi 0, %s34
    %s38 = sphi 0, %s37
    %s54 = sphi 0, %s38
    %s58 = sphi 0, %s58
    %s60 = sphi 0, %s58
    %s61 = sphi 0, %s60
    %s75 = sphi 0, %s61
    %s79 = sphi 0, %s79
    %s81 = sphi 0, %s79
    %s82 = sphi 0, %s81
    %s96 = sphi 0, %s82
    %s100 = sphi 0, %s100
    %s102 = sphi 0, %s100
    %s103 = sphi 0, %s102
    %s117 = sphi 0, %s103
    %s125 = sphi 0, %s127
    %s128 = sphi 0, %s125
    %s129 = sphi 0, %s128
    %s145 = sphi 0, %s129
  $region4: #{up_block_forward.3} parent=0 // loop_header_branch
    %13 = sbr.rel (%p11) target = $region8
  $region5: #{up_block_forward.3} parent=0 // loop_body
    %s15 = ssub.s32 %s10, 1
    %s16 = ssub.s32 %s10, 2
    %s23 = sadd.s32 1, %s18
    %p24 = scmp.ge.s32.totalorder %s23, 2
    %s25 = scalar_select %p24, 0, %s23
    %s26 = sadd.s32 1, %s17
    %s27 = scalar_select %p24, %s26, %s17
    %p28 = scmp.ge.s32.totalorder %s27, 2
    %s29 = scalar_select %p28, 0, %s27
    %s30 = ssub.s32 %s17, %s29
    %s31 = ssub.s32 %s18, %s25
    %s32 = sor.u32 %s30, %s31
    %p33 = scmp.eq.s32.totalorder %s32, 0
    %s35 = sadd.s32 %s34, 1
    %s36 = scalar_select %p33, %s34, %s35
    %p39 = pneg %p33
    %p40 = scmp.eq.s32.totalorder %s10, 3
    %p41 = por %p39, %p40
    %p42 = scmp.ne.s32.totalorder %s34, %s37
    %p43 = scmp.eq.s32.totalorder %s10, 0
    %p44 = por %p42, %p43
    %p45 = scmp.ne.s32.totalorder %s34, %s37
    %p46 = scmp.eq.s32.totalorder %s15, 3
    %p47 = por %p45, %p46
    %p48 = scmp.ne.s32.totalorder %s37, %s38
    %p49 = scmp.eq.s32.totalorder %s15, 0
    %p50 = por %p48, %p49
    %p51 = scmp.ne.s32.totalorder %s37, %s38
    %p52 = scmp.eq.s32.totalorder %s16, 3
    %p53 = por %p51, %p52
    %p55 = scmp.ne.s32.totalorder %s38, %s54
    %p56 = scmp.eq.s32.totalorder %s16, 0
    %p57 = por %p55, %p56
    %s59 = sadd.s32 %s58, 1
    %p62 = scmp.eq.s32.totalorder %s10, 3
    %p63 = scmp.ne.s32.totalorder %s58, %s60
    %p64 = scmp.eq.s32.totalorder %s10, 0
    %p65 = por %p63, %p64
    %p66 = scmp.ne.s32.totalorder %s58, %s60
    %p67 = scmp.eq.s32.totalorder %s15, 3
    %p68 = por %p66, %p67
    %p69 = scmp.ne.s32.totalorder %s60, %s61
    %p70 = scmp.eq.s32.totalorder %s15, 0
    %p71 = por %p69, %p70
    %p72 = scmp.ne.s32.totalorder %s60, %s61
    %p73 = scmp.eq.s32.totalorder %s16, 3
    %p74 = por %p72, %p73
    %p76 = scmp.ne.s32.totalorder %s61, %s75
    %p77 = scmp.eq.s32.totalorder %s16, 0
    %p78 = por %p76, %p77
    %s80 = sadd.s32 %s79, 1
    %p83 = scmp.eq.s32.totalorder %s10, 3
    %p84 = scmp.ne.s32.totalorder %s79, %s81
    %p85 = scmp.eq.s32.totalorder %s10, 0
    %p86 = por %p84, %p85
    %p87 = scmp.ne.s32.totalorder %s79, %s81
    %p88 = scmp.eq.s32.totalorder %s15, 3
    %p89 = por %p87, %p88
    %p90 = scmp.ne.s32.totalorder %s81, %s82
    %p91 = scmp.eq.s32.totalorder %s15, 0
    %p92 = por %p90, %p91
    %p93 = scmp.ne.s32.totalorder %s81, %s82
    %p94 = scmp.eq.s32.totalorder %s16, 3
    %p95 = por %p93, %p94
    %p97 = scmp.ne.s32.totalorder %s82, %s96
    %p98 = scmp.eq.s32.totalorder %s16, 0
    %p99 = por %p97, %p98
    %s101 = sadd.s32 %s100, 1
    %p104 = scmp.eq.s32.totalorder %s10, 3
    %p105 = scmp.ne.s32.totalorder %s100, %s102
    %p106 = scmp.eq.s32.totalorder %s10, 0
    %p107 = por %p105, %p106
    %p108 = scmp.ne.s32.totalorder %s100, %s102
    %p109 = scmp.eq.s32.totalorder %s15, 3
    %p110 = por %p108, %p109
    %p111 = scmp.ne.s32.totalorder %s102, %s103
    %p112 = scmp.eq.s32.totalorder %s15, 0
    %p113 = por %p111, %p112
    %p114 = scmp.ne.s32.totalorder %s102, %s103
    %p115 = scmp.eq.s32.totalorder %s16, 3
    %p116 = por %p114, %p115
    %p118 = scmp.ne.s32.totalorder %s103, %s117
    %p119 = scmp.eq.s32.totalorder %s16, 0
    %p120 = por %p118, %p119
    %s121 = ssub.s32 %s17, %s29
    %s122 = ssub.s32 %s18, %s25
    %s123 = sor.u32 %s121, %s122
    %p124 = scmp.eq.s32.totalorder %s123, 0
    %s126 = sadd.s32 %s125, 1
    %s127 = scalar_select %p124, %s125, %s126
    %p130 = pneg %p124
    %p131 = scmp.eq.s32.totalorder %s10, 3
    %p132 = por %p130, %p131
    %p133 = scmp.ne.s32.totalorder %s125, %s128
    %p134 = scmp.eq.s32.totalorder %s10, 0
    %p135 = por %p133, %p134
    %p136 = scmp.ne.s32.totalorder %s125, %s128
    %p137 = scmp.eq.s32.totalorder %s15, 3
    %p138 = por %p136, %p137
    %p139 = scmp.ne.s32.totalorder %s128, %s129
    %p140 = scmp.eq.s32.totalorder %s15, 0
    %p141 = por %p139, %p140
    %p142 = scmp.ne.s32.totalorder %s128, %s129
    %p143 = scmp.eq.s32.totalorder %s16, 3
    %p144 = por %p142, %p143
    %p146 = scmp.ne.s32.totalorder %s129, %s145
    %p147 = scmp.eq.s32.totalorder %s16, 0
    %p148 = por %p146, %p147
    %p149 = scmp.le.s32.totalorder 1, %s10
    %p150 = scmp.lt.s32.totalorder %s10, 5
    %p151 = pnand %p149, %p150
    %p152 = pneg %p151
    // Predicated region
    $region9: #{up_block_forward.3} parent=5 // pred_check
      _
    $region10: #{up_block_forward.3} parent=5 // pred_check_branch
      %154 = sbr.rel (%p151) target = $region12
    $region11: #{up_block_forward.3} parent=5 // pred_region
      %s155 = ssub.s32 %s10, 1
      // Predicated region
      $region13: #{up_block_forward.3} parent=11 // pred_check
        %p156 = pneg %p71
      $region14: #{up_block_forward.3} parent=11 // pred_check_branch
        %158 = sbr.rel (%p156) target = $region16
      $region15: #{up_block_forward.3} parent=11 // pred_region
        _
      $region16: #{up_block_forward.3} parent=11 // pred_fallthru
        _
      // Predicated region
      $region17: #{up_block_forward.3} parent=11 // pred_check
        %p159 = pneg %p92
      $region18: #{up_block_forward.3} parent=11 // pred_check_branch
        %161 = sbr.rel (%p159) target = $region20
      $region19: #{up_block_forward.3} parent=11 // pred_region
        _
      $region20: #{up_block_forward.3} parent=11 // pred_fallthru
        _
      // Predicated region
      $region21: #{up_block_forward.3} parent=11 // pred_check
        %p162 = pneg %p113
      $region22: #{up_block_forward.3} parent=11 // pred_check_branch
        %164 = sbr.rel (%p162) target = $region24
      $region23: #{up_block_forward.3} parent=11 // pred_region
        _
      $region24: #{up_block_forward.3} parent=11 // pred_fallthru
        _
    $region12: #{up_block_forward.3} parent=5 // pred_fallthru
      _
    %p165 = scmp.lt.s32.totalorder %s10, 4
    // Predicated region
    $region25: #{up_block_forward.3} parent=5 // pred_check
      %p166 = pneg %p165
    $region26: #{up_block_forward.3} parent=5 // pred_check_branch
      %168 = sbr.rel (%p166) target = $region28
    $region27: #{up_block_forward.3} parent=5 // pred_region
      // Predicated region
      $region29: #{up_block_forward.3} parent=27 // pred_check
        %p169 = pneg %p44
      $region30: #{up_block_forward.3} parent=27 // pred_check_branch
        %171 = sbr.rel (%p169) target = $region32
      $region31: #{up_block_forward.3} parent=27 // pred_region
        %s172 = smul.u32 4, %s18
        %p173 = scmp.lt.s32.totalorder %s17, 1
        %s174 = scalar_select %p173, %s17, 1
        %p175 = scmp.lt.s32.totalorder %s172, 7
        %s176 = scalar_select %p175, %s172, 7
        %s177 = smul.addr %s174, 8
        %s178 = sadd.s32 %s176, %s177
        %s179 = smul.addr %s178, 8
        %s180 = scalar_lea.vmem %s0, %s179
        %s181 = smul.u32 4, %s18
      $region32: #{up_block_forward.3} parent=27 // pred_fallthru
        _
    $region28: #{up_block_forward.3} parent=5 // pred_fallthru
      _
    %p182 = scmp.le.s32.totalorder 1, %s10
    %p183 = scmp.lt.s32.totalorder %s10, 5
    %p184 = pnand %p182, %p183
    %p185 = pneg %p184
    // Predicated region
    $region33: #{up_block_forward.3} parent=5 // pred_check
      _
    $region34: #{up_block_forward.3} parent=5 // pred_check_branch
      %187 = sbr.rel (%p184) target = $region36
    $region35: #{up_block_forward.3} parent=5 // pred_region
      %s188 = ssub.s32 %s10, 1
      %s189 = smul.u32 4, %s20
      %p190 = scmp.lt.s32.totalorder %s19, 1
      %s191 = scalar_select %p190, %s19, 1
      %p192 = scmp.lt.s32.totalorder %s189, 7
      %s193 = scalar_select %p192, %s189, 7
      %s194 = smul.addr %s191, 8
      %s195 = sadd.s32 %s193, %s194
      %s196 = smul.addr %s195, 8
      %s197 = scalar_lea.vmem %s0, %s196
      %p198 = pneg %p50
      %p199 = pneg %p47
      %p200 = pneg %p71
      %p201 = pneg %p68
      %p202 = pneg %p92
      %p203 = pneg %p89
      %p204 = pneg %p113
      %p205 = pneg %p110
      %p206 = pneg %p141
      %p207 = pneg %p138
      %s208 = smul.u32 4, %s20
      %p209 = scmp.lt.s32.totalorder %s19, 1
      %s210 = scalar_select %p209, %s19, 1
      %p211 = scmp.lt.s32.totalorder %s208, 7
      %s212 = scalar_select %p211, %s208, 7
      %s213 = smul.addr %s212, 2
      %s214 = smul.addr %s210, 16
      %s215 = sadd.s32 %s213, %s214
      %s216 = smul.addr %s215, 8
      %s217 = scalar_lea.vmem %s4, %s216
      %s218 = smul.u32 4, %s20
      %p219 = scmp.lt.s32.totalorder %s19, 1
      %s220 = scalar_select %p219, %s19, 1
      %p221 = scmp.lt.s32.totalorder %s218, 7
      %s222 = scalar_select %p221, %s218, 7
      %s223 = smul.addr %s220, 8
      %s224 = sadd.s32 %s222, %s223
      %s225 = smul.addr %s224, 8
      %s226 = scalar_lea.vmem %s0, %s225
      %s227 = smul.u32 4, %s20
      %s228 = smul.u32 4, %s20
      %p229 = scmp.lt.s32.totalorder %s19, 1
      %s230 = scalar_select %p229, %s19, 1
      %p231 = scmp.lt.s32.totalorder %s228, 7
      %s232 = scalar_select %p231, %s228, 7
      %s233 = smul.addr %s232, 2
      %s234 = smul.addr %s230, 16
      %s235 = sadd.s32 %s233, %s234
      %s236 = smul.addr %s235, 8
      %s237 = scalar_lea.vmem %s4, %s236
      %s238 = smul.u32 4, %s20
      %v239 = vld [vmem:[%s226] sm:$0xff]
      %v240 = vld [vmem:[%s226 + $0x8] sm:$0xff]
      %v241 = vld [vmem:[%s226 + $0x10] sm:$0xff]
      %v242 = vld [vmem:[%s226 + $0x18] sm:$0xff]
      %v243 = vld [vmem:[%s1] sm:$0xff]
      %vm244 = vcmask 64512
      %v246 = vsel %vm244, %v239, 0
      %v249 = vsel %vm244, %v240, 0
      %v252 = vsel %vm244, %v241, 0
      %v255 = vsel %vm244, %v242, 0
      %257 = vmatprep.subr.mxu0 0.0
      %258 = vmatpush1.msra.mxu0 0.0
      %259 = vmatprep.subr.mxu0 0.0
      %260 = vmatpush1.msra.mxu0 0.0
      %261 = vmatprep.subr.mxu0 0.0
      %262 = vmatpush1.msra.mxu0 0.0
      %263 = vmatprep.subr.mxu0 0.0
      %264 = vmatpush1.msra.mxu0 0.0
      %265 = vmatprep.subr.mxu0 0.0
      %266 = vmatpush1.msra.mxu0 0.0
      %267 = vmatprep.subr.mxu0 0.0
      %268 = vmatpush1.msra.mxu0 0.0
      %269 = vmatprep.subr.mxu0 0.0
      %270 = vmatpush1.msra.mxu0 0.0
      %271 = vmatprep.subr.mxu0 0.0
      %272 = vmatpush1.msra.mxu0 0.0
      %273 = vmatprep.subr.mxu0 0.0
      %274 = vmatpush1.msra.mxu0 0.0
      %275 = vmatprep.subr.mxu0 0.0
      %276 = vmatpush1.msra.mxu0 0.0
      %277 = vmatprep.subr.mxu0 0.0
      %278 = vmatpush1.msra.mxu0 0.0
      %279 = vmatprep.subr.mxu0 0.0
      %280 = vmatpush1.msra.mxu0 0.0
      %281 = vmatprep.subr.mxu0 0.0
      %282 = vmatpush1.msra.mxu0 0.0
      %283 = vmatprep.subr.mxu0 0.0
      %284 = vmatpush1.msra.mxu0 0.0
      %285 = vmatprep.subr.mxu0 0.0
      %286 = vmatpush1.msra.mxu0 0.0
      %287 = vmatprep.subr.mxu0 0.0
      %288 = vmatpush1.msra.mxu0 %v243
      %289 = vmatprep.subr.mxu0 0.0
      %290 = vmatpush2.msra.mxu0 0.0
      %291 = vmatprep.subr.mxu0 0.0
      %292 = vmatpush2.msra.mxu0 0.0
      %293 = vmatprep.subr.mxu0 0.0
      %294 = vmatpush2.msra.mxu0 0.0
      %295 = vmatprep.subr.mxu0 0.0
      %296 = vmatpush2.msra.mxu0 0.0
      %297 = vmatprep.subr.mxu0 0.0
      %298 = vmatpush2.msra.mxu0 0.0
      %299 = vmatprep.subr.mxu0 0.0
      %300 = vmatpush2.msra.mxu0 0.0
      %301 = vmatprep.subr.mxu0 0.0
      %302 = vmatpush2.msra.mxu0 0.0
      %303 = vmatprep.subr.mxu0 0.0
      %304 = vmatpush2.msra.mxu0 0.0
      %305 = vmatprep.subr.mxu0 0.0
      %306 = vmatpush2.msra.mxu0 0.0
      %307 = vmatprep.subr.mxu0 0.0
      %308 = vmatpush2.msra.mxu0 0.0
      %309 = vmatprep.subr.mxu0 0.0
      %310 = vmatpush2.msra.mxu0 0.0
      %311 = vmatprep.subr.mxu0 0.0
      %312 = vmatpush2.msra.mxu0 0.0
      %313 = vmatprep.subr.mxu0 0.0
      %314 = vmatpush2.msra.mxu0 0.0
      %315 = vmatprep.subr.mxu0 0.0
      %316 = vmatpush2.msra.mxu0 0.0
      %317 = vmatprep.subr.mxu0 0.0
      %318 = vmatpush2.msra.mxu0 0.0
      %319 = vmatprep.subr.mxu0 0.0
      %320 = vmatpush2.msra.mxu0 0.0
      %321 = vmatprep.mubr.f32.mxu0 0.0
      %322 = vmatmul.mubr.f32.gmra.mxu0 %v246
      %v323 = vpop.f32.mrf.mxu0
      %v324 = vadd.f32 0.0, %v323
      %v325 = vpop.f32.mrf.mxu0
      %326 = vmatprep.mubr.f32.mxu0 0.0
      %327 = vmatmul.mubr.f32.gmra.mxu0 %v249
      %v328 = vpop.f32.mrf.mxu0
      %v329 = vadd.f32 0.0, %v328
      %v330 = vpop.f32.mrf.mxu0
      %331 = vmatprep.mubr.f32.mxu0 0.0
      %332 = vmatmul.mubr.f32.gmra.mxu0 %v252
      %v333 = vpop.f32.mrf.mxu0
      %v334 = vadd.f32 0.0, %v333
      %v335 = vpop.f32.mrf.mxu0
      %336 = vmatprep.mubr.f32.mxu0 0.0
      %337 = vmatmul.mubr.f32.gmra.mxu0 %v255
      %v338 = vpop.f32.mrf.mxu0
      %v339 = vadd.f32 0.0, %v338
      %v340 = vpop.f32.mrf.mxu0
      %341 = vdwg.mxu0
      %v342 = vld [vmem:[%s2] sm:$0xff]
      %343 = vmatprep.subr.mxu0 0.0
      %344 = vmatpush1.msra.mxu0 0.0
      %345 = vmatprep.subr.mxu0 0.0
      %346 = vmatpush1.msra.mxu0 0.0
      %347 = vmatprep.subr.mxu0 0.0
      %348 = vmatpush1.msra.mxu0 0.0
      %349 = vmatprep.subr.mxu0 0.0
      %350 = vmatpush1.msra.mxu0 0.0
      %351 = vmatprep.subr.mxu0 0.0
      %352 = vmatpush1.msra.mxu0 0.0
      %353 = vmatprep.subr.mxu0 0.0
      %354 = vmatpush1.msra.mxu0 0.0
      %355 = vmatprep.subr.mxu0 0.0
      %356 = vmatpush1.msra.mxu0 0.0
      %357 = vmatprep.subr.mxu0 0.0
      %358 = vmatpush1.msra.mxu0 0.0
      %359 = vmatprep.subr.mxu0 0.0
      %360 = vmatpush1.msra.mxu0 0.0
      %361 = vmatprep.subr.mxu0 0.0
      %362 = vmatpush1.msra.mxu0 0.0
      %363 = vmatprep.subr.mxu0 0.0
      %364 = vmatpush1.msra.mxu0 0.0
      %365 = vmatprep.subr.mxu0 0.0
      %366 = vmatpush1.msra.mxu0 0.0
      %367 = vmatprep.subr.mxu0 0.0
      %368 = vmatpush1.msra.mxu0 0.0
      %369 = vmatprep.subr.mxu0 0.0
      %370 = vmatpush1.msra.mxu0 0.0
      %371 = vmatprep.subr.mxu0 0.0
      %372 = vmatpush1.msra.mxu0 0.0
      %373 = vmatprep.subr.mxu0 0.0
      %374 = vmatpush1.msra.mxu0 %v342
      %375 = vmatprep.subr.mxu0 0.0
      %376 = vmatpush2.msra.mxu0 0.0
      %377 = vmatprep.subr.mxu0 0.0
      %378 = vmatpush2.msra.mxu0 0.0
      %379 = vmatprep.subr.mxu0 0.0
      %380 = vmatpush2.msra.mxu0 0.0
      %381 = vmatprep.subr.mxu0 0.0
      %382 = vmatpush2.msra.mxu0 0.0
      %383 = vmatprep.subr.mxu0 0.0
      %384 = vmatpush2.msra.mxu0 0.0
      %385 = vmatprep.subr.mxu0 0.0
      %386 = vmatpush2.msra.mxu0 0.0
      %387 = vmatprep.subr.mxu0 0.0
      %388 = vmatpush2.msra.mxu0 0.0
      %389 = vmatprep.subr.mxu0 0.0
      %390 = vmatpush2.msra.mxu0 0.0
      %391 = vmatprep.subr.mxu0 0.0
      %392 = vmatpush2.msra.mxu0 0.0
      %393 = vmatprep.subr.mxu0 0.0
      %394 = vmatpush2.msra.mxu0 0.0
      %395 = vmatprep.subr.mxu0 0.0
      %396 = vmatpush2.msra.mxu0 0.0
      %397 = vmatprep.subr.mxu0 0.0
      %398 = vmatpush2.msra.mxu0 0.0
      %399 = vmatprep.subr.mxu0 0.0
      %400 = vmatpush2.msra.mxu0 0.0
      %401 = vmatprep.subr.mxu0 0.0
      %402 = vmatpush2.msra.mxu0 0.0
      %403 = vmatprep.subr.mxu0 0.0
      %404 = vmatpush2.msra.mxu0 0.0
      %405 = vmatprep.subr.mxu0 0.0
      %406 = vmatpush2.msra.mxu0 0.0
      %407 = vmatprep.mubr.f32.mxu0 0.0
      %408 = vmatmul.mubr.f32.gmra.mxu0 %v246
      %v409 = vpop.f32.mrf.mxu0
      %v410 = vadd.f32 0.0, %v409
      %v411 = vpop.f32.mrf.mxu0
      %412 = vmatprep.mubr.f32.mxu0 0.0
      %413 = vmatmul.mubr.f32.gmra.mxu0 %v249
      %v414 = vpop.f32.mrf.mxu0
      %v415 = vadd.f32 0.0, %v414
      %v416 = vpop.f32.mrf.mxu0
      %417 = vmatprep.mubr.f32.mxu0 0.0
      %418 = vmatmul.mubr.f32.gmra.mxu0 %v252
      %v419 = vpop.f32.mrf.mxu0
      %v420 = vadd.f32 0.0, %v419
      %v421 = vpop.f32.mrf.mxu0
      %422 = vmatprep.mubr.f32.mxu0 0.0
      %423 = vmatmul.mubr.f32.gmra.mxu0 %v255
      %v424 = vpop.f32.mrf.mxu0
      %v425 = vadd.f32 0.0, %v424
      %v426 = vpop.f32.mrf.mxu0
      %427 = vdwg.mxu0
      %v428 = vld [vmem:[%s3] sm:$0x1]
      %v430 = vlaneseq
      %v431 = vshrl.u32 %v430, 7
      %v432 = vsub.s32 0, %v431
      %v433 = vrot.slane %v428, %v432
      %v435 = vadd.f32 %v324, %v433
      %v436 = vadd.f32 %v410, %v433
      %v437 = vadd.f32 %v329, %v433
      %v438 = vadd.f32 %v415, %v433
      %v439 = vadd.f32 %v334, %v433
      %v440 = vadd.f32 %v420, %v433
      %v441 = vadd.f32 %v339, %v433
      %v442 = vadd.f32 %v425, %v433
      %vm443 = vcmask 130048
      %444 = vst.msk [vmem:[%s237] sm:$0xff] %vm443, %v435
      %445 = vst.msk [vmem:[%s237 + $0x8] sm:$0xff] %vm443, %v436
      %446 = vst.msk [vmem:[%s237 + $0x10] sm:$0xff] %vm443, %v437
      %447 = vst.msk [vmem:[%s237 + $0x18] sm:$0xff] %vm443, %v438
      %448 = vst.msk [vmem:[%s237 + $0x20] sm:$0xff] %vm443, %v439
      %449 = vst.msk [vmem:[%s237 + $0x28] sm:$0xff] %vm443, %v440
      %450 = vst.msk [vmem:[%s237 + $0x30] sm:$0xff] %vm443, %v441
      %451 = vst.msk [vmem:[%s237 + $0x38] sm:$0xff] %vm443, %v442
      %s452 = smul.u32 4, %s20
      %p453 = scmp.lt.s32.totalorder %s19, 1
      %s454 = scalar_select %p453, %s19, 1
      %p455 = scmp.lt.s32.totalorder %s452, 7
      %s456 = scalar_select %p455, %s452, 7
      %s457 = smul.addr %s456, 2
      %s458 = smul.addr %s454, 16
      %s459 = sadd.s32 %s457, %s458
      %s460 = smul.addr %s459, 8
      %s461 = scalar_lea.vmem %s4, %s460
      // Predicated region
      $region37: #{up_block_forward.3} parent=35 // pred_check
        %p462 = pneg %p138
      $region38: #{up_block_forward.3} parent=35 // pred_check_branch
        %464 = sbr.rel (%p462) target = $region40
      $region39: #{up_block_forward.3} parent=35 // pred_region
        %s465 = smul.u32 4, %s20
      $region40: #{up_block_forward.3} parent=35 // pred_fallthru
        _
    $region36: #{up_block_forward.3} parent=5 // pred_fallthru
      _
    %p466 = scmp.le.s32.totalorder 2, %s10
    // Predicated region
    $region41: #{up_block_forward.3} parent=5 // pred_check
      %p467 = pneg %p466
    $region42: #{up_block_forward.3} parent=5 // pred_check_branch
      %469 = sbr.rel (%p467) target = $region44
    $region43: #{up_block_forward.3} parent=5 // pred_region
      %s470 = ssub.s32 %s10, 2
      // Predicated region
      $region45: #{up_block_forward.3} parent=43 // pred_check
        %p471 = pneg %p144
      $region46: #{up_block_forward.3} parent=43 // pred_check_branch
        %473 = sbr.rel (%p471) target = $region48
      $region47: #{up_block_forward.3} parent=43 // pred_region
        %s474 = smul.u32 4, %s22
        %p475 = scmp.lt.s32.totalorder %s21, 1
        %s476 = scalar_select %p475, %s21, 1
        %p477 = scmp.lt.s32.totalorder %s474, 7
        %s478 = scalar_select %p477, %s474, 7
        %s479 = smul.addr %s478, 2
        %s480 = smul.addr %s476, 16
        %s481 = sadd.s32 %s479, %s480
        %s482 = smul.addr %s481, 8
        %s483 = scalar_lea.vmem %s4, %s482
      $region48: #{up_block_forward.3} parent=43 // pred_fallthru
        _
    $region44: #{up_block_forward.3} parent=5 // pred_fallthru
      _
  $region6: #{up_block_forward.3} parent=0 // loop_footer
    %s14 = sadd.s32 1, %s10
  $region7: #{up_block_forward.3} parent=0 // loop_footer_branch
    %9 = sbr.rel target = $region3
  $region8: #{up_block_forward.3} parent=0 // loop_exit
    _

// kernel: up_block_forward.5
$region0: #{up_block_forward.5}
  #allocation0 [shape = 'u32[]', space=smem, size = 0x4, offset = 0x4, fixed_abs, tag = 'smem constant byte address 0x4 - core index']
  #allocation1 [shape = 'u32[144,128]{1,0:T(1,128)}', space=vmem, size = 0x12000, scoped, tag = 'internal scratch']
  %s0 = inlined_call_operand.vmem [shape: f32[2,16,16,8], index: 0, kind: input, shape index: {}, may-alias: {0,1,2}]
  %s1 = inlined_call_operand.vmem [shape: f32[2,16,16,8], index: 1, kind: input, shape index: {}, may-alias: {0,1,2}]
  %s2 = inlined_call_operand.vmem [shape: f32[2,16,16,8], index: 2, kind: input, shape index: {}, may-alias: {0,1,2}]
  %s3 = inlined_call_operand.vmem [shape: f32[72,8], index: 3, kind: input, shape index: {}]
  %s4 = inlined_call_operand.vmem [shape: f32[1,8], index: 4, kind: input, shape index: {}]
  %s5 = inlined_call_operand.vmem [shape: f32[2,16,16,8], index: 5, kind: output, shape index: {}]
  %s6 = sld [smem:[#allocation0]]
  $region53: #{up_block_forward.5} parent=0
    _
  %s8 = ssub.s32 1, %s6
  %s9 = scalar_select 0, %s8, %s6
  loop: start=0, step=1, limit=6
  $region2: #{up_block_forward.5} parent=0 // loop_pre_header
    _
  $region3: #{up_block_forward.5} parent=0 // loop_header
    %s11 = sphi 0, %s15
    %p12 = scmp.ge.s32.totalorder %s11, 6
    %s18 = sphi 0, %s30
    %s19 = sphi 0, %s26
    %s20 = sphi 0, %s18
    %s21 = sphi 0, %s19
    %s22 = sphi 0, %s20
    %s23 = sphi 0, %s21
    %s35 = sphi 0, %s37
    %s38 = sphi 0, %s35
    %s39 = sphi 0, %s38
    %s55 = sphi 0, %s39
    %s71 = sphi 0, %s73
    %s74 = sphi 0, %s71
    %s75 = sphi 0, %s74
    %s91 = sphi 0, %s75
    %s107 = sphi 0, %s109
    %s110 = sphi 0, %s107
    %s111 = sphi 0, %s110
    %s127 = sphi 0, %s111
    %s131 = sphi 0, %s131
    %s133 = sphi 0, %s131
    %s134 = sphi 0, %s133
    %s148 = sphi 0, %s134
    %s152 = sphi 0, %s152
    %s154 = sphi 0, %s152
    %s155 = sphi 0, %s154
    %s169 = sphi 0, %s155
    %s177 = sphi 0, %s179
    %s180 = sphi 0, %s177
    %s181 = sphi 0, %s180
    %s197 = sphi 0, %s181
  $region4: #{up_block_forward.5} parent=0 // loop_header_branch
    %14 = sbr.rel (%p12) target = $region8
  $region5: #{up_block_forward.5} parent=0 // loop_body
    %s16 = ssub.s32 %s11, 1
    %s17 = ssub.s32 %s11, 2
    %s24 = sadd.s32 1, %s19
    %p25 = scmp.ge.s32.totalorder %s24, 2
    %s26 = scalar_select %p25, 0, %s24
    %s27 = sadd.s32 1, %s18
    %s28 = scalar_select %p25, %s27, %s18
    %p29 = scmp.ge.s32.totalorder %s28, 2
    %s30 = scalar_select %p29, 0, %s28
    %s31 = ssub.s32 %s18, %s30
    %s32 = ssub.s32 %s19, %s26
    %s33 = sor.u32 %s31, %s32
    %p34 = scmp.eq.s32.totalorder %s33, 0
    %s36 = sadd.s32 %s35, 1
    %s37 = scalar_select %p34, %s35, %s36
    %p40 = pneg %p34
    %p41 = scmp.eq.s32.totalorder %s11, 3
    %p42 = por %p40, %p41
    %p43 = scmp.ne.s32.totalorder %s35, %s38
    %p44 = scmp.eq.s32.totalorder %s11, 0
    %p45 = por %p43, %p44
    %p46 = scmp.ne.s32.totalorder %s35, %s38
    %p47 = scmp.eq.s32.totalorder %s16, 3
    %p48 = por %p46, %p47
    %p49 = scmp.ne.s32.totalorder %s38, %s39
    %p50 = scmp.eq.s32.totalorder %s16, 0
    %p51 = por %p49, %p50
    %p52 = scmp.ne.s32.totalorder %s38, %s39
    %p53 = scmp.eq.s32.totalorder %s17, 3
    %p54 = por %p52, %p53
    %p56 = scmp.ne.s32.totalorder %s39, %s55
    %p57 = scmp.eq.s32.totalorder %s17, 0
    %p58 = por %p56, %p57
    %s59 = smul.u32 %s19, 8
    %s60 = ssub.s32 %s59, 1
    %p61 = scmp.gt.s32.totalorder %s60, 0
    %s62 = scalar_select %p61, %s60, 0
    %s63 = smul.u32 %s26, 8
    %s64 = ssub.s32 %s63, 1
    %p65 = scmp.gt.s32.totalorder %s64, 0
    %s66 = scalar_select %p65, %s64, 0
    %s67 = ssub.s32 %s18, %s30
    %s68 = ssub.s32 %s62, %s66
    %s69 = sor.u32 %s67, %s68
    %p70 = scmp.eq.s32.totalorder %s69, 0
    %s72 = sadd.s32 %s71, 1
    %s73 = scalar_select %p70, %s71, %s72
    %p76 = pneg %p70
    %p77 = scmp.eq.s32.totalorder %s11, 3
    %p78 = por %p76, %p77
    %p79 = scmp.ne.s32.totalorder %s71, %s74
    %p80 = scmp.eq.s32.totalorder %s11, 0
    %p81 = por %p79, %p80
    %p82 = scmp.ne.s32.totalorder %s71, %s74
    %p83 = scmp.eq.s32.totalorder %s16, 3
    %p84 = por %p82, %p83
    %p85 = scmp.ne.s32.totalorder %s74, %s75
    %p86 = scmp.eq.s32.totalorder %s16, 0
    %p87 = por %p85, %p86
    %p88 = scmp.ne.s32.totalorder %s74, %s75
    %p89 = scmp.eq.s32.totalorder %s17, 3
    %p90 = por %p88, %p89
    %p92 = scmp.ne.s32.totalorder %s75, %s91
    %p93 = scmp.eq.s32.totalorder %s17, 0
    %p94 = por %p92, %p93
    %s95 = sadd.s32 %s19, 1
    %s96 = smul.u32 %s95, 8
    %p97 = scmp.lt.s32.totalorder %s96, 15
    %s98 = scalar_select %p97, %s96, 15
    %s99 = sadd.s32 %s26, 1
    %s100 = smul.u32 %s99, 8
    %p101 = scmp.lt.s32.totalorder %s100, 15
    %s102 = scalar_select %p101, %s100, 15
    %s103 = ssub.s32 %s18, %s30
    %s104 = ssub.s32 %s98, %s102
    %s105 = sor.u32 %s103, %s104
    %p106 = scmp.eq.s32.totalorder %s105, 0
    %s108 = sadd.s32 %s107, 1
    %s109 = scalar_select %p106, %s107, %s108
    %p112 = pneg %p106
    %p113 = scmp.eq.s32.totalorder %s11, 3
    %p114 = por %p112, %p113
    %p115 = scmp.ne.s32.totalorder %s107, %s110
    %p116 = scmp.eq.s32.totalorder %s11, 0
    %p117 = por %p115, %p116
    %p118 = scmp.ne.s32.totalorder %s107, %s110
    %p119 = scmp.eq.s32.totalorder %s16, 3
    %p120 = por %p118, %p119
    %p121 = scmp.ne.s32.totalorder %s110, %s111
    %p122 = scmp.eq.s32.totalorder %s16, 0
    %p123 = por %p121, %p122
    %p124 = scmp.ne.s32.totalorder %s110, %s111
    %p125 = scmp.eq.s32.totalorder %s17, 3
    %p126 = por %p124, %p125
    %p128 = scmp.ne.s32.totalorder %s111, %s127
    %p129 = scmp.eq.s32.totalorder %s17, 0
    %p130 = por %p128, %p129
    %s132 = sadd.s32 %s131, 1
    %p135 = scmp.eq.s32.totalorder %s11, 3
    %p136 = scmp.ne.s32.totalorder %s131, %s133
    %p137 = scmp.eq.s32.totalorder %s11, 0
    %p138 = por %p136, %p137
    %p139 = scmp.ne.s32.totalorder %s131, %s133
    %p140 = scmp.eq.s32.totalorder %s16, 3
    %p141 = por %p139, %p140
    %p142 = scmp.ne.s32.totalorder %s133, %s134
    %p143 = scmp.eq.s32.totalorder %s16, 0
    %p144 = por %p142, %p143
    %p145 = scmp.ne.s32.totalorder %s133, %s134
    %p146 = scmp.eq.s32.totalorder %s17, 3
    %p147 = por %p145, %p146
    %p149 = scmp.ne.s32.totalorder %s134, %s148
    %p150 = scmp.eq.s32.totalorder %s17, 0
    %p151 = por %p149, %p150
    %s153 = sadd.s32 %s152, 1
    %p156 = scmp.eq.s32.totalorder %s11, 3
    %p157 = scmp.ne.s32.totalorder %s152, %s154
    %p158 = scmp.eq.s32.totalorder %s11, 0
    %p159 = por %p157, %p158
    %p160 = scmp.ne.s32.totalorder %s152, %s154
    %p161 = scmp.eq.s32.totalorder %s16, 3
    %p162 = por %p160, %p161
    %p163 = scmp.ne.s32.totalorder %s154, %s155
    %p164 = scmp.eq.s32.totalorder %s16, 0
    %p165 = por %p163, %p164
    %p166 = scmp.ne.s32.totalorder %s154, %s155
    %p167 = scmp.eq.s32.totalorder %s17, 3
    %p168 = por %p166, %p167
    %p170 = scmp.ne.s32.totalorder %s155, %s169
    %p171 = scmp.eq.s32.totalorder %s17, 0
    %p172 = por %p170, %p171
    %s173 = ssub.s32 %s18, %s30
    %s174 = ssub.s32 %s19, %s26
    %s175 = sor.u32 %s173, %s174
    %p176 = scmp.eq.s32.totalorder %s175, 0
    %s178 = sadd.s32 %s177, 1
    %s179 = scalar_select %p176, %s177, %s178
    %p182 = pneg %p176
    %p183 = scmp.eq.s32.totalorder %s11, 3
    %p184 = por %p182, %p183
    %p185 = scmp.ne.s32.totalorder %s177, %s180
    %p186 = scmp.eq.s32.totalorder %s11, 0
    %p187 = por %p185, %p186
    %p188 = scmp.ne.s32.totalorder %s177, %s180
    %p189 = scmp.eq.s32.totalorder %s16, 3
    %p190 = por %p188, %p189
    %p191 = scmp.ne.s32.totalorder %s180, %s181
    %p192 = scmp.eq.s32.totalorder %s16, 0
    %p193 = por %p191, %p192
    %p194 = scmp.ne.s32.totalorder %s180, %s181
    %p195 = scmp.eq.s32.totalorder %s17, 3
    %p196 = por %p194, %p195
    %p198 = scmp.ne.s32.totalorder %s181, %s197
    %p199 = scmp.eq.s32.totalorder %s17, 0
    %p200 = por %p198, %p199
    %p201 = scmp.le.s32.totalorder 1, %s11
    %p202 = scmp.lt.s32.totalorder %s11, 5
    %p203 = pnand %p201, %p202
    %p204 = pneg %p203
    // Predicated region
    $region9: #{up_block_forward.5} parent=5 // pred_check
      _
    $region10: #{up_block_forward.5} parent=5 // pred_check_branch
      %206 = sbr.rel (%p203) target = $region12
    $region11: #{up_block_forward.5} parent=5 // pred_region
      %s207 = ssub.s32 %s11, 1
      // Predicated region
      $region13: #{up_block_forward.5} parent=11 // pred_check
        %p208 = pneg %p144
      $region14: #{up_block_forward.5} parent=11 // pred_check_branch
        %210 = sbr.rel (%p208) target = $region16
      $region15: #{up_block_forward.5} parent=11 // pred_region
        _
      $region16: #{up_block_forward.5} parent=11 // pred_fallthru
        _
      // Predicated region
      $region17: #{up_block_forward.5} parent=11 // pred_check
        %p211 = pneg %p165
      $region18: #{up_block_forward.5} parent=11 // pred_check_branch
        %213 = sbr.rel (%p211) target = $region20
      $region19: #{up_block_forward.5} parent=11 // pred_region
        _
      $region20: #{up_block_forward.5} parent=11 // pred_fallthru
        _
    $region12: #{up_block_forward.5} parent=5 // pred_fallthru
      _
    %p214 = scmp.lt.s32.totalorder %s11, 4
    // Predicated region
    $region21: #{up_block_forward.5} parent=5 // pred_check
      %p215 = pneg %p214
    $region22: #{up_block_forward.5} parent=5 // pred_check_branch
      %217 = sbr.rel (%p215) target = $region24
    $region23: #{up_block_forward.5} parent=5 // pred_region
      // Predicated region
      $region25: #{up_block_forward.5} parent=23 // pred_check
        %p218 = pneg %p45
      $region26: #{up_block_forward.5} parent=23 // pred_check_branch
        %220 = sbr.rel (%p218) target = $region28
      $region27: #{up_block_forward.5} parent=23 // pred_region
        %s221 = smul.u32 8, %s19
        %p222 = scmp.lt.s32.totalorder %s18, 1
        %s223 = scalar_select %p222, %s18, 1
        %p224 = scmp.lt.s32.totalorder %s221, 15
        %s225 = scalar_select %p224, %s221, 15
        %s226 = smul.addr %s225, 2
        %s227 = smul.addr %s223, 32
        %s228 = sadd.s32 %s226, %s227
        %s229 = smul.addr %s228, 8
        %s230 = scalar_lea.vmem %s0, %s229
        %s231 = smul.u32 8, %s19
      $region28: #{up_block_forward.5} parent=23 // pred_fallthru
        _
      // Predicated region
      $region29: #{up_block_forward.5} parent=23 // pred_check
        %p232 = pneg %p81
      $region30: #{up_block_forward.5} parent=23 // pred_check_branch
        %234 = sbr.rel (%p232) target = $region32
      $region31: #{up_block_forward.5} parent=23 // pred_region
        %s235 = smul.u32 %s19, 8
        %s236 = ssub.s32 %s235, 1
        %p237 = scmp.gt.s32.totalorder %s236, 0
        %s238 = scalar_select %p237, %s236, 0
        %p239 = scmp.lt.s32.totalorder %s18, 1
        %s240 = scalar_select %p239, %s18, 1
        %p241 = scmp.lt.s32.totalorder %s238, 15
        %s242 = scalar_select %p241, %s238, 15
        %s243 = smul.addr %s242, 2
        %s244 = smul.addr %s240, 32
        %s245 = sadd.s32 %s243, %s244
        %s246 = smul.addr %s245, 8
        %s247 = scalar_lea.vmem %s1, %s246
        %s248 = smul.u32 %s19, 8
        %s249 = ssub.s32 %s248, 1
        %p250 = scmp.gt.s32.totalorder %s249, 0
        %s251 = scalar_select %p250, %s249, 0
      $region32: #{up_block_forward.5} parent=23 // pred_fallthru
        _
      // Predicated region
      $region33: #{up_block_forward.5} parent=23 // pred_check
        %p252 = pneg %p117
      $region34: #{up_block_forward.5} parent=23 // pred_check_branch
        %254 = sbr.rel (%p252) target = $region36
      $region35: #{up_block_forward.5} parent=23 // pred_region
        %s255 = sadd.s32 %s19, 1
        %s256 = smul.u32 %s255, 8
        %p257 = scmp.lt.s32.totalorder %s256, 15
        %s258 = scalar_select %p257, %s256, 15
        %p259 = scmp.lt.s32.totalorder %s18, 1
        %s260 = scalar_select %p259, %s18, 1
        %p261 = scmp.lt.s32.totalorder %s258, 15
        %s262 = scalar_select %p261, %s258, 15
        %s263 = smul.addr %s262, 2
        %s264 = smul.addr %s260, 32
        %s265 = sadd.s32 %s263, %s264
        %s266 = smul.addr %s265, 8
        %s267 = scalar_lea.vmem %s2, %s266
        %s268 = sadd.s32 %s19, 1
        %s269 = smul.u32 %s268, 8
        %p270 = scmp.lt.s32.totalorder %s269, 15
        %s271 = scalar_select %p270, %s269, 15
      $region36: #{up_block_forward.5} parent=23 // pred_fallthru
        _
    $region24: #{up_block_forward.5} parent=5 // pred_fallthru
      _
    %p272 = scmp.le.s32.totalorder 1, %s11
    %p273 = scmp.lt.s32.totalorder %s11, 5
    %p274 = pnand %p272, %p273
    %p275 = pneg %p274
    // Predicated region
    $region37: #{up_block_forward.5} parent=5 // pred_check
      _
    $region38: #{up_block_forward.5} parent=5 // pred_check_branch
      %277 = sbr.rel (%p274) target = $region40
    $region39: #{up_block_forward.5} parent=5 // pred_region
      %s278 = ssub.s32 %s11, 1
      %s279 = smul.u32 8, %s21
      %p280 = scmp.lt.s32.totalorder %s20, 1
      %s281 = scalar_select %p280, %s20, 1
      %p282 = scmp.lt.s32.totalorder %s279, 15
      %s283 = scalar_select %p282, %s279, 15
      %s284 = smul.addr %s283, 2
      %s285 = smul.addr %s281, 32
      %s286 = sadd.s32 %s284, %s285
      %s287 = smul.addr %s286, 8
      %s288 = scalar_lea.vmem %s0, %s287
      %p289 = pneg %p51
      %p290 = pneg %p48
      %s291 = smul.u32 %s21, 8
      %s292 = ssub.s32 %s291, 1
      %p293 = scmp.gt.s32.totalorder %s292, 0
      %s294 = scalar_select %p293, %s292, 0
      %p295 = scmp.lt.s32.totalorder %s20, 1
      %s296 = scalar_select %p295, %s20, 1
      %p297 = scmp.lt.s32.totalorder %s294, 15
      %s298 = scalar_select %p297, %s294, 15
      %s299 = smul.addr %s298, 2
      %s300 = smul.addr %s296, 32
      %s301 = sadd.s32 %s299, %s300
      %s302 = smul.addr %s301, 8
      %s303 = scalar_lea.vmem %s1, %s302
      %p304 = pneg %p87
      %p305 = pneg %p84
      %s306 = sadd.s32 %s21, 1
      %s307 = smul.u32 %s306, 8
      %p308 = scmp.lt.s32.totalorder %s307, 15
      %s309 = scalar_select %p308, %s307, 15
      %p310 = scmp.lt.s32.totalorder %s20, 1
      %s311 = scalar_select %p310, %s20, 1
      %p312 = scmp.lt.s32.totalorder %s309, 15
      %s313 = scalar_select %p312, %s309, 15
      %s314 = smul.addr %s313, 2
      %s315 = smul.addr %s311, 32
      %s316 = sadd.s32 %s314, %s315
      %s317 = smul.addr %s316, 8
      %s318 = scalar_lea.vmem %s2, %s317
      %p319 = pneg %p123
      %p320 = pneg %p120
      %p321 = pneg %p144
      %p322 = pneg %p141
      %p323 = pneg %p165
      %p324 = pneg %p162
      %p325 = pneg %p193
      %p326 = pneg %p190
      %s327 = smul.u32 8, %s21
      %p328 = scmp.lt.s32.totalorder %s20, 1
      %s329 = scalar_select %p328, %s20, 1
      %p330 = scmp.lt.s32.totalorder %s327, 15
      %s331 = scalar_select %p330, %s327, 15
      %s332 = smul.addr %s331, 2
      %s333 = smul.addr %s329, 32
      %s334 = sadd.s32 %s332, %s333
      %s335 = smul.addr %s334, 8
      %s336 = scalar_lea.vmem %s5, %s335
      %s337 = smul.u32 8, %s21
      %p338 = scmp.lt.s32.totalorder %s20, 1
      %s339 = scalar_select %p338, %s20, 1
      %p340 = scmp.lt.s32.totalorder %s337, 15
      %s341 = scalar_select %p340, %s337, 15
      %s342 = smul.addr %s341, 2
      %s343 = smul.addr %s339, 32
      %s344 = sadd.s32 %s342, %s343
      %s345 = smul.addr %s344, 8
      %s346 = scalar_lea.vmem %s0, %s345
      %s347 = smul.u32 8, %s21
      %s348 = smul.u32 %s21, 8
      %s349 = ssub.s32 %s348, 1
      %p350 = scmp.gt.s32.totalorder %s349, 0
      %s351 = scalar_select %p350, %s349, 0
      %p352 = scmp.lt.s32.totalorder %s20, 1
      %s353 = scalar_select %p352, %s20, 1
      %p354 = scmp.lt.s32.totalorder %s351, 15
      %s355 = scalar_select %p354, %s351, 15
      %s356 = smul.addr %s355, 2
      %s357 = smul.addr %s353, 32
      %s358 = sadd.s32 %s356, %s357
      %s359 = smul.addr %s358, 8
      %s360 = scalar_lea.vmem %s1, %s359
      %s361 = smul.u32 %s21, 8
      %s362 = ssub.s32 %s361, 1
      %p363 = scmp.gt.s32.totalorder %s362, 0
      %s364 = scalar_select %p363, %s362, 0
      %s365 = sadd.s32 %s21, 1
      %s366 = smul.u32 %s365, 8
      %p367 = scmp.lt.s32.totalorder %s366, 15
      %s368 = scalar_select %p367, %s366, 15
      %p369 = scmp.lt.s32.totalorder %s20, 1
      %s370 = scalar_select %p369, %s20, 1
      %p371 = scmp.lt.s32.totalorder %s368, 15
      %s372 = scalar_select %p371, %s368, 15
      %s373 = smul.addr %s372, 2
      %s374 = smul.addr %s370, 32
      %s375 = sadd.s32 %s373, %s374
      %s376 = smul.addr %s375, 8
      %s377 = scalar_lea.vmem %s2, %s376
      %s378 = sadd.s32 %s21, 1
      %s379 = smul.u32 %s378, 8
      %p380 = scmp.lt.s32.totalorder %s379, 15
      %s381 = scalar_select %p380, %s379, 15
      %s382 = smul.u32 8, %s21
      %p383 = scmp.lt.s32.totalorder %s20, 1
      %s384 = scalar_select %p383, %s20, 1
      %p385 = scmp.lt.s32.totalorder %s382, 15
      %s386 = scalar_select %p385, %s382, 15
      %s387 = smul.addr %s386, 2
      %s388 = smul.addr %s384, 32
      %s389 = sadd.s32 %s387, %s388
      %s390 = smul.addr %s389, 8
      %s391 = scalar_lea.vmem %s5, %s390
      %s392 = smul.u32 8, %s21
      %v393 = vld [vmem:[%s360] sm:$0xff]
      %v394 = vld [vmem:[%s360 + $0x8] sm:$0xff]
      %v395 = vld [vmem:[%s346] sm:$0xff]
      %v396 = vld [vmem:[%s346 + $0x8] sm:$0xff]
      %v397 = vld [vmem:[%s346 + $0x10] sm:$0xff]
      %v398 = vld [vmem:[%s346 + $0x18] sm:$0xff]
      %v399 = vld [vmem:[%s346 + $0x20] sm:$0xff]
      %v400 = vld [vmem:[%s346 + $0x28] sm:$0xff]
      %v401 = vld [vmem:[%s346 + $0x30] sm:$0xff]
      %v402 = vld [vmem:[%s346 + $0x38] sm:$0xff]
      %v403 = vld [vmem:[%s346 + $0x40] sm:$0xff]
      %v404 = vld [vmem:[%s346 + $0x48] sm:$0xff]
      %v405 = vld [vmem:[%s346 + $0x50] sm:$0xff]
      %v406 = vld [vmem:[%s346 + $0x58] sm:$0xff]
      %v407 = vld [vmem:[%s346 + $0x60] sm:$0xff]
      %v408 = vld [vmem:[%s346 + $0x68] sm:$0xff]
      %v409 = vld [vmem:[%s346 + $0x70] sm:$0xff]
      %v410 = vld [vmem:[%s346 + $0x78] sm:$0xff]
      %v411 = vld [vmem:[%s377] sm:$0xff]
      %v412 = vld [vmem:[%s377 + $0x8] sm:$0xff]
      %p413 = scmp.gt.s32.totalorder %s21, 0
      %s414 = scalar_select %p413, 1, 0
      %v415 = vstv %s414
      %vm416 = vcmp.eq.s32.totalorder %v415, 1
      %p417 = scmp.lt.s32.totalorder %s21, 1
      %s418 = scalar_select %p417, 1, 0
      %v419 = vstv %s418
      %vm420 = vcmp.eq.s32.totalorder %v419, 1
      %v421 = vsel %vm416, 1, 0
      %v422 = vsel %vm420, 1, 0
      %vm423 = vcmp.eq.s32.totalorder %v421, 1
      %vm424 = vcmp.eq.s32.totalorder %v422, 1
      %v425 = vsel %vm423, %v393, 0.0
      %v426 = vsel %vm423, %v394, 0.0
      %v427 = vsel 1, %v395, 0.0
      %v428 = vsel 1, %v396, 0.0
      %v429 = vsel 1, %v397, 0.0
      %v430 = vsel 1, %v398, 0.0
      %v431 = vsel 1, %v399, 0.0
      %v432 = vsel 1, %v400, 0.0
      %v433 = vsel 1, %v401, 0.0
      %v434 = vsel 1, %v402, 0.0
      %v435 = vsel 1, %v403, 0.0
      %v436 = vsel 1, %v404, 0.0
      %v437 = vsel 1, %v405, 0.0
      %v438 = vsel 1, %v406, 0.0
      %v439 = vsel 1, %v407, 0.0
      %v440 = vsel 1, %v408, 0.0
      %v441 = vsel 1, %v409, 0.0
      %v442 = vsel 1, %v410, 0.0
      %v443 = vsel %vm424, %v411, 0.0
      %v444 = vsel %vm424, %v412, 0.0
      %v445 = vld [vmem:[%s3] sm:$0xff]
      %v446 = vld [vmem:[%s3 + $0x8] sm:$0xff]
      %v447 = vld [vmem:[%s3 + $0x10] sm:$0xff]
      %v448 = vld [vmem:[%s3 + $0x18] sm:$0xff]
      %v449 = vld [vmem:[%s3 + $0x20] sm:$0xff]
      %v450 = vld [vmem:[%s3 + $0x28] sm:$0xff]
      %v451 = vld [vmem:[%s3 + $0x30] sm:$0xff]
      %v452 = vld [vmem:[%s3 + $0x38] sm:$0xff]
      %v453 = vld [vmem:[%s3 + $0x40] sm:$0xff]
      %v454 = vld [vmem:[%s4] sm:$0x1]
      %vm475 = vcmask 1040384
      %v476 = vrot.slane %v425, 7
      %v477 = vrot.slane %v426, 7
      %v478 = vsel %vm475, %v476, %v477
      %v479 = vrot.slane %v427, 7
      %v480 = vrot.slane %v428, 7
      %v481 = vsel %vm475, %v479, %v480
      %v482 = vrot.slane %v429, 7
      %v483 = vrot.slane %v430, 7
      %v484 = vsel %vm475, %v482, %v483
      %v485 = vrot.slane %v431, 7
      %v486 = vrot.slane %v432, 7
      %v487 = vsel %vm475, %v485, %v486
      %v488 = vrot.slane %v433, 7
      %v489 = vrot.slane %v434, 7
      %v490 = vsel %vm475, %v488, %v489
      %v491 = vrot.slane %v435, 7
      %v492 = vrot.slane %v436, 7
      %v493 = vsel %vm475, %v491, %v492
      %v494 = vrot.slane %v437, 7
      %v495 = vrot.slane %v438, 7
      %v496 = vsel %vm475, %v494, %v495
      %v497 = vrot.slane %v439, 7
      %v498 = vrot.slane %v440, 7
      %v499 = vsel %vm475, %v497, %v498
      %v500 = vrot.slane %v441, 7
      %v501 = vrot.slane %v442, 7
      %v502 = vsel %vm475, %v500, %v501
      %v503 = vrot.slane %v443, 7
      %v504 = vrot.slane %v444, 7
      %v505 = vsel %vm475, %v503, %v504
      %v534 = vsel %vm475, 0.0, %v476
      %v535 = vsel %vm475, 0.0, %v479
      %v536 = vsel %vm475, 0.0, %v482
      %v537 = vsel %vm475, 0.0, %v485
      %v538 = vsel %vm475, 0.0, %v488
      %v539 = vsel %vm475, 0.0, %v491
      %v540 = vsel %vm475, 0.0, %v494
      %v541 = vsel %vm475, 0.0, %v497
      %v542 = vsel %vm475, 0.0, %v500
      %v543 = vsel %vm475, 0.0, %v503
      %v544 = vsel %vm475, %v477, 0.0
      %v545 = vsel %vm475, %v480, 0.0
      %v546 = vsel %vm475, %v483, 0.0
      %v547 = vsel %vm475, %v486, 0.0
      %v548 = vsel %vm475, %v489, 0.0
      %v549 = vsel %vm475, %v492, 0.0
      %v550 = vsel %vm475, %v495, 0.0
      %v551 = vsel %vm475, %v498, 0.0
      %v552 = vsel %vm475, %v501, 0.0
      %v553 = vsel %vm475, %v504, 0.0
      %vm570 = vcmask 1046528
      %v571 = vrot.slane %v534, 1
      %v572 = vrot.slane %v478, 1
      %v573 = vsel %vm570, %v571, %v572
      %v574 = vrot.slane %v544, 1
      %v575 = vsel %vm570, %v572, %v574
      %v576 = vrot.slane %v535, 1
      %v577 = vrot.slane %v481, 1
      %v578 = vsel %vm570, %v576, %v577
      %v579 = vrot.slane %v545, 1
      %v580 = vsel %vm570, %v577, %v579
      %v581 = vrot.slane %v536, 1
      %v582 = vrot.slane %v484, 1
      %v583 = vsel %vm570, %v581, %v582
      %v584 = vrot.slane %v546, 1
      %v585 = vsel %vm570, %v582, %v584
      %v586 = vrot.slane %v537, 1
      %v587 = vrot.slane %v487, 1
      %v588 = vsel %vm570, %v586, %v587
      %v589 = vrot.slane %v547, 1
      %v590 = vsel %vm570, %v587, %v589
      %v591 = vrot.slane %v538, 1
      %v592 = vrot.slane %v490, 1
      %v593 = vsel %vm570, %v591, %v592
      %v594 = vrot.slane %v548, 1
      %v595 = vsel %vm570, %v592, %v594
      %v596 = vrot.slane %v539, 1
      %v597 = vrot.slane %v493, 1
      %v598 = vsel %vm570, %v596, %v597
      %v599 = vrot.slane %v549, 1
      %v600 = vsel %vm570, %v597, %v599
      %v601 = vrot.slane %v540, 1
      %v602 = vrot.slane %v496, 1
      %v603 = vsel %vm570, %v601, %v602
      %v604 = vrot.slane %v550, 1
      %v605 = vsel %vm570, %v602, %v604
      %v606 = vrot.slane %v541, 1
      %v607 = vrot.slane %v499, 1
      %v608 = vsel %vm570, %v606, %v607
      %v609 = vrot.slane %v551, 1
      %v610 = vsel %vm570, %v607, %v609
      %611 = vrot.lane.b32.xlu0 %v573, 8
      %v612 = vpop.permute.xlu0 %611
      %613 = vrot.lane.b32.xlu0 %v575, 8
      %v614 = vpop.permute.xlu0 %613
      %615 = vrot.lane.b32.xlu0 %v578, 8
      %v616 = vpop.permute.xlu0 %615
      %617 = vrot.lane.b32.xlu0 %v580, 8
      %v618 = vpop.permute.xlu0 %617
      %619 = vrot.lane.b32.xlu0 %v583, 8
      %v620 = vpop.permute.xlu0 %619
      %621 = vrot.lane.b32.xlu0 %v585, 8
      %v622 = vpop.permute.xlu0 %621
      %623 = vrot.lane.b32.xlu0 %v588, 8
      %v624 = vpop.permute.xlu0 %623
      %625 = vrot.lane.b32.xlu0 %v590, 8
      %v626 = vpop.permute.xlu0 %625
      %627 = vrot.lane.b32.xlu0 %v593, 8
      %v628 = vpop.permute.xlu0 %627
      %629 = vrot.lane.b32.xlu0 %v595, 8
      %v630 = vpop.permute.xlu0 %629
      %631 = vrot.lane.b32.xlu0 %v598, 8
      %v632 = vpop.permute.xlu0 %631
      %633 = vrot.lane.b32.xlu0 %v600, 8
      %v634 = vpop.permute.xlu0 %633
      %635 = vrot.lane.b32.xlu0 %v603, 8
      %v636 = vpop.permute.xlu0 %635
      %637 = vrot.lane.b32.xlu0 %v605, 8
      %v638 = vpop.permute.xlu0 %637
      %639 = vrot.lane.b32.xlu0 %v608, 8
      %v640 = vpop.permute.xlu0 %639
      %641 = vrot.lane.b32.xlu0 %v610, 8
      %v642 = vpop.permute.xlu0 %641
      %vm659 = vcmask 1045504
      %v660 = vrot.slane %v534, 2
      %v661 = vrot.slane %v478, 2
      %v662 = vsel %vm659, %v660, %v661
      %v663 = vrot.slane %v544, 2
      %v664 = vsel %vm659, %v661, %v663
      %v665 = vrot.slane %v535, 2
      %v666 = vrot.slane %v481, 2
      %v667 = vsel %vm659, %v665, %v666
      %v668 = vrot.slane %v545, 2
      %v669 = vsel %vm659, %v666, %v668
      %v670 = vrot.slane %v536, 2
      %v671 = vrot.slane %v484, 2
      %v672 = vsel %vm659, %v670, %v671
      %v673 = vrot.slane %v546, 2
      %v674 = vsel %vm659, %v671, %v673
      %v675 = vrot.slane %v537, 2
      %v676 = vrot.slane %v487, 2
      %v677 = vsel %vm659, %v675, %v676
      %v678 = vrot.slane %v547, 2
      %v679 = vsel %vm659, %v676, %v678
      %v680 = vrot.slane %v538, 2
      %v681 = vrot.slane %v490, 2
      %v682 = vsel %vm659, %v680, %v681
      %v683 = vrot.slane %v548, 2
      %v684 = vsel %vm659, %v681, %v683
      %v685 = vrot.slane %v539, 2
      %v686 = vrot.slane %v493, 2
      %v687 = vsel %vm659, %v685, %v686
      %v688 = vrot.slane %v549, 2
      %v689 = vsel %vm659, %v686, %v688
      %v690 = vrot.slane %v540, 2
      %v691 = vrot.slane %v496, 2
      %v692 = vsel %vm659, %v690, %v691
      %v693 = vrot.slane %v550, 2
      %v694 = vsel %vm659, %v691, %v693
      %v695 = vrot.slane %v541, 2
      %v696 = vrot.slane %v499, 2
      %v697 = vsel %vm659, %v695, %v696
      %v698 = vrot.slane %v551, 2
      %v699 = vsel %vm659, %v696, %v698
      %700 = vrot.lane.b32.xlu0 %v662, 16
      %v701 = vpop.permute.xlu0 %700
      %702 = vrot.lane.b32.xlu0 %v664, 16
      %v703 = vpop.permute.xlu0 %702
      %704 = vrot.lane.b32.xlu0 %v667, 16
      %v705 = vpop.permute.xlu0 %704
      %706 = vrot.lane.b32.xlu0 %v669, 16
      %v707 = vpop.permute.xlu0 %706
      %708 = vrot.lane.b32.xlu0 %v672, 16
      %v709 = vpop.permute.xlu0 %708
      %710 = vrot.lane.b32.xlu0 %v674, 16
      %v711 = vpop.permute.xlu0 %710
      %712 = vrot.lane.b32.xlu0 %v677, 16
      %v713 = vpop.permute.xlu0 %712
      %714 = vrot.lane.b32.xlu0 %v679, 16
      %v715 = vpop.permute.xlu0 %714
      %716 = vrot.lane.b32.xlu0 %v682, 16
      %v717 = vpop.permute.xlu0 %716
      %718 = vrot.lane.b32.xlu0 %v684, 16
      %v719 = vpop.permute.xlu0 %718
      %720 = vrot.lane.b32.xlu0 %v687, 16
      %v721 = vpop.permute.xlu0 %720
      %722 = vrot.lane.b32.xlu0 %v689, 16
      %v723 = vpop.permute.xlu0 %722
      %724 = vrot.lane.b32.xlu0 %v692, 16
      %v725 = vpop.permute.xlu0 %724
      %726 = vrot.lane.b32.xlu0 %v694, 16
      %v727 = vpop.permute.xlu0 %726
      %728 = vrot.lane.b32.xlu0 %v697, 16
      %v729 = vpop.permute.xlu0 %728
      %730 = vrot.lane.b32.xlu0 %v699, 16
      %v731 = vpop.permute.xlu0 %730
      %749 = vrot.lane.b32.xlu0 %v535, 24
      %v750 = vpop.permute.xlu0 %749
      %751 = vrot.lane.b32.xlu0 %v481, 24
      %v752 = vpop.permute.xlu0 %751
      %753 = vrot.lane.b32.xlu0 %v536, 24
      %v754 = vpop.permute.xlu0 %753
      %755 = vrot.lane.b32.xlu0 %v484, 24
      %v756 = vpop.permute.xlu0 %755
      %757 = vrot.lane.b32.xlu0 %v537, 24
      %v758 = vpop.permute.xlu0 %757
      %759 = vrot.lane.b32.xlu0 %v487, 24
      %v760 = vpop.permute.xlu0 %759
      %761 = vrot.lane.b32.xlu0 %v538, 24
      %v762 = vpop.permute.xlu0 %761
      %763 = vrot.lane.b32.xlu0 %v490, 24
      %v764 = vpop.permute.xlu0 %763
      %765 = vrot.lane.b32.xlu0 %v539, 24
      %v766 = vpop.permute.xlu0 %765
      %767 = vrot.lane.b32.xlu0 %v493, 24
      %v768 = vpop.permute.xlu0 %767
      %769 = vrot.lane.b32.xlu0 %v540, 24
      %v770 = vpop.permute.xlu0 %769
      %771 = vrot.lane.b32.xlu0 %v496, 24
      %v772 = vpop.permute.xlu0 %771
      %773 = vrot.lane.b32.xlu0 %v541, 24
      %v774 = vpop.permute.xlu0 %773
      %775 = vrot.lane.b32.xlu0 %v499, 24
      %v776 = vpop.permute.xlu0 %775
      %777 = vrot.lane.b32.xlu0 %v542, 24
      %v778 = vpop.permute.xlu0 %777
      %779 = vrot.lane.b32.xlu0 %v502, 24
      %v780 = vpop.permute.xlu0 %779
      %v798 = vrot.slane %v542, 1
      %v799 = vrot.slane %v502, 1
      %v800 = vsel %vm570, %v798, %v799
      %v801 = vrot.slane %v552, 1
      %v802 = vsel %vm570, %v799, %v801
      %803 = vrot.lane.b32.xlu0 %v578, 32
      %v804 = vpop.permute.xlu0 %803
      %805 = vrot.lane.b32.xlu0 %v580, 32
      %v806 = vpop.permute.xlu0 %805
      %807 = vrot.lane.b32.xlu0 %v583, 32
      %v808 = vpop.permute.xlu0 %807
      %809 = vrot.lane.b32.xlu0 %v585, 32
      %v810 = vpop.permute.xlu0 %809
      %811 = vrot.lane.b32.xlu0 %v588, 32
      %v812 = vpop.permute.xlu0 %811
      %813 = vrot.lane.b32.xlu0 %v590, 32
      %v814 = vpop.permute.xlu0 %813
      %815 = vrot.lane.b32.xlu0 %v593, 32
      %v816 = vpop.permute.xlu0 %815
      %817 = vrot.lane.b32.xlu0 %v595, 32
      %v818 = vpop.permute.xlu0 %817
      %819 = vrot.lane.b32.xlu0 %v598, 32
      %v820 = vpop.permute.xlu0 %819
      %821 = vrot.lane.b32.xlu0 %v600, 32
      %v822 = vpop.permute.xlu0 %821
      %823 = vrot.lane.b32.xlu0 %v603, 32
      %v824 = vpop.permute.xlu0 %823
      %825 = vrot.lane.b32.xlu0 %v605, 32
      %v826 = vpop.permute.xlu0 %825
      %827 = vrot.lane.b32.xlu0 %v608, 32
      %v828 = vpop.permute.xlu0 %827
      %829 = vrot.lane.b32.xlu0 %v610, 32
      %v830 = vpop.permute.xlu0 %829
      %831 = vrot.lane.b32.xlu0 %v800, 32
      %v832 = vpop.permute.xlu0 %831
      %833 = vrot.lane.b32.xlu0 %v802, 32
      %v834 = vpop.permute.xlu0 %833
      %v851 = vrot.slane %v542, 2
      %v852 = vrot.slane %v502, 2
      %v853 = vsel %vm659, %v851, %v852
      %v854 = vrot.slane %v552, 2
      %v855 = vsel %vm659, %v852, %v854
      %856 = vrot.lane.b32.xlu0 %v667, 40
      %v857 = vpop.permute.xlu0 %856
      %858 = vrot.lane.b32.xlu0 %v669, 40
      %v859 = vpop.permute.xlu0 %858
      %860 = vrot.lane.b32.xlu0 %v672, 40
      %v861 = vpop.permute.xlu0 %860
      %862 = vrot.lane.b32.xlu0 %v674, 40
      %v863 = vpop.permute.xlu0 %862
      %864 = vrot.lane.b32.xlu0 %v677, 40
      %v865 = vpop.permute.xlu0 %864
      %866 = vrot.lane.b32.xlu0 %v679, 40
      %v867 = vpop.permute.xlu0 %866
      %868 = vrot.lane.b32.xlu0 %v682, 40
      %v869 = vpop.permute.xlu0 %868
      %870 = vrot.lane.b32.xlu0 %v684, 40
      %v871 = vpop.permute.xlu0 %870
      %872 = vrot.lane.b32.xlu0 %v687, 40
      %v873 = vpop.permute.xlu0 %872
      %874 = vrot.lane.b32.xlu0 %v689, 40
      %v875 = vpop.permute.xlu0 %874
      %876 = vrot.lane.b32.xlu0 %v692, 40
      %v877 = vpop.permute.xlu0 %876
      %878 = vrot.lane.b32.xlu0 %v694, 40
      %v879 = vpop.permute.xlu0 %878
      %880 = vrot.lane.b32.xlu0 %v697, 40
      %v881 = vpop.permute.xlu0 %880
      %882 = vrot.lane.b32.xlu0 %v699, 40
      %v883 = vpop.permute.xlu0 %882
      %884 = vrot.lane.b32.xlu0 %v853, 40
      %v885 = vpop.permute.xlu0 %884
      %886 = vrot.lane.b32.xlu0 %v855, 40
      %v887 = vpop.permute.xlu0 %886
      %905 = vrot.lane.b32.xlu0 %v536, 48
      %v906 = vpop.permute.xlu0 %905
      %907 = vrot.lane.b32.xlu0 %v484, 48
      %v908 = vpop.permute.xlu0 %907
      %909 = vrot.lane.b32.xlu0 %v537, 48
      %v910 = vpop.permute.xlu0 %909
      %911 = vrot.lane.b32.xlu0 %v487, 48
      %v912 = vpop.permute.xlu0 %911
      %913 = vrot.lane.b32.xlu0 %v538, 48
      %v914 = vpop.permute.xlu0 %913
      %915 = vrot.lane.b32.xlu0 %v490, 48
      %v916 = vpop.permute.xlu0 %915
      %917 = vrot.lane.b32.xlu0 %v539, 48
      %v918 = vpop.permute.xlu0 %917
      %919 = vrot.lane.b32.xlu0 %v493, 48
      %v920 = vpop.permute.xlu0 %919
      %921 = vrot.lane.b32.xlu0 %v540, 48
      %v922 = vpop.permute.xlu0 %921
      %923 = vrot.lane.b32.xlu0 %v496, 48
      %v924 = vpop.permute.xlu0 %923
      %925 = vrot.lane.b32.xlu0 %v541, 48
      %v926 = vpop.permute.xlu0 %925
      %927 = vrot.lane.b32.xlu0 %v499, 48
      %v928 = vpop.permute.xlu0 %927
      %929 = vrot.lane.b32.xlu0 %v542, 48
      %v930 = vpop.permute.xlu0 %929
      %931 = vrot.lane.b32.xlu0 %v502, 48
      %v932 = vpop.permute.xlu0 %931
      %933 = vrot.lane.b32.xlu0 %v543, 48
      %v934 = vpop.permute.xlu0 %933
      %935 = vrot.lane.b32.xlu0 %v505, 48
      %v936 = vpop.permute.xlu0 %935
      %v954 = vrot.slane %v543, 1
      %v955 = vrot.slane %v505, 1
      %v956 = vsel %vm570, %v954, %v955
      %v957 = vrot.slane %v553, 1
      %v958 = vsel %vm570, %v955, %v957
      %959 = vrot.lane.b32.xlu0 %v583, 56
      %v960 = vpop.permute.xlu0 %959
      %961 = vrot.lane.b32.xlu0 %v585, 56
      %v962 = vpop.permute.xlu0 %961
      %963 = vrot.lane.b32.xlu0 %v588, 56
      %v964 = vpop.permute.xlu0 %963
      %965 = vrot.lane.b32.xlu0 %v590, 56
      %v966 = vpop.permute.xlu0 %965
      %967 = vrot.lane.b32.xlu0 %v593, 56
      %v968 = vpop.permute.xlu0 %967
      %969 = vrot.lane.b32.xlu0 %v595, 56
      %v970 = vpop.permute.xlu0 %969
      %971 = vrot.lane.b32.xlu0 %v598, 56
      %v972 = vpop.permute.xlu0 %971
      %973 = vrot.lane.b32.xlu0 %v600, 56
      %v974 = vpop.permute.xlu0 %973
      %975 = vrot.lane.b32.xlu0 %v603, 56
      %v976 = vpop.permute.xlu0 %975
      %977 = vrot.lane.b32.xlu0 %v605, 56
      %v978 = vpop.permute.xlu0 %977
      %979 = vrot.lane.b32.xlu0 %v608, 56
      %v980 = vpop.permute.xlu0 %979
      %981 = vrot.lane.b32.xlu0 %v610, 56
      %v982 = vpop.permute.xlu0 %981
      %983 = vrot.lane.b32.xlu0 %v800, 56
      %v984 = vpop.permute.xlu0 %983
      %985 = vrot.lane.b32.xlu0 %v802, 56
      %v986 = vpop.permute.xlu0 %985
      %987 = vrot.lane.b32.xlu0 %v956, 56
      %v988 = vpop.permute.xlu0 %987
      %989 = vrot.lane.b32.xlu0 %v958, 56
      %v990 = vpop.permute.xlu0 %989
      %v1007 = vrot.slane %v543, 2
      %v1008 = vrot.slane %v505, 2
      %v1009 = vsel %vm659, %v1007, %v1008
      %v1010 = vrot.slane %v553, 2
      %v1011 = vsel %vm659, %v1008, %v1010
      %1012 = vrot.lane.b32.xlu0 %v672, 64
      %v1013 = vpop.permute.xlu0 %1012
      %1014 = vrot.lane.b32.xlu0 %v674, 64
      %v1015 = vpop.permute.xlu0 %1014
      %1016 = vrot.lane.b32.xlu0 %v677, 64
      %v1017 = vpop.permute.xlu0 %1016
      %1018 = vrot.lane.b32.xlu0 %v679, 64
      %v1019 = vpop.permute.xlu0 %1018
      %1020 = vrot.lane.b32.xlu0 %v682, 64
      %v1021 = vpop.permute.xlu0 %1020
      %1022 = vrot.lane.b32.xlu0 %v684, 64
      %v1023 = vpop.permute.xlu0 %1022
      %1024 = vrot.lane.b32.xlu0 %v687, 64
      %v1025 = vpop.permute.xlu0 %1024
      %1026 = vrot.lane.b32.xlu0 %v689, 64
      %v1027 = vpop.permute.xlu0 %1026
      %1028 = vrot.lane.b32.xlu0 %v692, 64
      %v1029 = vpop.permute.xlu0 %1028
      %1030 = vrot.lane.b32.xlu0 %v694, 64
      %v1031 = vpop.permute.xlu0 %1030
      %1032 = vrot.lane.b32.xlu0 %v697, 64
      %v1033 = vpop.permute.xlu0 %1032
      %1034 = vrot.lane.b32.xlu0 %v699, 64
      %v1035 = vpop.permute.xlu0 %1034
      %1036 = vrot.lane.b32.xlu0 %v853, 64
      %v1037 = vpop.permute.xlu0 %1036
      %1038 = vrot.lane.b32.xlu0 %v855, 64
      %v1039 = vpop.permute.xlu0 %1038
      %1040 = vrot.lane.b32.xlu0 %v1009, 64
      %v1041 = vpop.permute.xlu0 %1040
      %1042 = vrot.lane.b32.xlu0 %v1011, 64
      %v1043 = vpop.permute.xlu0 %1042
      %vm1060 = vcmask 64512
      %v1061 = vsel %vm1060, %v534, %v612
      %v1062 = vsel %vm1060, %v478, %v614
      %v1063 = vsel %vm1060, %v535, %v616
      %v1064 = vsel %vm1060, %v481, %v618
      %v1065 = vsel %vm1060, %v536, %v620
      %v1066 = vsel %vm1060, %v484, %v622
      %v1067 = vsel %vm1060, %v537, %v624
      %v1068 = vsel %vm1060, %v487, %v626
      %v1069 = vsel %vm1060, %v538, %v628
      %v1070 = vsel %vm1060, %v490, %v630
      %v1071 = vsel %vm1060, %v539, %v632
      %v1072 = vsel %vm1060, %v493, %v634
      %v1073 = vsel %vm1060, %v540, %v636
      %v1074 = vsel %vm1060, %v496, %v638
      %v1075 = vsel %vm1060, %v541, %v640
      %v1076 = vsel %vm1060, %v499, %v642
      %vm1077 = vcmask 130048
      %v1078 = vsel %vm1077, %v1061, %v701
      %v1079 = vsel %vm1077, %v1062, %v703
      %v1080 = vsel %vm1077, %v1063, %v705
      %v1081 = vsel %vm1077, %v1064, %v707
      %v1082 = vsel %vm1077, %v1065, %v709
      %v1083 = vsel %vm1077, %v1066, %v711
      %v1084 = vsel %vm1077, %v1067, %v713
      %v1085 = vsel %vm1077, %v1068, %v715
      %v1086 = vsel %vm1077, %v1069, %v717
      %v1087 = vsel %vm1077, %v1070, %v719
      %v1088 = vsel %vm1077, %v1071, %v721
      %v1089 = vsel %vm1077, %v1072, %v723
      %v1090 = vsel %vm1077, %v1073, %v725
      %v1091 = vsel %vm1077, %v1074, %v727
      %v1092 = vsel %vm1077, %v1075, %v729
      %v1093 = vsel %vm1077, %v1076, %v731
      %vm1094 = vcmask 195584
      %v1095 = vsel %vm1094, %v1078, %v750
      %v1096 = vsel %vm1094, %v1079, %v752
      %v1097 = vsel %vm1094, %v1080, %v754
      %v1098 = vsel %vm1094, %v1081, %v756
      %v1099 = vsel %vm1094, %v1082, %v758
      %v1100 = vsel %vm1094, %v1083, %v760
      %v1101 = vsel %vm1094, %v1084, %v762
      %v1102 = vsel %vm1094, %v1085, %v764
      %v1103 = vsel %vm1094, %v1086, %v766
      %v1104 = vsel %vm1094, %v1087, %v768
      %v1105 = vsel %vm1094, %v1088, %v770
      %v1106 = vsel %vm1094, %v1089, %v772
      %v1107 = vsel %vm1094, %v1090, %v774
      %v1108 = vsel %vm1094, %v1091, %v776
      %v1109 = vsel %vm1094, %v1092, %v778
      %v1110 = vsel %vm1094, %v1093, %v780
      %vm1111 = vcmask 261120
      %v1112 = vsel %vm1111, %v1095, %v804
      %v1113 = vsel %vm1111, %v1096, %v806
      %v1114 = vsel %vm1111, %v1097, %v808
      %v1115 = vsel %vm1111, %v1098, %v810
      %v1116 = vsel %vm1111, %v1099, %v812
      %v1117 = vsel %vm1111, %v1100, %v814
      %v1118 = vsel %vm1111, %v1101, %v816
      %v1119 = vsel %vm1111, %v1102, %v818
      %v1120 = vsel %vm1111, %v1103, %v820
      %v1121 = vsel %vm1111, %v1104, %v822
      %v1122 = vsel %vm1111, %v1105, %v824
      %v1123 = vsel %vm1111, %v1106, %v826
      %v1124 = vsel %vm1111, %v1107, %v828
      %v1125 = vsel %vm1111, %v1108, %v830
      %v1126 = vsel %vm1111, %v1109, %v832
      %v1127 = vsel %vm1111, %v1110, %v834
      %vm1128 = vcmask 326656
      %v1129 = vsel %vm1128, %v1112, %v857
      %v1130 = vsel %vm1128, %v1113, %v859
      %v1131 = vsel %vm1128, %v1114, %v861
      %v1132 = vsel %vm1128, %v1115, %v863
      %v1133 = vsel %vm1128, %v1116, %v865
      %v1134 = vsel %vm1128, %v1117, %v867
      %v1135 = vsel %vm1128, %v1118, %v869
      %v1136 = vsel %vm1128, %v1119, %v871
      %v1137 = vsel %vm1128, %v1120, %v873
      %v1138 = vsel %vm1128, %v1121, %v875
      %v1139 = vsel %vm1128, %v1122, %v877
      %v1140 = vsel %vm1128, %v1123, %v879
      %v1141 = vsel %vm1128, %v1124, %v881
      %v1142 = vsel %vm1128, %v1125, %v883
      %v1143 = vsel %vm1128, %v1126, %v885
      %v1144 = vsel %vm1128, %v1127, %v887
      %vm1145 = vcmask 392192
      %v1146 = vsel %vm1145, %v1129, %v906
      %v1147 = vsel %vm1145, %v1130, %v908
      %v1148 = vsel %vm1145, %v1131, %v910
      %v1149 = vsel %vm1145, %v1132, %v912
      %v1150 = vsel %vm1145, %v1133, %v914
      %v1151 = vsel %vm1145, %v1134, %v916
      %v1152 = vsel %vm1145, %v1135, %v918
      %v1153 = vsel %vm1145, %v1136, %v920
      %v1154 = vsel %vm1145, %v1137, %v922
      %v1155 = vsel %vm1145, %v1138, %v924
      %v1156 = vsel %vm1145, %v1139, %v926
      %v1157 = vsel %vm1145, %v1140, %v928
      %v1158 = vsel %vm1145, %v1141, %v930
      %v1159 = vsel %vm1145, %v1142, %v932
      %v1160 = vsel %vm1145, %v1143, %v934
      %v1161 = vsel %vm1145, %v1144, %v936
      %vm1162 = vcmask 457728
      %v1163 = vsel %vm1162, %v1146, %v960
      %v1164 = vsel %vm1162, %v1147, %v962
      %v1165 = vsel %vm1162, %v1148, %v964
      %v1166 = vsel %vm1162, %v1149, %v966
      %v1167 = vsel %vm1162, %v1150, %v968
      %v1168 = vsel %vm1162, %v1151, %v970
      %v1169 = vsel %vm1162, %v1152, %v972
      %v1170 = vsel %vm1162, %v1153, %v974
      %v1171 = vsel %vm1162, %v1154, %v976
      %v1172 = vsel %vm1162, %v1155, %v978
      %v1173 = vsel %vm1162, %v1156, %v980
      %v1174 = vsel %vm1162, %v1157, %v982
      %v1175 = vsel %vm1162, %v1158, %v984
      %v1176 = vsel %vm1162, %v1159, %v986
      %v1177 = vsel %vm1162, %v1160, %v988
      %v1178 = vsel %vm1162, %v1161, %v990
      %vm1179 = vcmask 523264
      %v1180 = vsel %vm1179, %v1163, %v1013
      %v1181 = vsel %vm1179, %v1164, %v1015
      %v1182 = vsel %vm1179, %v1165, %v1017
      %v1183 = vsel %vm1179, %v1166, %v1019
      %v1184 = vsel %vm1179, %v1167, %v1021
      %v1185 = vsel %vm1179, %v1168, %v1023
      %v1186 = vsel %vm1179, %v1169, %v1025
      %v1187 = vsel %vm1179, %v1170, %v1027
      %v1188 = vsel %vm1179, %v1171, %v1029
      %v1189 = vsel %vm1179, %v1172, %v1031
      %v1190 = vsel %vm1179, %v1173, %v1033
      %v1191 = vsel %vm1179, %v1174, %v1035
      %v1192 = vsel %vm1179, %v1175, %v1037
      %v1193 = vsel %vm1179, %v1176, %v1039
      %v1194 = vsel %vm1179, %v1177, %v1041
      %v1195 = vsel %vm1179, %v1178, %v1043
      %v1197 = vlaneseq
      %v1198 = vshrl.u32 %v1197, 7
      %v1199 = vsub.s32 0, %v1198
      %v1200 = vrot.slane %v454, %v1199
      %vm1202 = vcmask 588800
      %v1204 = vsel %vm1202, %v1180, 0
      %v1207 = vsel %vm1202, %v1181, 0
      %v1210 = vsel %vm1202, %v1182, 0
      %v1213 = vsel %vm1202, %v1183, 0
      %v1216 = vsel %vm1202, %v1184, 0
      %v1219 = vsel %vm1202, %v1185, 0
      %v1222 = vsel %vm1202, %v1186, 0
      %v1225 = vsel %vm1202, %v1187, 0
      %v1228 = vsel %vm1202, %v1188, 0
      %v1231 = vsel %vm1202, %v1189, 0
      %v1234 = vsel %vm1202, %v1190, 0
      %v1237 = vsel %vm1202, %v1191, 0
      %v1240 = vsel %vm1202, %v1192, 0
      %v1243 = vsel %vm1202, %v1193, 0
      %v1246 = vsel %vm1202, %v1194, 0
      %v1249 = vsel %vm1202, %v1195, 0
      %1251 = vmatprep.subr.mxu0 0.0
      %1252 = vmatpush1.msra.mxu0 0.0
      %1253 = vmatprep.subr.mxu0 0.0
      %1254 = vmatpush1.msra.mxu0 0.0
      %1255 = vmatprep.subr.mxu0 0.0
      %1256 = vmatpush1.msra.mxu0 0.0
      %1257 = vmatprep.subr.mxu0 0.0
      %1258 = vmatpush1.msra.mxu0 0.0
      %1259 = vmatprep.subr.mxu0 0.0
      %1260 = vmatpush1.msra.mxu0 0.0
      %1261 = vmatprep.subr.mxu0 0.0
      %1262 = vmatpush1.msra.mxu0 0.0
      %1263 = vmatprep.subr.mxu0 0.0
      %1264 = vmatpush1.msra.mxu0 0.0
      %1265 = vmatprep.subr.mxu0 0.0
      %1266 = vmatpush1.msra.mxu0 %v453
      %1267 = vmatprep.subr.mxu0 0.0
      %1268 = vmatpush1.msra.mxu0 %v452
      %1269 = vmatprep.subr.mxu0 0.0
      %1270 = vmatpush1.msra.mxu0 %v451
      %1271 = vmatprep.subr.mxu0 0.0
      %1272 = vmatpush1.msra.mxu0 %v450
      %1273 = vmatprep.subr.mxu0 0.0
      %1274 = vmatpush1.msra.mxu0 %v449
      %1275 = vmatprep.subr.mxu0 0.0
      %1276 = vmatpush1.msra.mxu0 %v448
      %1277 = vmatprep.subr.mxu0 0.0
      %1278 = vmatpush1.msra.mxu0 %v447
      %1279 = vmatprep.subr.mxu0 0.0
      %1280 = vmatpush1.msra.mxu0 %v446
      %1281 = vmatprep.subr.mxu0 0.0
      %1282 = vmatpush1.msra.mxu0 %v445
      %1283 = vmatprep.subr.mxu0 0.0
      %1284 = vmatpush2.msra.mxu0 0.0
      %1285 = vmatprep.subr.mxu0 0.0
      %1286 = vmatpush2.msra.mxu0 0.0
      %1287 = vmatprep.subr.mxu0 0.0
      %1288 = vmatpush2.msra.mxu0 0.0
      %1289 = vmatprep.subr.mxu0 0.0
      %1290 = vmatpush2.msra.mxu0 0.0
      %1291 = vmatprep.subr.mxu0 0.0
      %1292 = vmatpush2.msra.mxu0 0.0
      %1293 = vmatprep.subr.mxu0 0.0
      %1294 = vmatpush2.msra.mxu0 0.0
      %1295 = vmatprep.subr.mxu0 0.0
      %1296 = vmatpush2.msra.mxu0 0.0
      %1297 = vmatprep.subr.mxu0 0.0
      %1298 = vmatpush2.msra.mxu0 0.0
      %1299 = vmatprep.subr.mxu0 0.0
      %1300 = vmatpush2.msra.mxu0 0.0
      %1301 = vmatprep.subr.mxu0 0.0
      %1302 = vmatpush2.msra.mxu0 0.0
      %1303 = vmatprep.subr.mxu0 0.0
      %1304 = vmatpush2.msra.mxu0 0.0
      %1305 = vmatprep.subr.mxu0 0.0
      %1306 = vmatpush2.msra.mxu0 0.0
      %1307 = vmatprep.subr.mxu0 0.0
      %1308 = vmatpush2.msra.mxu0 0.0
      %1309 = vmatprep.subr.mxu0 0.0
      %1310 = vmatpush2.msra.mxu0 0.0
      %1311 = vmatprep.subr.mxu0 0.0
      %1312 = vmatpush2.msra.mxu0 0.0
      %1313 = vmatprep.subr.mxu0 0.0
      %1314 = vmatpush2.msra.mxu0 0.0
      %1315 = vmatprep.mubr.f32.mxu0 0.0
      %1316 = vmatmul.mubr.f32.gmra.mxu0 %v1204
      %v1317 = vpop.f32.mrf.mxu0
      %v1318 = vadd.f32 %v1200, %v1317
      %v1319 = vpop.f32.mrf.mxu0
      %1320 = vmatprep.mubr.f32.mxu0 0.0
      %1321 = vmatmul.mubr.f32.gmra.mxu0 %v1207
      %v1322 = vpop.f32.mrf.mxu0
      %v1323 = vadd.f32 %v1200, %v1322
      %v1324 = vpop.f32.mrf.mxu0
      %1325 = vmatprep.mubr.f32.mxu0 0.0
      %1326 = vmatmul.mubr.f32.gmra.mxu0 %v1210
      %v1327 = vpop.f32.mrf.mxu0
      %v1328 = vadd.f32 %v1200, %v1327
      %v1329 = vpop.f32.mrf.mxu0
      %1330 = vmatprep.mubr.f32.mxu0 0.0
      %1331 = vmatmul.mubr.f32.gmra.mxu0 %v1213
      %v1332 = vpop.f32.mrf.mxu0
      %v1333 = vadd.f32 %v1200, %v1332
      %v1334 = vpop.f32.mrf.mxu0
      %1335 = vmatprep.mubr.f32.mxu0 0.0
      %1336 = vmatmul.mubr.f32.gmra.mxu0 %v1216
      %v1337 = vpop.f32.mrf.mxu0
      %v1338 = vadd.f32 %v1200, %v1337
      %v1339 = vpop.f32.mrf.mxu0
      %1340 = vmatprep.mubr.f32.mxu0 0.0
      %1341 = vmatmul.mubr.f32.gmra.mxu0 %v1219
      %v1342 = vpop.f32.mrf.mxu0
      %v1343 = vadd.f32 %v1200, %v1342
      %v1344 = vpop.f32.mrf.mxu0
      %1345 = vmatprep.mubr.f32.mxu0 0.0
      %1346 = vmatmul.mubr.f32.gmra.mxu0 %v1222
      %v1347 = vpop.f32.mrf.mxu0
      %v1348 = vadd.f32 %v1200, %v1347
      %v1349 = vpop.f32.mrf.mxu0
      %1350 = vmatprep.mubr.f32.mxu0 0.0
      %1351 = vmatmul.mubr.f32.gmra.mxu0 %v1225
      %v1352 = vpop.f32.mrf.mxu0
      %v1353 = vadd.f32 %v1200, %v1352
      %v1354 = vpop.f32.mrf.mxu0
      %1355 = vmatprep.mubr.f32.mxu0 0.0
      %1356 = vmatmul.mubr.f32.gmra.mxu0 %v1228
      %v1357 = vpop.f32.mrf.mxu0
      %v1358 = vadd.f32 %v1200, %v1357
      %v1359 = vpop.f32.mrf.mxu0
      %1360 = vmatprep.mubr.f32.mxu0 0.0
      %1361 = vmatmul.mubr.f32.gmra.mxu0 %v1231
      %v1362 = vpop.f32.mrf.mxu0
      %v1363 = vadd.f32 %v1200, %v1362
      %v1364 = vpop.f32.mrf.mxu0
      %1365 = vmatprep.mubr.f32.mxu0 0.0
      %1366 = vmatmul.mubr.f32.gmra.mxu0 %v1234
      %v1367 = vpop.f32.mrf.mxu0
      %v1368 = vadd.f32 %v1200, %v1367
      %v1369 = vpop.f32.mrf.mxu0
      %1370 = vmatprep.mubr.f32.mxu0 0.0
      %1371 = vmatmul.mubr.f32.gmra.mxu0 %v1237
      %v1372 = vpop.f32.mrf.mxu0
      %v1373 = vadd.f32 %v1200, %v1372
      %v1374 = vpop.f32.mrf.mxu0
      %1375 = vmatprep.mubr.f32.mxu0 0.0
      %1376 = vmatmul.mubr.f32.gmra.mxu0 %v1240
      %v1377 = vpop.f32.mrf.mxu0
      %v1378 = vadd.f32 %v1200, %v1377
      %v1379 = vpop.f32.mrf.mxu0
      %1380 = vmatprep.mubr.f32.mxu0 0.0
      %1381 = vmatmul.mubr.f32.gmra.mxu0 %v1243
      %v1382 = vpop.f32.mrf.mxu0
      %v1383 = vadd.f32 %v1200, %v1382
      %v1384 = vpop.f32.mrf.mxu0
      %1385 = vmatprep.mubr.f32.mxu0 0.0
      %1386 = vmatmul.mubr.f32.gmra.mxu0 %v1246
      %v1387 = vpop.f32.mrf.mxu0
      %v1388 = vadd.f32 %v1200, %v1387
      %v1389 = vpop.f32.mrf.mxu0
      %1390 = vmatprep.mubr.f32.mxu0 0.0
      %1391 = vmatmul.mubr.f32.gmra.mxu0 %v1249
      %v1392 = vpop.f32.mrf.mxu0
      %v1393 = vadd.f32 %v1200, %v1392
      %v1394 = vpop.f32.mrf.mxu0
      %1395 = vdwg.mxu0
      %v1396 = vmax.f32 %v1318, 0.0
      %v1397 = vmax.f32 %v1323, 0.0
      %v1398 = vmax.f32 %v1328, 0.0
      %v1399 = vmax.f32 %v1333, 0.0
      %v1400 = vmax.f32 %v1338, 0.0
      %v1401 = vmax.f32 %v1343, 0.0
      %v1402 = vmax.f32 %v1348, 0.0
      %v1403 = vmax.f32 %v1353, 0.0
      %v1404 = vmax.f32 %v1358, 0.0
      %v1405 = vmax.f32 %v1363, 0.0
      %v1406 = vmax.f32 %v1368, 0.0
      %v1407 = vmax.f32 %v1373, 0.0
      %v1408 = vmax.f32 %v1378, 0.0
      %v1409 = vmax.f32 %v1383, 0.0
      %v1410 = vmax.f32 %v1388, 0.0
      %v1411 = vmax.f32 %v1393, 0.0
      %1412 = vst.msk [vmem:[%s391] sm:$0xff] %vm1060, %v1396
      %1413 = vst.msk [vmem:[%s391 + $0x8] sm:$0xff] %vm1060, %v1397
      %1414 = vst.msk [vmem:[%s391 + $0x10] sm:$0xff] %vm1060, %v1398
      %1415 = vst.msk [vmem:[%s391 + $0x18] sm:$0xff] %vm1060, %v1399
      %1416 = vst.msk [vmem:[%s391 + $0x20] sm:$0xff] %vm1060, %v1400
      %1417 = vst.msk [vmem:[%s391 + $0x28] sm:$0xff] %vm1060, %v1401
      %1418 = vst.msk [vmem:[%s391 + $0x30] sm:$0xff] %vm1060, %v1402
      %1419 = vst.msk [vmem:[%s391 + $0x38] sm:$0xff] %vm1060, %v1403
      %1420 = vst.msk [vmem:[%s391 + $0x40] sm:$0xff] %vm1060, %v1404
      %1421 = vst.msk [vmem:[%s391 + $0x48] sm:$0xff] %vm1060, %v1405
      %1422 = vst.msk [vmem:[%s391 + $0x50] sm:$0xff] %vm1060, %v1406
      %1423 = vst.msk [vmem:[%s391 + $0x58] sm:$0xff] %vm1060, %v1407
      %1424 = vst.msk [vmem:[%s391 + $0x60] sm:$0xff] %vm1060, %v1408
      %1425 = vst.msk [vmem:[%s391 + $0x68] sm:$0xff] %vm1060, %v1409
      %1426 = vst.msk [vmem:[%s391 + $0x70] sm:$0xff] %vm1060, %v1410
      %1427 = vst.msk [vmem:[%s391 + $0x78] sm:$0xff] %vm1060, %v1411
      %s1428 = smul.u32 8, %s21
      %p1429 = scmp.lt.s32.totalorder %s20, 1
      %s1430 = scalar_select %p1429, %s20, 1
      %p1431 = scmp.lt.s32.totalorder %s1428, 15
      %s1432 = scalar_select %p1431, %s1428, 15
      %s1433 = smul.addr %s1432, 2
      %s1434 = smul.addr %s1430, 32
      %s1435 = sadd.s32 %s1433, %s1434
      %s1436 = smul.addr %s1435, 8
      %s1437 = scalar_lea.vmem %s5, %s1436
      // Predicated region
      $region41: #{up_block_forward.5} parent=39 // pred_check
        %p1438 = pneg %p190
      $region42: #{up_block_forward.5} parent=39 // pred_check_branch
        %1440 = sbr.rel (%p1438) target = $region44
      $region43: #{up_block_forward.5} parent=39 // pred_region
        %s1441 = smul.u32 8, %s21
      $region44: #{up_block_forward.5} parent=39 // pred_fallthru
        _
    $region40: #{up_block_forward.5} parent=5 // pred_fallthru
      _
    %p1442 = scmp.le.s32.totalorder 2, %s11
    // Predicated region
    $region45: #{up_block_forward.5} parent=5 // pred_check
      %p1443 = pneg %p1442
    $region46: #{up_block_forward.5} parent=5 // pred_check_branch
      %1445 = sbr.rel (%p1443) target = $region48
    $region47: #{up_block_forward.5} parent=5 // pred_region
      %s1446 = ssub.s32 %s11, 2
      // Predicated region
      $region49: #{up_block_forward.5} parent=47 // pred_check
        %p1447 = pneg %p196
      $region50: #{up_block_forward.5} parent=47 // pred_check_branch
        %1449 = sbr.rel (%p1447) target = $region52
      $region51: #{up_block_forward.5} parent=47 // pred_region
        %s1450 = smul.u32 8, %s23
        %p1451 = scmp.lt.s32.totalorder %s22, 1
        %s1452 = scalar_select %p1451, %s22, 1
        %p1453 = scmp.lt.s32.totalorder %s1450, 15
        %s1454 = scalar_select %p1453, %s1450, 15
        %s1455 = smul.addr %s1454, 2
        %s1456 = smul.addr %s1452, 32
        %s1457 = sadd.s32 %s1455, %s1456
        %s1458 = smul.addr %s1457, 8
        %s1459 = scalar_lea.vmem %s5, %s1458
      $region52: #{up_block_forward.5} parent=47 // pred_fallthru
        _
    $region48: #{up_block_forward.5} parent=5 // pred_fallthru
      _
  $region6: #{up_block_forward.5} parent=0 // loop_footer
    %s15 = sadd.s32 1, %s11
  $region7: #{up_block_forward.5} parent=0 // loop_footer_branch
    %10 = sbr.rel target = $region3
  $region8: #{up_block_forward.5} parent=0 // loop_exit
    _

// kernel: up_block_forward.4
$region0: #{up_block_forward.4}
  #allocation0 [shape = 'u32[]', space=smem, size = 0x4, offset = 0x4, fixed_abs, tag = 'smem constant byte address 0x4 - core index']
  #allocation1 [shape = 'u32[144,128]{1,0:T(1,128)}', space=vmem, size = 0x12000, scoped, tag = 'internal scratch']
  %s0 = inlined_call_operand.vmem [shape: f32[2,16,16,8], index: 0, kind: input, shape index: {}, may-alias: {0,1,2}]
  %s1 = inlined_call_operand.vmem [shape: f32[2,16,16,8], index: 1, kind: input, shape index: {}, may-alias: {0,1,2}]
  %s2 = inlined_call_operand.vmem [shape: f32[2,16,16,8], index: 2, kind: input, shape index: {}, may-alias: {0,1,2}]
  %s3 = inlined_call_operand.vmem [shape: f32[2,16,16,8], index: 3, kind: input, shape index: {}, may-alias: {3,4,5}]
  %s4 = inlined_call_operand.vmem [shape: f32[2,16,16,8], index: 4, kind: input, shape index: {}, may-alias: {3,4,5}]
  %s5 = inlined_call_operand.vmem [shape: f32[2,16,16,8], index: 5, kind: input, shape index: {}, may-alias: {3,4,5}]
  %s6 = inlined_call_operand.vmem [shape: f32[144,8], index: 6, kind: input, shape index: {}]
  %s7 = inlined_call_operand.vmem [shape: f32[1,8], index: 7, kind: input, shape index: {}]
  %s8 = inlined_call_operand.vmem [shape: f32[2,16,16,8], index: 8, kind: output, shape index: {}]
  %s9 = sld [smem:[#allocation0]]
  $region65: #{up_block_forward.4} parent=0
    _
  %s11 = ssub.s32 1, %s9
  %s12 = scalar_select 0, %s11, %s9
  loop: start=0, step=1, limit=6
  $region2: #{up_block_forward.4} parent=0 // loop_pre_header
    _
  $region3: #{up_block_forward.4} parent=0 // loop_header
    %s14 = sphi 0, %s18
    %p15 = scmp.ge.s32.totalorder %s14, 6
    %s21 = sphi 0, %s33
    %s22 = sphi 0, %s29
    %s23 = sphi 0, %s21
    %s24 = sphi 0, %s22
    %s25 = sphi 0, %s23
    %s26 = sphi 0, %s24
    %s38 = sphi 0, %s40
    %s41 = sphi 0, %s38
    %s42 = sphi 0, %s41
    %s58 = sphi 0, %s42
    %s74 = sphi 0, %s76
    %s77 = sphi 0, %s74
    %s78 = sphi 0, %s77
    %s94 = sphi 0, %s78
    %s110 = sphi 0, %s112
    %s113 = sphi 0, %s110
    %s114 = sphi 0, %s113
    %s130 = sphi 0, %s114
    %s138 = sphi 0, %s140
    %s141 = sphi 0, %s138
    %s142 = sphi 0, %s141
    %s158 = sphi 0, %s142
    %s174 = sphi 0, %s176
    %s177 = sphi 0, %s174
    %s178 = sphi 0, %s177
    %s194 = sphi 0, %s178
    %s210 = sphi 0, %s212
    %s213 = sphi 0, %s210
    %s214 = sphi 0, %s213
    %s230 = sphi 0, %s214
    %s234 = sphi 0, %s234
    %s236 = sphi 0, %s234
    %s237 = sphi 0, %s236
    %s251 = sphi 0, %s237
    %s255 = sphi 0, %s255
    %s257 = sphi 0, %s255
    %s258 = sphi 0, %s257
    %s272 = sphi 0, %s258
    %s280 = sphi 0, %s282
    %s283 = sphi 0, %s280
    %s284 = sphi 0, %s283
    %s300 = sphi 0, %s284
  $region4: #{up_block_forward.4} parent=0 // loop_header_branch
    %17 = sbr.rel (%p15) target = $region8
  $region5: #{up_block_forward.4} parent=0 // loop_body
    %s19 = ssub.s32 %s14, 1
    %s20 = ssub.s32 %s14, 2
    %s27 = sadd.s32 1, %s22
    %p28 = scmp.ge.s32.totalorder %s27, 2
    %s29 = scalar_select %p28, 0, %s27
    %s30 = sadd.s32 1, %s21
    %s31 = scalar_select %p28, %s30, %s21
    %p32 = scmp.ge.s32.totalorder %s31, 2
    %s33 = scalar_select %p32, 0, %s31
    %s34 = ssub.s32 %s21, %s33
    %s35 = ssub.s32 %s22, %s29
    %s36 = sor.u32 %s34, %s35
    %p37 = scmp.eq.s32.totalorder %s36, 0
    %s39 = sadd.s32 %s38, 1
    %s40 = scalar_select %p37, %s38, %s39
    %p43 = pneg %p37
    %p44 = scmp.eq.s32.totalorder %s14, 3
    %p45 = por %p43, %p44
    %p46 = scmp.ne.s32.totalorder %s38, %s41
    %p47 = scmp.eq.s32.totalorder %s14, 0
    %p48 = por %p46, %p47
    %p49 = scmp.ne.s32.totalorder %s38, %s41
    %p50 = scmp.eq.s32.totalorder %s19, 3
    %p51 = por %p49, %p50
    %p52 = scmp.ne.s32.totalorder %s41, %s42
    %p53 = scmp.eq.s32.totalorder %s19, 0
    %p54 = por %p52, %p53
    %p55 = scmp.ne.s32.totalorder %s41, %s42
    %p56 = scmp.eq.s32.totalorder %s20, 3
    %p57 = por %p55, %p56
    %p59 = scmp.ne.s32.totalorder %s42, %s58
    %p60 = scmp.eq.s32.totalorder %s20, 0
    %p61 = por %p59, %p60
    %s62 = smul.u32 %s22, 8
    %s63 = ssub.s32 %s62, 1
    %p64 = scmp.gt.s32.totalorder %s63, 0
    %s65 = scalar_select %p64, %s63, 0
    %s66 = smul.u32 %s29, 8
    %s67 = ssub.s32 %s66, 1
    %p68 = scmp.gt.s32.totalorder %s67, 0
    %s69 = scalar_select %p68, %s67, 0
    %s70 = ssub.s32 %s21, %s33
    %s71 = ssub.s32 %s65, %s69
    %s72 = sor.u32 %s70, %s71
    %p73 = scmp.eq.s32.totalorder %s72, 0
    %s75 = sadd.s32 %s74, 1
    %s76 = scalar_select %p73, %s74, %s75
    %p79 = pneg %p73
    %p80 = scmp.eq.s32.totalorder %s14, 3
    %p81 = por %p79, %p80
    %p82 = scmp.ne.s32.totalorder %s74, %s77
    %p83 = scmp.eq.s32.totalorder %s14, 0
    %p84 = por %p82, %p83
    %p85 = scmp.ne.s32.totalorder %s74, %s77
    %p86 = scmp.eq.s32.totalorder %s19, 3
    %p87 = por %p85, %p86
    %p88 = scmp.ne.s32.totalorder %s77, %s78
    %p89 = scmp.eq.s32.totalorder %s19, 0
    %p90 = por %p88, %p89
    %p91 = scmp.ne.s32.totalorder %s77, %s78
    %p92 = scmp.eq.s32.totalorder %s20, 3
    %p93 = por %p91, %p92
    %p95 = scmp.ne.s32.totalorder %s78, %s94
    %p96 = scmp.eq.s32.totalorder %s20, 0
    %p97 = por %p95, %p96
    %s98 = sadd.s32 %s22, 1
    %s99 = smul.u32 %s98, 8
    %p100 = scmp.lt.s32.totalorder %s99, 15
    %s101 = scalar_select %p100, %s99, 15
    %s102 = sadd.s32 %s29, 1
    %s103 = smul.u32 %s102, 8
    %p104 = scmp.lt.s32.totalorder %s103, 15
    %s105 = scalar_select %p104, %s103, 15
    %s106 = ssub.s32 %s21, %s33
    %s107 = ssub.s32 %s101, %s105
    %s108 = sor.u32 %s106, %s107
    %p109 = scmp.eq.s32.totalorder %s108, 0
    %s111 = sadd.s32 %s110, 1
    %s112 = scalar_select %p109, %s110, %s111
    %p115 = pneg %p109
    %p116 = scmp.eq.s32.totalorder %s14, 3
    %p117 = por %p115, %p116
    %p118 = scmp.ne.s32.totalorder %s110, %s113
    %p119 = scmp.eq.s32.totalorder %s14, 0
    %p120 = por %p118, %p119
    %p121 = scmp.ne.s32.totalorder %s110, %s113
    %p122 = scmp.eq.s32.totalorder %s19, 3
    %p123 = por %p121, %p122
    %p124 = scmp.ne.s32.totalorder %s113, %s114
    %p125 = scmp.eq.s32.totalorder %s19, 0
    %p126 = por %p124, %p125
    %p127 = scmp.ne.s32.totalorder %s113, %s114
    %p128 = scmp.eq.s32.totalorder %s20, 3
    %p129 = por %p127, %p128
    %p131 = scmp.ne.s32.totalorder %s114, %s130
    %p132 = scmp.eq.s32.totalorder %s20, 0
    %p133 = por %p131, %p132
    %s134 = ssub.s32 %s21, %s33
    %s135 = ssub.s32 %s22, %s29
    %s136 = sor.u32 %s134, %s135
    %p137 = scmp.eq.s32.totalorder %s136, 0
    %s139 = sadd.s32 %s138, 1
    %s140 = scalar_select %p137, %s138, %s139
    %p143 = pneg %p137
    %p144 = scmp.eq.s32.totalorder %s14, 3
    %p145 = por %p143, %p144
    %p146 = scmp.ne.s32.totalorder %s138, %s141
    %p147 = scmp.eq.s32.totalorder %s14, 0
    %p148 = por %p146, %p147
    %p149 = scmp.ne.s32.totalorder %s138, %s141
    %p150 = scmp.eq.s32.totalorder %s19, 3
    %p151 = por %p149, %p150
    %p152 = scmp.ne.s32.totalorder %s141, %s142
    %p153 = scmp.eq.s32.totalorder %s19, 0
    %p154 = por %p152, %p153
    %p155 = scmp.ne.s32.totalorder %s141, %s142
    %p156 = scmp.eq.s32.totalorder %s20, 3
    %p157 = por %p155, %p156
    %p159 = scmp.ne.s32.totalorder %s142, %s158
    %p160 = scmp.eq.s32.totalorder %s20, 0
    %p161 = por %p159, %p160
    %s162 = smul.u32 %s22, 8
    %s163 = ssub.s32 %s162, 1
    %p164 = scmp.gt.s32.totalorder %s163, 0
    %s165 = scalar_select %p164, %s163, 0
    %s166 = smul.u32 %s29, 8
    %s167 = ssub.s32 %s166, 1
    %p168 = scmp.gt.s32.totalorder %s167, 0
    %s169 = scalar_select %p168, %s167, 0
    %s170 = ssub.s32 %s21, %s33
    %s171 = ssub.s32 %s165, %s169
    %s172 = sor.u32 %s170, %s171
    %p173 = scmp.eq.s32.totalorder %s172, 0
    %s175 = sadd.s32 %s174, 1
    %s176 = scalar_select %p173, %s174, %s175
    %p179 = pneg %p173
    %p180 = scmp.eq.s32.totalorder %s14, 3
    %p181 = por %p179, %p180
    %p182 = scmp.ne.s32.totalorder %s174, %s177
    %p183 = scmp.eq.s32.totalorder %s14, 0
    %p184 = por %p182, %p183
    %p185 = scmp.ne.s32.totalorder %s174, %s177
    %p186 = scmp.eq.s32.totalorder %s19, 3
    %p187 = por %p185, %p186
    %p188 = scmp.ne.s32.totalorder %s177, %s178
    %p189 = scmp.eq.s32.totalorder %s19, 0
    %p190 = por %p188, %p189
    %p191 = scmp.ne.s32.totalorder %s177, %s178
    %p192 = scmp.eq.s32.totalorder %s20, 3
    %p193 = por %p191, %p192
    %p195 = scmp.ne.s32.totalorder %s178, %s194
    %p196 = scmp.eq.s32.totalorder %s20, 0
    %p197 = por %p195, %p196
    %s198 = sadd.s32 %s22, 1
    %s199 = smul.u32 %s198, 8
    %p200 = scmp.lt.s32.totalorder %s199, 15
    %s201 = scalar_select %p200, %s199, 15
    %s202 = sadd.s32 %s29, 1
    %s203 = smul.u32 %s202, 8
    %p204 = scmp.lt.s32.totalorder %s203, 15
    %s205 = scalar_select %p204, %s203, 15
    %s206 = ssub.s32 %s21, %s33
    %s207 = ssub.s32 %s201, %s205
    %s208 = sor.u32 %s206, %s207
    %p209 = scmp.eq.s32.totalorder %s208, 0
    %s211 = sadd.s32 %s210, 1
    %s212 = scalar_select %p209, %s210, %s211
    %p215 = pneg %p209
    %p216 = scmp.eq.s32.totalorder %s14, 3
    %p217 = por %p215, %p216
    %p218 = scmp.ne.s32.totalorder %s210, %s213
    %p219 = scmp.eq.s32.totalorder %s14, 0
    %p220 = por %p218, %p219
    %p221 = scmp.ne.s32.totalorder %s210, %s213
    %p222 = scmp.eq.s32.totalorder %s19, 3
    %p223 = por %p221, %p222
    %p224 = scmp.ne.s32.totalorder %s213, %s214
    %p225 = scmp.eq.s32.totalorder %s19, 0
    %p226 = por %p224, %p225
    %p227 = scmp.ne.s32.totalorder %s213, %s214
    %p228 = scmp.eq.s32.totalorder %s20, 3
    %p229 = por %p227, %p228
    %p231 = scmp.ne.s32.totalorder %s214, %s230
    %p232 = scmp.eq.s32.totalorder %s20, 0
    %p233 = por %p231, %p232
    %s235 = sadd.s32 %s234, 1
    %p238 = scmp.eq.s32.totalorder %s14, 3
    %p239 = scmp.ne.s32.totalorder %s234, %s236
    %p240 = scmp.eq.s32.totalorder %s14, 0
    %p241 = por %p239, %p240
    %p242 = scmp.ne.s32.totalorder %s234, %s236
    %p243 = scmp.eq.s32.totalorder %s19, 3
    %p244 = por %p242, %p243
    %p245 = scmp.ne.s32.totalorder %s236, %s237
    %p246 = scmp.eq.s32.totalorder %s19, 0
    %p247 = por %p245, %p246
    %p248 = scmp.ne.s32.totalorder %s236, %s237
    %p249 = scmp.eq.s32.totalorder %s20, 3
    %p250 = por %p248, %p249
    %p252 = scmp.ne.s32.totalorder %s237, %s251
    %p253 = scmp.eq.s32.totalorder %s20, 0
    %p254 = por %p252, %p253
    %s256 = sadd.s32 %s255, 1
    %p259 = scmp.eq.s32.totalorder %s14, 3
    %p260 = scmp.ne.s32.totalorder %s255, %s257
    %p261 = scmp.eq.s32.totalorder %s14, 0
    %p262 = por %p260, %p261
    %p263 = scmp.ne.s32.totalorder %s255, %s257
    %p264 = scmp.eq.s32.totalorder %s19, 3
    %p265 = por %p263, %p264
    %p266 = scmp.ne.s32.totalorder %s257, %s258
    %p267 = scmp.eq.s32.totalorder %s19, 0
    %p268 = por %p266, %p267
    %p269 = scmp.ne.s32.totalorder %s257, %s258
    %p270 = scmp.eq.s32.totalorder %s20, 3
    %p271 = por %p269, %p270
    %p273 = scmp.ne.s32.totalorder %s258, %s272
    %p274 = scmp.eq.s32.totalorder %s20, 0
    %p275 = por %p273, %p274
    %s276 = ssub.s32 %s21, %s33
    %s277 = ssub.s32 %s22, %s29
    %s278 = sor.u32 %s276, %s277
    %p279 = scmp.eq.s32.totalorder %s278, 0
    %s281 = sadd.s32 %s280, 1
    %s282 = scalar_select %p279, %s280, %s281
    %p285 = pneg %p279
    %p286 = scmp.eq.s32.totalorder %s14, 3
    %p287 = por %p285, %p286
    %p288 = scmp.ne.s32.totalorder %s280, %s283
    %p289 = scmp.eq.s32.totalorder %s14, 0
    %p290 = por %p288, %p289
    %p291 = scmp.ne.s32.totalorder %s280, %s283
    %p292 = scmp.eq.s32.totalorder %s19, 3
    %p293 = por %p291, %p292
    %p294 = scmp.ne.s32.totalorder %s283, %s284
    %p295 = scmp.eq.s32.totalorder %s19, 0
    %p296 = por %p294, %p295
    %p297 = scmp.ne.s32.totalorder %s283, %s284
    %p298 = scmp.eq.s32.totalorder %s20, 3
    %p299 = por %p297, %p298
    %p301 = scmp.ne.s32.totalorder %s284, %s300
    %p302 = scmp.eq.s32.totalorder %s20, 0
    %p303 = por %p301, %p302
    %p304 = scmp.le.s32.totalorder 1, %s14
    %p305 = scmp.lt.s32.totalorder %s14, 5
    %p306 = pnand %p304, %p305
    %p307 = pneg %p306
    // Predicated region
    $region9: #{up_block_forward.4} parent=5 // pred_check
      _
    $region10: #{up_block_forward.4} parent=5 // pred_check_branch
      %309 = sbr.rel (%p306) target = $region12
    $region11: #{up_block_forward.4} parent=5 // pred_region
      %s310 = ssub.s32 %s14, 1
      // Predicated region
      $region13: #{up_block_forward.4} parent=11 // pred_check
        %p311 = pneg %p247
      $region14: #{up_block_forward.4} parent=11 // pred_check_branch
        %313 = sbr.rel (%p311) target = $region16
      $region15: #{up_block_forward.4} parent=11 // pred_region
        _
      $region16: #{up_block_forward.4} parent=11 // pred_fallthru
        _
      // Predicated region
      $region17: #{up_block_forward.4} parent=11 // pred_check
        %p314 = pneg %p268
      $region18: #{up_block_forward.4} parent=11 // pred_check_branch
        %316 = sbr.rel (%p314) target = $region20
      $region19: #{up_block_forward.4} parent=11 // pred_region
        _
      $region20: #{up_block_forward.4} parent=11 // pred_fallthru
        _
    $region12: #{up_block_forward.4} parent=5 // pred_fallthru
      _
    %p317 = scmp.lt.s32.totalorder %s14, 4
    // Predicated region
    $region21: #{up_block_forward.4} parent=5 // pred_check
      %p318 = pneg %p317
    $region22: #{up_block_forward.4} parent=5 // pred_check_branch
      %320 = sbr.rel (%p318) target = $region24
    $region23: #{up_block_forward.4} parent=5 // pred_region
      // Predicated region
      $region25: #{up_block_forward.4} parent=23 // pred_check
        %p321 = pneg %p48
      $region26: #{up_block_forward.4} parent=23 // pred_check_branch
        %323 = sbr.rel (%p321) target = $region28
      $region27: #{up_block_forward.4} parent=23 // pred_region
        %s324 = smul.u32 8, %s22
        %p325 = scmp.lt.s32.totalorder %s21, 1
        %s326 = scalar_select %p325, %s21, 1
        %p327 = scmp.lt.s32.totalorder %s324, 15
        %s328 = scalar_select %p327, %s324, 15
        %s329 = smul.addr %s328, 2
        %s330 = smul.addr %s326, 32
        %s331 = sadd.s32 %s329, %s330
        %s332 = smul.addr %s331, 8
        %s333 = scalar_lea.vmem %s0, %s332
        %s334 = smul.u32 8, %s22
      $region28: #{up_block_forward.4} parent=23 // pred_fallthru
        _
      // Predicated region
      $region29: #{up_block_forward.4} parent=23 // pred_check
        %p335 = pneg %p84
      $region30: #{up_block_forward.4} parent=23 // pred_check_branch
        %337 = sbr.rel (%p335) target = $region32
      $region31: #{up_block_forward.4} parent=23 // pred_region
        %s338 = smul.u32 %s22, 8
        %s339 = ssub.s32 %s338, 1
        %p340 = scmp.gt.s32.totalorder %s339, 0
        %s341 = scalar_select %p340, %s339, 0
        %p342 = scmp.lt.s32.totalorder %s21, 1
        %s343 = scalar_select %p342, %s21, 1
        %p344 = scmp.lt.s32.totalorder %s341, 15
        %s345 = scalar_select %p344, %s341, 15
        %s346 = smul.addr %s345, 2
        %s347 = smul.addr %s343, 32
        %s348 = sadd.s32 %s346, %s347
        %s349 = smul.addr %s348, 8
        %s350 = scalar_lea.vmem %s1, %s349
        %s351 = smul.u32 %s22, 8
        %s352 = ssub.s32 %s351, 1
        %p353 = scmp.gt.s32.totalorder %s352, 0
        %s354 = scalar_select %p353, %s352, 0
      $region32: #{up_block_forward.4} parent=23 // pred_fallthru
        _
      // Predicated region
      $region33: #{up_block_forward.4} parent=23 // pred_check
        %p355 = pneg %p120
      $region34: #{up_block_forward.4} parent=23 // pred_check_branch
        %357 = sbr.rel (%p355) target = $region36
      $region35: #{up_block_forward.4} parent=23 // pred_region
        %s358 = sadd.s32 %s22, 1
        %s359 = smul.u32 %s358, 8
        %p360 = scmp.lt.s32.totalorder %s359, 15
        %s361 = scalar_select %p360, %s359, 15
        %p362 = scmp.lt.s32.totalorder %s21, 1
        %s363 = scalar_select %p362, %s21, 1
        %p364 = scmp.lt.s32.totalorder %s361, 15
        %s365 = scalar_select %p364, %s361, 15
        %s366 = smul.addr %s365, 2
        %s367 = smul.addr %s363, 32
        %s368 = sadd.s32 %s366, %s367
        %s369 = smul.addr %s368, 8
        %s370 = scalar_lea.vmem %s2, %s369
        %s371 = sadd.s32 %s22, 1
        %s372 = smul.u32 %s371, 8
        %p373 = scmp.lt.s32.totalorder %s372, 15
        %s374 = scalar_select %p373, %s372, 15
      $region36: #{up_block_forward.4} parent=23 // pred_fallthru
        _
      // Predicated region
      $region37: #{up_block_forward.4} parent=23 // pred_check
        %p375 = pneg %p148
      $region38: #{up_block_forward.4} parent=23 // pred_check_branch
        %377 = sbr.rel (%p375) target = $region40
      $region39: #{up_block_forward.4} parent=23 // pred_region
        %s378 = smul.u32 8, %s22
        %p379 = scmp.lt.s32.totalorder %s21, 1
        %s380 = scalar_select %p379, %s21, 1
        %p381 = scmp.lt.s32.totalorder %s378, 15
        %s382 = scalar_select %p381, %s378, 15
        %s383 = smul.addr %s382, 2
        %s384 = smul.addr %s380, 32
        %s385 = sadd.s32 %s383, %s384
        %s386 = smul.addr %s385, 8
        %s387 = scalar_lea.vmem %s3, %s386
        %s388 = smul.u32 8, %s22
      $region40: #{up_block_forward.4} parent=23 // pred_fallthru
        _
      // Predicated region
      $region41: #{up_block_forward.4} parent=23 // pred_check
        %p389 = pneg %p184
      $region42: #{up_block_forward.4} parent=23 // pred_check_branch
        %391 = sbr.rel (%p389) target = $region44
      $region43: #{up_block_forward.4} parent=23 // pred_region
        %s392 = smul.u32 %s22, 8
        %s393 = ssub.s32 %s392, 1
        %p394 = scmp.gt.s32.totalorder %s393, 0
        %s395 = scalar_select %p394, %s393, 0
        %p396 = scmp.lt.s32.totalorder %s21, 1
        %s397 = scalar_select %p396, %s21, 1
        %p398 = scmp.lt.s32.totalorder %s395, 15
        %s399 = scalar_select %p398, %s395, 15
        %s400 = smul.addr %s399, 2
        %s401 = smul.addr %s397, 32
        %s402 = sadd.s32 %s400, %s401
        %s403 = smul.addr %s402, 8
        %s404 = scalar_lea.vmem %s4, %s403
        %s405 = smul.u32 %s22, 8
        %s406 = ssub.s32 %s405, 1
        %p407 = scmp.gt.s32.totalorder %s406, 0
        %s408 = scalar_select %p407, %s406, 0
      $region44: #{up_block_forward.4} parent=23 // pred_fallthru
        _
      // Predicated region
      $region45: #{up_block_forward.4} parent=23 // pred_check
        %p409 = pneg %p220
      $region46: #{up_block_forward.4} parent=23 // pred_check_branch
        %411 = sbr.rel (%p409) target = $region48
      $region47: #{up_block_forward.4} parent=23 // pred_region
        %s412 = sadd.s32 %s22, 1
        %s413 = smul.u32 %s412, 8
        %p414 = scmp.lt.s32.totalorder %s413, 15
        %s415 = scalar_select %p414, %s413, 15
        %p416 = scmp.lt.s32.totalorder %s21, 1
        %s417 = scalar_select %p416, %s21, 1
        %p418 = scmp.lt.s32.totalorder %s415, 15
        %s419 = scalar_select %p418, %s415, 15
        %s420 = smul.addr %s419, 2
        %s421 = smul.addr %s417, 32
        %s422 = sadd.s32 %s420, %s421
        %s423 = smul.addr %s422, 8
        %s424 = scalar_lea.vmem %s5, %s423
        %s425 = sadd.s32 %s22, 1
        %s426 = smul.u32 %s425, 8
        %p427 = scmp.lt.s32.totalorder %s426, 15
        %s428 = scalar_select %p427, %s426, 15
      $region48: #{up_block_forward.4} parent=23 // pred_fallthru
        _
    $region24: #{up_block_forward.4} parent=5 // pred_fallthru
      _
    %p429 = scmp.le.s32.totalorder 1, %s14
    %p430 = scmp.lt.s32.totalorder %s14, 5
    %p431 = pnand %p429, %p430
    %p432 = pneg %p431
    // Predicated region
    $region49: #{up_block_forward.4} parent=5 // pred_check
      _
    $region50: #{up_block_forward.4} parent=5 // pred_check_branch
      %434 = sbr.rel (%p431) target = $region52
    $region51: #{up_block_forward.4} parent=5 // pred_region
      %s435 = ssub.s32 %s14, 1
      %s436 = smul.u32 8, %s24
      %p437 = scmp.lt.s32.totalorder %s23, 1
      %s438 = scalar_select %p437, %s23, 1
      %p439 = scmp.lt.s32.totalorder %s436, 15
      %s440 = scalar_select %p439, %s436, 15
      %s441 = smul.addr %s440, 2
      %s442 = smul.addr %s438, 32
      %s443 = sadd.s32 %s441, %s442
      %s444 = smul.addr %s443, 8
      %s445 = scalar_lea.vmem %s0, %s444
      %p446 = pneg %p54
      %p447 = pneg %p51
      %s448 = smul.u32 %s24, 8
      %s449 = ssub.s32 %s448, 1
      %p450 = scmp.gt.s32.totalorder %s449, 0
      %s451 = scalar_select %p450, %s449, 0
      %p452 = scmp.lt.s32.totalorder %s23, 1
      %s453 = scalar_select %p452, %s23, 1
      %p454 = scmp.lt.s32.totalorder %s451, 15
      %s455 = scalar_select %p454, %s451, 15
      %s456 = smul.addr %s455, 2
      %s457 = smul.addr %s453, 32
      %s458 = sadd.s32 %s456, %s457
      %s459 = smul.addr %s458, 8
      %s460 = scalar_lea.vmem %s1, %s459
      %p461 = pneg %p90
      %p462 = pneg %p87
      %s463 = sadd.s32 %s24, 1
      %s464 = smul.u32 %s463, 8
      %p465 = scmp.lt.s32.totalorder %s464, 15
      %s466 = scalar_select %p465, %s464, 15
      %p467 = scmp.lt.s32.totalorder %s23, 1
      %s468 = scalar_select %p467, %s23, 1
      %p469 = scmp.lt.s32.totalorder %s466, 15
      %s470 = scalar_select %p469, %s466, 15
      %s471 = smul.addr %s470, 2
      %s472 = smul.addr %s468, 32
      %s473 = sadd.s32 %s471, %s472
      %s474 = smul.addr %s473, 8
      %s475 = scalar_lea.vmem %s2, %s474
      %p476 = pneg %p126
      %p477 = pneg %p123
      %s478 = smul.u32 8, %s24
      %p479 = scmp.lt.s32.totalorder %s23, 1
      %s480 = scalar_select %p479, %s23, 1
      %p481 = scmp.lt.s32.totalorder %s478, 15
      %s482 = scalar_select %p481, %s478, 15
      %s483 = smul.addr %s482, 2
      %s484 = smul.addr %s480, 32
      %s485 = sadd.s32 %s483, %s484
      %s486 = smul.addr %s485, 8
      %s487 = scalar_lea.vmem %s3, %s486
      %p488 = pneg %p154
      %p489 = pneg %p151
      %s490 = smul.u32 %s24, 8
      %s491 = ssub.s32 %s490, 1
      %p492 = scmp.gt.s32.totalorder %s491, 0
      %s493 = scalar_select %p492, %s491, 0
      %p494 = scmp.lt.s32.totalorder %s23, 1
      %s495 = scalar_select %p494, %s23, 1
      %p496 = scmp.lt.s32.totalorder %s493, 15
      %s497 = scalar_select %p496, %s493, 15
      %s498 = smul.addr %s497, 2
      %s499 = smul.addr %s495, 32
      %s500 = sadd.s32 %s498, %s499
      %s501 = smul.addr %s500, 8
      %s502 = scalar_lea.vmem %s4, %s501
      %p503 = pneg %p190
      %p504 = pneg %p187
      %s505 = sadd.s32 %s24, 1
      %s506 = smul.u32 %s505, 8
      %p507 = scmp.lt.s32.totalorder %s506, 15
      %s508 = scalar_select %p507, %s506, 15
      %p509 = scmp.lt.s32.totalorder %s23, 1
      %s510 = scalar_select %p509, %s23, 1
      %p511 = scmp.lt.s32.totalorder %s508, 15
      %s512 = scalar_select %p511, %s508, 15
      %s513 = smul.addr %s512, 2
      %s514 = smul.addr %s510, 32
      %s515 = sadd.s32 %s513, %s514
      %s516 = smul.addr %s515, 8
      %s517 = scalar_lea.vmem %s5, %s516
      %p518 = pneg %p226
      %p519 = pneg %p223
      %p520 = pneg %p247
      %p521 = pneg %p244
      %p522 = pneg %p268
      %p523 = pneg %p265
      %p524 = pneg %p296
      %p525 = pneg %p293
      %s526 = smul.u32 8, %s24
      %p527 = scmp.lt.s32.totalorder %s23, 1
      %s528 = scalar_select %p527, %s23, 1
      %p529 = scmp.lt.s32.totalorder %s526, 15
      %s530 = scalar_select %p529, %s526, 15
      %s531 = smul.addr %s530, 2
      %s532 = smul.addr %s528, 32
      %s533 = sadd.s32 %s531, %s532
      %s534 = smul.addr %s533, 8
      %s535 = scalar_lea.vmem %s8, %s534
      %s536 = smul.u32 8, %s24
      %p537 = scmp.lt.s32.totalorder %s23, 1
      %s538 = scalar_select %p537, %s23, 1
      %p539 = scmp.lt.s32.totalorder %s536, 15
      %s540 = scalar_select %p539, %s536, 15
      %s541 = smul.addr %s540, 2
      %s542 = smul.addr %s538, 32
      %s543 = sadd.s32 %s541, %s542
      %s544 = smul.addr %s543, 8
      %s545 = scalar_lea.vmem %s0, %s544
      %s546 = smul.u32 8, %s24
      %s547 = smul.u32 %s24, 8
      %s548 = ssub.s32 %s547, 1
      %p549 = scmp.gt.s32.totalorder %s548, 0
      %s550 = scalar_select %p549, %s548, 0
      %p551 = scmp.lt.s32.totalorder %s23, 1
      %s552 = scalar_select %p551, %s23, 1
      %p553 = scmp.lt.s32.totalorder %s550, 15
      %s554 = scalar_select %p553, %s550, 15
      %s555 = smul.addr %s554, 2
      %s556 = smul.addr %s552, 32
      %s557 = sadd.s32 %s555, %s556
      %s558 = smul.addr %s557, 8
      %s559 = scalar_lea.vmem %s1, %s558
      %s560 = smul.u32 %s24, 8
      %s561 = ssub.s32 %s560, 1
      %p562 = scmp.gt.s32.totalorder %s561, 0
      %s563 = scalar_select %p562, %s561, 0
      %s564 = sadd.s32 %s24, 1
      %s565 = smul.u32 %s564, 8
      %p566 = scmp.lt.s32.totalorder %s565, 15
      %s567 = scalar_select %p566, %s565, 15
      %p568 = scmp.lt.s32.totalorder %s23, 1
      %s569 = scalar_select %p568, %s23, 1
      %p570 = scmp.lt.s32.totalorder %s567, 15
      %s571 = scalar_select %p570, %s567, 15
      %s572 = smul.addr %s571, 2
      %s573 = smul.addr %s569, 32
      %s574 = sadd.s32 %s572, %s573
      %s575 = smul.addr %s574, 8
      %s576 = scalar_lea.vmem %s2, %s575
      %s577 = sadd.s32 %s24, 1
      %s578 = smul.u32 %s577, 8
      %p579 = scmp.lt.s32.totalorder %s578, 15
      %s580 = scalar_select %p579, %s578, 15
      %s581 = smul.u32 8, %s24
      %p582 = scmp.lt.s32.totalorder %s23, 1
      %s583 = scalar_select %p582, %s23, 1
      %p584 = scmp.lt.s32.totalorder %s581, 15
      %s585 = scalar_select %p584, %s581, 15
      %s586 = smul.addr %s585, 2
      %s587 = smul.addr %s583, 32
      %s588 = sadd.s32 %s586, %s587
      %s589 = smul.addr %s588, 8
      %s590 = scalar_lea.vmem %s3, %s589
      %s591 = smul.u32 8, %s24
      %s592 = smul.u32 %s24, 8
      %s593 = ssub.s32 %s592, 1
      %p594 = scmp.gt.s32.totalorder %s593, 0
      %s595 = scalar_select %p594, %s593, 0
      %p596 = scmp.lt.s32.totalorder %s23, 1
      %s597 = scalar_select %p596, %s23, 1
      %p598 = scmp.lt.s32.totalorder %s595, 15
      %s599 = scalar_select %p598, %s595, 15
      %s600 = smul.addr %s599, 2
      %s601 = smul.addr %s597, 32
      %s602 = sadd.s32 %s600, %s601
      %s603 = smul.addr %s602, 8
      %s604 = scalar_lea.vmem %s4, %s603
      %s605 = smul.u32 %s24, 8
      %s606 = ssub.s32 %s605, 1
      %p607 = scmp.gt.s32.totalorder %s606, 0
      %s608 = scalar_select %p607, %s606, 0
      %s609 = sadd.s32 %s24, 1
      %s610 = smul.u32 %s609, 8
      %p611 = scmp.lt.s32.totalorder %s610, 15
      %s612 = scalar_select %p611, %s610, 15
      %p613 = scmp.lt.s32.totalorder %s23, 1
      %s614 = scalar_select %p613, %s23, 1
      %p615 = scmp.lt.s32.totalorder %s612, 15
      %s616 = scalar_select %p615, %s612, 15
      %s617 = smul.addr %s616, 2
      %s618 = smul.addr %s614, 32
      %s619 = sadd.s32 %s617, %s618
      %s620 = smul.addr %s619, 8
      %s621 = scalar_lea.vmem %s5, %s620
      %s622 = sadd.s32 %s24, 1
      %s623 = smul.u32 %s622, 8
      %p624 = scmp.lt.s32.totalorder %s623, 15
      %s625 = scalar_select %p624, %s623, 15
      %s626 = smul.u32 8, %s24
      %p627 = scmp.lt.s32.totalorder %s23, 1
      %s628 = scalar_select %p627, %s23, 1
      %p629 = scmp.lt.s32.totalorder %s626, 15
      %s630 = scalar_select %p629, %s626, 15
      %s631 = smul.addr %s630, 2
      %s632 = smul.addr %s628, 32
      %s633 = sadd.s32 %s631, %s632
      %s634 = smul.addr %s633, 8
      %s635 = scalar_lea.vmem %s8, %s634
      %s636 = smul.u32 8, %s24
      %v637 = vld [vmem:[%s559] sm:$0xff]
      %v638 = vld [vmem:[%s559 + $0x8] sm:$0xff]
      %v639 = vld [vmem:[%s545] sm:$0xff]
      %v640 = vld [vmem:[%s545 + $0x8] sm:$0xff]
      %v641 = vld [vmem:[%s545 + $0x10] sm:$0xff]
      %v642 = vld [vmem:[%s545 + $0x18] sm:$0xff]
      %v643 = vld [vmem:[%s545 + $0x20] sm:$0xff]
      %v644 = vld [vmem:[%s545 + $0x28] sm:$0xff]
      %v645 = vld [vmem:[%s545 + $0x30] sm:$0xff]
      %v646 = vld [vmem:[%s545 + $0x38] sm:$0xff]
      %v647 = vld [vmem:[%s545 + $0x40] sm:$0xff]
      %v648 = vld [vmem:[%s545 + $0x48] sm:$0xff]
      %v649 = vld [vmem:[%s545 + $0x50] sm:$0xff]
      %v650 = vld [vmem:[%s545 + $0x58] sm:$0xff]
      %v651 = vld [vmem:[%s545 + $0x60] sm:$0xff]
      %v652 = vld [vmem:[%s545 + $0x68] sm:$0xff]
      %v653 = vld [vmem:[%s545 + $0x70] sm:$0xff]
      %v654 = vld [vmem:[%s545 + $0x78] sm:$0xff]
      %v655 = vld [vmem:[%s576] sm:$0xff]
      %v656 = vld [vmem:[%s576 + $0x8] sm:$0xff]
      %v657 = vld [vmem:[%s604] sm:$0xff]
      %v658 = vld [vmem:[%s604 + $0x8] sm:$0xff]
      %v659 = vld [vmem:[%s590] sm:$0xff]
      %v660 = vld [vmem:[%s590 + $0x8] sm:$0xff]
      %v661 = vld [vmem:[%s590 + $0x10] sm:$0xff]
      %v662 = vld [vmem:[%s590 + $0x18] sm:$0xff]
      %v663 = vld [vmem:[%s590 + $0x20] sm:$0xff]
      %v664 = vld [vmem:[%s590 + $0x28] sm:$0xff]
      %v665 = vld [vmem:[%s590 + $0x30] sm:$0xff]
      %v666 = vld [vmem:[%s590 + $0x38] sm:$0xff]
      %v667 = vld [vmem:[%s590 + $0x40] sm:$0xff]
      %v668 = vld [vmem:[%s590 + $0x48] sm:$0xff]
      %v669 = vld [vmem:[%s590 + $0x50] sm:$0xff]
      %v670 = vld [vmem:[%s590 + $0x58] sm:$0xff]
      %v671 = vld [vmem:[%s590 + $0x60] sm:$0xff]
      %v672 = vld [vmem:[%s590 + $0x68] sm:$0xff]
      %v673 = vld [vmem:[%s590 + $0x70] sm:$0xff]
      %v674 = vld [vmem:[%s590 + $0x78] sm:$0xff]
      %v675 = vld [vmem:[%s621] sm:$0xff]
      %v676 = vld [vmem:[%s621 + $0x8] sm:$0xff]
      %697 = vrot.lane.b32.xlu0 %v657, 8
      %v698 = vpop.permute.xlu0 %697
      %699 = vrot.lane.b32.xlu0 %v658, 8
      %v700 = vpop.permute.xlu0 %699
      %701 = vrot.lane.b32.xlu0 %v659, 8
      %v702 = vpop.permute.xlu0 %701
      %703 = vrot.lane.b32.xlu0 %v660, 8
      %v704 = vpop.permute.xlu0 %703
      %705 = vrot.lane.b32.xlu0 %v661, 8
      %v706 = vpop.permute.xlu0 %705
      %707 = vrot.lane.b32.xlu0 %v662, 8
      %v708 = vpop.permute.xlu0 %707
      %709 = vrot.lane.b32.xlu0 %v663, 8
      %v710 = vpop.permute.xlu0 %709
      %711 = vrot.lane.b32.xlu0 %v664, 8
      %v712 = vpop.permute.xlu0 %711
      %713 = vrot.lane.b32.xlu0 %v665, 8
      %v714 = vpop.permute.xlu0 %713
      %715 = vrot.lane.b32.xlu0 %v666, 8
      %v716 = vpop.permute.xlu0 %715
      %717 = vrot.lane.b32.xlu0 %v667, 8
      %v718 = vpop.permute.xlu0 %717
      %719 = vrot.lane.b32.xlu0 %v668, 8
      %v720 = vpop.permute.xlu0 %719
      %721 = vrot.lane.b32.xlu0 %v669, 8
      %v722 = vpop.permute.xlu0 %721
      %723 = vrot.lane.b32.xlu0 %v670, 8
      %v724 = vpop.permute.xlu0 %723
      %725 = vrot.lane.b32.xlu0 %v671, 8
      %v726 = vpop.permute.xlu0 %725
      %727 = vrot.lane.b32.xlu0 %v672, 8
      %v728 = vpop.permute.xlu0 %727
      %729 = vrot.lane.b32.xlu0 %v673, 8
      %v730 = vpop.permute.xlu0 %729
      %731 = vrot.lane.b32.xlu0 %v674, 8
      %v732 = vpop.permute.xlu0 %731
      %733 = vrot.lane.b32.xlu0 %v675, 8
      %v734 = vpop.permute.xlu0 %733
      %735 = vrot.lane.b32.xlu0 %v676, 8
      %v736 = vpop.permute.xlu0 %735
      %vm757 = vcmask 64512
      %v758 = vsel %vm757, %v637, %v698
      %v759 = vsel %vm757, %v638, %v700
      %v760 = vsel %vm757, %v639, %v702
      %v761 = vsel %vm757, %v640, %v704
      %v762 = vsel %vm757, %v641, %v706
      %v763 = vsel %vm757, %v642, %v708
      %v764 = vsel %vm757, %v643, %v710
      %v765 = vsel %vm757, %v644, %v712
      %v766 = vsel %vm757, %v645, %v714
      %v767 = vsel %vm757, %v646, %v716
      %v768 = vsel %vm757, %v647, %v718
      %v769 = vsel %vm757, %v648, %v720
      %v770 = vsel %vm757, %v649, %v722
      %v771 = vsel %vm757, %v650, %v724
      %v772 = vsel %vm757, %v651, %v726
      %v773 = vsel %vm757, %v652, %v728
      %v774 = vsel %vm757, %v653, %v730
      %v775 = vsel %vm757, %v654, %v732
      %v776 = vsel %vm757, %v655, %v734
      %v777 = vsel %vm757, %v656, %v736
      %p778 = scmp.gt.s32.totalorder %s24, 0
      %s779 = scalar_select %p778, 1, 0
      %v780 = vstv %s779
      %vm781 = vcmp.eq.s32.totalorder %v780, 1
      %p782 = scmp.lt.s32.totalorder %s24, 1
      %s783 = scalar_select %p782, 1, 0
      %v784 = vstv %s783
      %vm785 = vcmp.eq.s32.totalorder %v784, 1
      %v786 = vsel %vm781, 1, 0
      %v787 = vsel %vm785, 1, 0
      %vm788 = vcmp.eq.s32.totalorder %v786, 1
      %vm789 = vcmp.eq.s32.totalorder %v787, 1
      %v790 = vsel %vm788, %v758, 0.0
      %v791 = vsel %vm788, %v759, 0.0
      %v792 = vsel 1, %v760, 0.0
      %v793 = vsel 1, %v761, 0.0
      %v794 = vsel 1, %v762, 0.0
      %v795 = vsel 1, %v763, 0.0
      %v796 = vsel 1, %v764, 0.0
      %v797 = vsel 1, %v765, 0.0
      %v798 = vsel 1, %v766, 0.0
      %v799 = vsel 1, %v767, 0.0
      %v800 = vsel 1, %v768, 0.0
      %v801 = vsel 1, %v769, 0.0
      %v802 = vsel 1, %v770, 0.0
      %v803 = vsel 1, %v771, 0.0
      %v804 = vsel 1, %v772, 0.0
      %v805 = vsel 1, %v773, 0.0
      %v806 = vsel 1, %v774, 0.0
      %v807 = vsel 1, %v775, 0.0
      %v808 = vsel %vm789, %v776, 0.0
      %v809 = vsel %vm789, %v777, 0.0
      %v810 = vld [vmem:[%s6] sm:$0xff]
      %v811 = vld [vmem:[%s6 + $0x8] sm:$0xff]
      %v812 = vld [vmem:[%s6 + $0x10] sm:$0xff]
      %v813 = vld [vmem:[%s6 + $0x18] sm:$0xff]
      %v814 = vld [vmem:[%s6 + $0x20] sm:$0xff]
      %v815 = vld [vmem:[%s6 + $0x28] sm:$0xff]
      %v816 = vld [vmem:[%s6 + $0x30] sm:$0xff]
      %v817 = vld [vmem:[%s6 + $0x38] sm:$0xff]
      %v818 = vld [vmem:[%s6 + $0x40] sm:$0xff]
      %v819 = vld [vmem:[%s6 + $0x48] sm:$0xff]
      %v820 = vld [vmem:[%s6 + $0x50] sm:$0xff]
      %v821 = vld [vmem:[%s6 + $0x58] sm:$0xff]
      %v822 = vld [vmem:[%s6 + $0x60] sm:$0xff]
      %v823 = vld [vmem:[%s6 + $0x68] sm:$0xff]
      %v824 = vld [vmem:[%s6 + $0x70] sm:$0xff]
      %v825 = vld [vmem:[%s6 + $0x78] sm:$0xff]
      %v826 = vld [vmem:[%s6 + $0x80] sm:$0xff]
      %v827 = vld [vmem:[%s6 + $0x88] sm:$0xff]
      %v828 = vld [vmem:[%s7] sm:$0x1]
      %vm849 = vcmask 1040384
      %v850 = vrot.slane %v790, 7
      %v851 = vrot.slane %v791, 7
      %v852 = vsel %vm849, %v850, %v851
      %v853 = vrot.slane %v792, 7
      %v854 = vrot.slane %v793, 7
      %v855 = vsel %vm849, %v853, %v854
      %v856 = vrot.slane %v794, 7
      %v857 = vrot.slane %v795, 7
      %v858 = vsel %vm849, %v856, %v857
      %v859 = vrot.slane %v796, 7
      %v860 = vrot.slane %v797, 7
      %v861 = vsel %vm849, %v859, %v860
      %v862 = vrot.slane %v798, 7
      %v863 = vrot.slane %v799, 7
      %v864 = vsel %vm849, %v862, %v863
      %v865 = vrot.slane %v800, 7
      %v866 = vrot.slane %v801, 7
      %v867 = vsel %vm849, %v865, %v866
      %v868 = vrot.slane %v802, 7
      %v869 = vrot.slane %v803, 7
      %v870 = vsel %vm849, %v868, %v869
      %v871 = vrot.slane %v804, 7
      %v872 = vrot.slane %v805, 7
      %v873 = vsel %vm849, %v871, %v872
      %v874 = vrot.slane %v806, 7
      %v875 = vrot.slane %v807, 7
      %v876 = vsel %vm849, %v874, %v875
      %v877 = vrot.slane %v808, 7
      %v878 = vrot.slane %v809, 7
      %v879 = vsel %vm849, %v877, %v878
      %v908 = vsel %vm849, 0.0, %v850
      %v909 = vsel %vm849, 0.0, %v853
      %v910 = vsel %vm849, 0.0, %v856
      %v911 = vsel %vm849, 0.0, %v859
      %v912 = vsel %vm849, 0.0, %v862
      %v913 = vsel %vm849, 0.0, %v865
      %v914 = vsel %vm849, 0.0, %v868
      %v915 = vsel %vm849, 0.0, %v871
      %v916 = vsel %vm849, 0.0, %v874
      %v917 = vsel %vm849, 0.0, %v877
      %v918 = vsel %vm849, %v851, 0.0
      %v919 = vsel %vm849, %v854, 0.0
      %v920 = vsel %vm849, %v857, 0.0
      %v921 = vsel %vm849, %v860, 0.0
      %v922 = vsel %vm849, %v863, 0.0
      %v923 = vsel %vm849, %v866, 0.0
      %v924 = vsel %vm849, %v869, 0.0
      %v925 = vsel %vm849, %v872, 0.0
      %v926 = vsel %vm849, %v875, 0.0
      %v927 = vsel %vm849, %v878, 0.0
      %vm944 = vcmask 1046528
      %v945 = vrot.slane %v908, 1
      %v946 = vrot.slane %v852, 1
      %v947 = vsel %vm944, %v945, %v946
      %v948 = vrot.slane %v918, 1
      %v949 = vsel %vm944, %v946, %v948
      %v950 = vrot.slane %v909, 1
      %v951 = vrot.slane %v855, 1
      %v952 = vsel %vm944, %v950, %v951
      %v953 = vrot.slane %v919, 1
      %v954 = vsel %vm944, %v951, %v953
      %v955 = vrot.slane %v910, 1
      %v956 = vrot.slane %v858, 1
      %v957 = vsel %vm944, %v955, %v956
      %v958 = vrot.slane %v920, 1
      %v959 = vsel %vm944, %v956, %v958
      %v960 = vrot.slane %v911, 1
      %v961 = vrot.slane %v861, 1
      %v962 = vsel %vm944, %v960, %v961
      %v963 = vrot.slane %v921, 1
      %v964 = vsel %vm944, %v961, %v963
      %v965 = vrot.slane %v912, 1
      %v966 = vrot.slane %v864, 1
      %v967 = vsel %vm944, %v965, %v966
      %v968 = vrot.slane %v922, 1
      %v969 = vsel %vm944, %v966, %v968
      %v970 = vrot.slane %v913, 1
      %v971 = vrot.slane %v867, 1
      %v972 = vsel %vm944, %v970, %v971
      %v973 = vrot.slane %v923, 1
      %v974 = vsel %vm944, %v971, %v973
      %v975 = vrot.slane %v914, 1
      %v976 = vrot.slane %v870, 1
      %v977 = vsel %vm944, %v975, %v976
      %v978 = vrot.slane %v924, 1
      %v979 = vsel %vm944, %v976, %v978
      %v980 = vrot.slane %v915, 1
      %v981 = vrot.slane %v873, 1
      %v982 = vsel %vm944, %v980, %v981
      %v983 = vrot.slane %v925, 1
      %v984 = vsel %vm944, %v981, %v983
      %985 = vrot.lane.b32.xlu0 %v947, 16
      %v986 = vpop.permute.xlu0 %985
      %987 = vrot.lane.b32.xlu0 %v949, 16
      %v988 = vpop.permute.xlu0 %987
      %989 = vrot.lane.b32.xlu0 %v952, 16
      %v990 = vpop.permute.xlu0 %989
      %991 = vrot.lane.b32.xlu0 %v954, 16
      %v992 = vpop.permute.xlu0 %991
      %993 = vrot.lane.b32.xlu0 %v957, 16
      %v994 = vpop.permute.xlu0 %993
      %995 = vrot.lane.b32.xlu0 %v959, 16
      %v996 = vpop.permute.xlu0 %995
      %997 = vrot.lane.b32.xlu0 %v962, 16
      %v998 = vpop.permute.xlu0 %997
      %999 = vrot.lane.b32.xlu0 %v964, 16
      %v1000 = vpop.permute.xlu0 %999
      %1001 = vrot.lane.b32.xlu0 %v967, 16
      %v1002 = vpop.permute.xlu0 %1001
      %1003 = vrot.lane.b32.xlu0 %v969, 16
      %v1004 = vpop.permute.xlu0 %1003
      %1005 = vrot.lane.b32.xlu0 %v972, 16
      %v1006 = vpop.permute.xlu0 %1005
      %1007 = vrot.lane.b32.xlu0 %v974, 16
      %v1008 = vpop.permute.xlu0 %1007
      %1009 = vrot.lane.b32.xlu0 %v977, 16
      %v1010 = vpop.permute.xlu0 %1009
      %1011 = vrot.lane.b32.xlu0 %v979, 16
      %v1012 = vpop.permute.xlu0 %1011
      %1013 = vrot.lane.b32.xlu0 %v982, 16
      %v1014 = vpop.permute.xlu0 %1013
      %1015 = vrot.lane.b32.xlu0 %v984, 16
      %v1016 = vpop.permute.xlu0 %1015
      %vm1033 = vcmask 1045504
      %v1034 = vrot.slane %v908, 2
      %v1035 = vrot.slane %v852, 2
      %v1036 = vsel %vm1033, %v1034, %v1035
      %v1037 = vrot.slane %v918, 2
      %v1038 = vsel %vm1033, %v1035, %v1037
      %v1039 = vrot.slane %v909, 2
      %v1040 = vrot.slane %v855, 2
      %v1041 = vsel %vm1033, %v1039, %v1040
      %v1042 = vrot.slane %v919, 2
      %v1043 = vsel %vm1033, %v1040, %v1042
      %v1044 = vrot.slane %v910, 2
      %v1045 = vrot.slane %v858, 2
      %v1046 = vsel %vm1033, %v1044, %v1045
      %v1047 = vrot.slane %v920, 2
      %v1048 = vsel %vm1033, %v1045, %v1047
      %v1049 = vrot.slane %v911, 2
      %v1050 = vrot.slane %v861, 2
      %v1051 = vsel %vm1033, %v1049, %v1050
      %v1052 = vrot.slane %v921, 2
      %v1053 = vsel %vm1033, %v1050, %v1052
      %v1054 = vrot.slane %v912, 2
      %v1055 = vrot.slane %v864, 2
      %v1056 = vsel %vm1033, %v1054, %v1055
      %v1057 = vrot.slane %v922, 2
      %v1058 = vsel %vm1033, %v1055, %v1057
      %v1059 = vrot.slane %v913, 2
      %v1060 = vrot.slane %v867, 2
      %v1061 = vsel %vm1033, %v1059, %v1060
      %v1062 = vrot.slane %v923, 2
      %v1063 = vsel %vm1033, %v1060, %v1062
      %v1064 = vrot.slane %v914, 2
      %v1065 = vrot.slane %v870, 2
      %v1066 = vsel %vm1033, %v1064, %v1065
      %v1067 = vrot.slane %v924, 2
      %v1068 = vsel %vm1033, %v1065, %v1067
      %v1069 = vrot.slane %v915, 2
      %v1070 = vrot.slane %v873, 2
      %v1071 = vsel %vm1033, %v1069, %v1070
      %v1072 = vrot.slane %v925, 2
      %v1073 = vsel %vm1033, %v1070, %v1072
      %1074 = vrot.lane.b32.xlu0 %v1036, 32
      %v1075 = vpop.permute.xlu0 %1074
      %1076 = vrot.lane.b32.xlu0 %v1038, 32
      %v1077 = vpop.permute.xlu0 %1076
      %1078 = vrot.lane.b32.xlu0 %v1041, 32
      %v1079 = vpop.permute.xlu0 %1078
      %1080 = vrot.lane.b32.xlu0 %v1043, 32
      %v1081 = vpop.permute.xlu0 %1080
      %1082 = vrot.lane.b32.xlu0 %v1046, 32
      %v1083 = vpop.permute.xlu0 %1082
      %1084 = vrot.lane.b32.xlu0 %v1048, 32
      %v1085 = vpop.permute.xlu0 %1084
      %1086 = vrot.lane.b32.xlu0 %v1051, 32
      %v1087 = vpop.permute.xlu0 %1086
      %1088 = vrot.lane.b32.xlu0 %v1053, 32
      %v1089 = vpop.permute.xlu0 %1088
      %1090 = vrot.lane.b32.xlu0 %v1056, 32
      %v1091 = vpop.permute.xlu0 %1090
      %1092 = vrot.lane.b32.xlu0 %v1058, 32
      %v1093 = vpop.permute.xlu0 %1092
      %1094 = vrot.lane.b32.xlu0 %v1061, 32
      %v1095 = vpop.permute.xlu0 %1094
      %1096 = vrot.lane.b32.xlu0 %v1063, 32
      %v1097 = vpop.permute.xlu0 %1096
      %1098 = vrot.lane.b32.xlu0 %v1066, 32
      %v1099 = vpop.permute.xlu0 %1098
      %1100 = vrot.lane.b32.xlu0 %v1068, 32
      %v1101 = vpop.permute.xlu0 %1100
      %1102 = vrot.lane.b32.xlu0 %v1071, 32
      %v1103 = vpop.permute.xlu0 %1102
      %1104 = vrot.lane.b32.xlu0 %v1073, 32
      %v1105 = vpop.permute.xlu0 %1104
      %1123 = vrot.lane.b32.xlu0 %v909, 48
      %v1124 = vpop.permute.xlu0 %1123
      %1125 = vrot.lane.b32.xlu0 %v855, 48
      %v1126 = vpop.permute.xlu0 %1125
      %1127 = vrot.lane.b32.xlu0 %v910, 48
      %v1128 = vpop.permute.xlu0 %1127
      %1129 = vrot.lane.b32.xlu0 %v858, 48
      %v1130 = vpop.permute.xlu0 %1129
      %1131 = vrot.lane.b32.xlu0 %v911, 48
      %v1132 = vpop.permute.xlu0 %1131
      %1133 = vrot.lane.b32.xlu0 %v861, 48
      %v1134 = vpop.permute.xlu0 %1133
      %1135 = vrot.lane.b32.xlu0 %v912, 48
      %v1136 = vpop.permute.xlu0 %1135
      %1137 = vrot.lane.b32.xlu0 %v864, 48
      %v1138 = vpop.permute.xlu0 %1137
      %1139 = vrot.lane.b32.xlu0 %v913, 48
      %v1140 = vpop.permute.xlu0 %1139
      %1141 = vrot.lane.b32.xlu0 %v867, 48
      %v1142 = vpop.permute.xlu0 %1141
      %1143 = vrot.lane.b32.xlu0 %v914, 48
      %v1144 = vpop.permute.xlu0 %1143
      %1145 = vrot.lane.b32.xlu0 %v870, 48
      %v1146 = vpop.permute.xlu0 %1145
      %1147 = vrot.lane.b32.xlu0 %v915, 48
      %v1148 = vpop.permute.xlu0 %1147
      %1149 = vrot.lane.b32.xlu0 %v873, 48
      %v1150 = vpop.permute.xlu0 %1149
      %1151 = vrot.lane.b32.xlu0 %v916, 48
      %v1152 = vpop.permute.xlu0 %1151
      %1153 = vrot.lane.b32.xlu0 %v876, 48
      %v1154 = vpop.permute.xlu0 %1153
      %v1172 = vrot.slane %v916, 1
      %v1173 = vrot.slane %v876, 1
      %v1174 = vsel %vm944, %v1172, %v1173
      %v1175 = vrot.slane %v926, 1
      %v1176 = vsel %vm944, %v1173, %v1175
      %1177 = vrot.lane.b32.xlu0 %v952, 64
      %v1178 = vpop.permute.xlu0 %1177
      %1179 = vrot.lane.b32.xlu0 %v954, 64
      %v1180 = vpop.permute.xlu0 %1179
      %1181 = vrot.lane.b32.xlu0 %v957, 64
      %v1182 = vpop.permute.xlu0 %1181
      %1183 = vrot.lane.b32.xlu0 %v959, 64
      %v1184 = vpop.permute.xlu0 %1183
      %1185 = vrot.lane.b32.xlu0 %v962, 64
      %v1186 = vpop.permute.xlu0 %1185
      %1187 = vrot.lane.b32.xlu0 %v964, 64
      %v1188 = vpop.permute.xlu0 %1187
      %1189 = vrot.lane.b32.xlu0 %v967, 64
      %v1190 = vpop.permute.xlu0 %1189
      %1191 = vrot.lane.b32.xlu0 %v969, 64
      %v1192 = vpop.permute.xlu0 %1191
      %1193 = vrot.lane.b32.xlu0 %v972, 64
      %v1194 = vpop.permute.xlu0 %1193
      %1195 = vrot.lane.b32.xlu0 %v974, 64
      %v1196 = vpop.permute.xlu0 %1195
      %1197 = vrot.lane.b32.xlu0 %v977, 64
      %v1198 = vpop.permute.xlu0 %1197
      %1199 = vrot.lane.b32.xlu0 %v979, 64
      %v1200 = vpop.permute.xlu0 %1199
      %1201 = vrot.lane.b32.xlu0 %v982, 64
      %v1202 = vpop.permute.xlu0 %1201
      %1203 = vrot.lane.b32.xlu0 %v984, 64
      %v1204 = vpop.permute.xlu0 %1203
      %1205 = vrot.lane.b32.xlu0 %v1174, 64
      %v1206 = vpop.permute.xlu0 %1205
      %1207 = vrot.lane.b32.xlu0 %v1176, 64
      %v1208 = vpop.permute.xlu0 %1207
      %v1225 = vrot.slane %v916, 2
      %v1226 = vrot.slane %v876, 2
      %v1227 = vsel %vm1033, %v1225, %v1226
      %v1228 = vrot.slane %v926, 2
      %v1229 = vsel %vm1033, %v1226, %v1228
      %1230 = vrot.lane.b32.xlu0 %v1041, 80
      %v1231 = vpop.permute.xlu0 %1230
      %1232 = vrot.lane.b32.xlu0 %v1043, 80
      %v1233 = vpop.permute.xlu0 %1232
      %1234 = vrot.lane.b32.xlu0 %v1046, 80
      %v1235 = vpop.permute.xlu0 %1234
      %1236 = vrot.lane.b32.xlu0 %v1048, 80
      %v1237 = vpop.permute.xlu0 %1236
      %1238 = vrot.lane.b32.xlu0 %v1051, 80
      %v1239 = vpop.permute.xlu0 %1238
      %1240 = vrot.lane.b32.xlu0 %v1053, 80
      %v1241 = vpop.permute.xlu0 %1240
      %1242 = vrot.lane.b32.xlu0 %v1056, 80
      %v1243 = vpop.permute.xlu0 %1242
      %1244 = vrot.lane.b32.xlu0 %v1058, 80
      %v1245 = vpop.permute.xlu0 %1244
      %1246 = vrot.lane.b32.xlu0 %v1061, 80
      %v1247 = vpop.permute.xlu0 %1246
      %1248 = vrot.lane.b32.xlu0 %v1063, 80
      %v1249 = vpop.permute.xlu0 %1248
      %1250 = vrot.lane.b32.xlu0 %v1066, 80
      %v1251 = vpop.permute.xlu0 %1250
      %1252 = vrot.lane.b32.xlu0 %v1068, 80
      %v1253 = vpop.permute.xlu0 %1252
      %1254 = vrot.lane.b32.xlu0 %v1071, 80
      %v1255 = vpop.permute.xlu0 %1254
      %1256 = vrot.lane.b32.xlu0 %v1073, 80
      %v1257 = vpop.permute.xlu0 %1256
      %1258 = vrot.lane.b32.xlu0 %v1227, 80
      %v1259 = vpop.permute.xlu0 %1258
      %1260 = vrot.lane.b32.xlu0 %v1229, 80
      %v1261 = vpop.permute.xlu0 %1260
      %1279 = vrot.lane.b32.xlu0 %v910, 96
      %v1280 = vpop.permute.xlu0 %1279
      %1281 = vrot.lane.b32.xlu0 %v858, 96
      %v1282 = vpop.permute.xlu0 %1281
      %1283 = vrot.lane.b32.xlu0 %v911, 96
      %v1284 = vpop.permute.xlu0 %1283
      %1285 = vrot.lane.b32.xlu0 %v861, 96
      %v1286 = vpop.permute.xlu0 %1285
      %1287 = vrot.lane.b32.xlu0 %v912, 96
      %v1288 = vpop.permute.xlu0 %1287
      %1289 = vrot.lane.b32.xlu0 %v864, 96
      %v1290 = vpop.permute.xlu0 %1289
      %1291 = vrot.lane.b32.xlu0 %v913, 96
      %v1292 = vpop.permute.xlu0 %1291
      %1293 = vrot.lane.b32.xlu0 %v867, 96
      %v1294 = vpop.permute.xlu0 %1293
      %1295 = vrot.lane.b32.xlu0 %v914, 96
      %v1296 = vpop.permute.xlu0 %1295
      %1297 = vrot.lane.b32.xlu0 %v870, 96
      %v1298 = vpop.permute.xlu0 %1297
      %1299 = vrot.lane.b32.xlu0 %v915, 96
      %v1300 = vpop.permute.xlu0 %1299
      %1301 = vrot.lane.b32.xlu0 %v873, 96
      %v1302 = vpop.permute.xlu0 %1301
      %1303 = vrot.lane.b32.xlu0 %v916, 96
      %v1304 = vpop.permute.xlu0 %1303
      %1305 = vrot.lane.b32.xlu0 %v876, 96
      %v1306 = vpop.permute.xlu0 %1305
      %1307 = vrot.lane.b32.xlu0 %v917, 96
      %v1308 = vpop.permute.xlu0 %1307
      %1309 = vrot.lane.b32.xlu0 %v879, 96
      %v1310 = vpop.permute.xlu0 %1309
      %v1328 = vrot.slane %v917, 1
      %v1329 = vrot.slane %v879, 1
      %v1330 = vsel %vm944, %v1328, %v1329
      %v1331 = vrot.slane %v927, 1
      %v1332 = vsel %vm944, %v1329, %v1331
      %1333 = vrot.lane.b32.xlu0 %v957, 112
      %v1334 = vpop.permute.xlu0 %1333
      %1335 = vrot.lane.b32.xlu0 %v959, 112
      %v1336 = vpop.permute.xlu0 %1335
      %1337 = vrot.lane.b32.xlu0 %v962, 112
      %v1338 = vpop.permute.xlu0 %1337
      %1339 = vrot.lane.b32.xlu0 %v964, 112
      %v1340 = vpop.permute.xlu0 %1339
      %1341 = vrot.lane.b32.xlu0 %v967, 112
      %v1342 = vpop.permute.xlu0 %1341
      %1343 = vrot.lane.b32.xlu0 %v969, 112
      %v1344 = vpop.permute.xlu0 %1343
      %1345 = vrot.lane.b32.xlu0 %v972, 112
      %v1346 = vpop.permute.xlu0 %1345
      %1347 = vrot.lane.b32.xlu0 %v974, 112
      %v1348 = vpop.permute.xlu0 %1347
      %1349 = vrot.lane.b32.xlu0 %v977, 112
      %v1350 = vpop.permute.xlu0 %1349
      %1351 = vrot.lane.b32.xlu0 %v979, 112
      %v1352 = vpop.permute.xlu0 %1351
      %1353 = vrot.lane.b32.xlu0 %v982, 112
      %v1354 = vpop.permute.xlu0 %1353
      %1355 = vrot.lane.b32.xlu0 %v984, 112
      %v1356 = vpop.permute.xlu0 %1355
      %1357 = vrot.lane.b32.xlu0 %v1174, 112
      %v1358 = vpop.permute.xlu0 %1357
      %1359 = vrot.lane.b32.xlu0 %v1176, 112
      %v1360 = vpop.permute.xlu0 %1359
      %1361 = vrot.lane.b32.xlu0 %v1330, 112
      %v1362 = vpop.permute.xlu0 %1361
      %1363 = vrot.lane.b32.xlu0 %v1332, 112
      %v1364 = vpop.permute.xlu0 %1363
      %v1381 = vrot.slane %v917, 2
      %v1382 = vrot.slane %v879, 2
      %v1383 = vsel %vm1033, %v1381, %v1382
      %v1384 = vrot.slane %v927, 2
      %v1385 = vsel %vm1033, %v1382, %v1384
      %vm1386 = vcmask 130048
      %v1387 = vsel %vm1386, %v908, %v986
      %v1388 = vsel %vm1386, %v852, %v988
      %v1389 = vsel %vm1386, %v909, %v990
      %v1390 = vsel %vm1386, %v855, %v992
      %v1391 = vsel %vm1386, %v910, %v994
      %v1392 = vsel %vm1386, %v858, %v996
      %v1393 = vsel %vm1386, %v911, %v998
      %v1394 = vsel %vm1386, %v861, %v1000
      %v1395 = vsel %vm1386, %v912, %v1002
      %v1396 = vsel %vm1386, %v864, %v1004
      %v1397 = vsel %vm1386, %v913, %v1006
      %v1398 = vsel %vm1386, %v867, %v1008
      %v1399 = vsel %vm1386, %v914, %v1010
      %v1400 = vsel %vm1386, %v870, %v1012
      %v1401 = vsel %vm1386, %v915, %v1014
      %v1402 = vsel %vm1386, %v873, %v1016
      %vm1403 = vcmask 261120
      %v1404 = vsel %vm1403, %v1387, %v1075
      %v1405 = vsel %vm1403, %v1388, %v1077
      %v1406 = vsel %vm1403, %v1389, %v1079
      %v1407 = vsel %vm1403, %v1390, %v1081
      %v1408 = vsel %vm1403, %v1391, %v1083
      %v1409 = vsel %vm1403, %v1392, %v1085
      %v1410 = vsel %vm1403, %v1393, %v1087
      %v1411 = vsel %vm1403, %v1394, %v1089
      %v1412 = vsel %vm1403, %v1395, %v1091
      %v1413 = vsel %vm1403, %v1396, %v1093
      %v1414 = vsel %vm1403, %v1397, %v1095
      %v1415 = vsel %vm1403, %v1398, %v1097
      %v1416 = vsel %vm1403, %v1399, %v1099
      %v1417 = vsel %vm1403, %v1400, %v1101
      %v1418 = vsel %vm1403, %v1401, %v1103
      %v1419 = vsel %vm1403, %v1402, %v1105
      %vm1420 = vcmask 392192
      %v1421 = vsel %vm1420, %v1404, %v1124
      %v1422 = vsel %vm1420, %v1405, %v1126
      %v1423 = vsel %vm1420, %v1406, %v1128
      %v1424 = vsel %vm1420, %v1407, %v1130
      %v1425 = vsel %vm1420, %v1408, %v1132
      %v1426 = vsel %vm1420, %v1409, %v1134
      %v1427 = vsel %vm1420, %v1410, %v1136
      %v1428 = vsel %vm1420, %v1411, %v1138
      %v1429 = vsel %vm1420, %v1412, %v1140
      %v1430 = vsel %vm1420, %v1413, %v1142
      %v1431 = vsel %vm1420, %v1414, %v1144
      %v1432 = vsel %vm1420, %v1415, %v1146
      %v1433 = vsel %vm1420, %v1416, %v1148
      %v1434 = vsel %vm1420, %v1417, %v1150
      %v1435 = vsel %vm1420, %v1418, %v1152
      %v1436 = vsel %vm1420, %v1419, %v1154
      %vm1437 = vcmask 523264
      %v1438 = vsel %vm1437, %v1421, %v1178
      %v1439 = vsel %vm1437, %v1422, %v1180
      %v1440 = vsel %vm1437, %v1423, %v1182
      %v1441 = vsel %vm1437, %v1424, %v1184
      %v1442 = vsel %vm1437, %v1425, %v1186
      %v1443 = vsel %vm1437, %v1426, %v1188
      %v1444 = vsel %vm1437, %v1427, %v1190
      %v1445 = vsel %vm1437, %v1428, %v1192
      %v1446 = vsel %vm1437, %v1429, %v1194
      %v1447 = vsel %vm1437, %v1430, %v1196
      %v1448 = vsel %vm1437, %v1431, %v1198
      %v1449 = vsel %vm1437, %v1432, %v1200
      %v1450 = vsel %vm1437, %v1433, %v1202
      %v1451 = vsel %vm1437, %v1434, %v1204
      %v1452 = vsel %vm1437, %v1435, %v1206
      %v1453 = vsel %vm1437, %v1436, %v1208
      %vm1454 = vcmask 654336
      %v1455 = vsel %vm1454, %v1438, %v1231
      %v1456 = vsel %vm1454, %v1439, %v1233
      %v1457 = vsel %vm1454, %v1440, %v1235
      %v1458 = vsel %vm1454, %v1441, %v1237
      %v1459 = vsel %vm1454, %v1442, %v1239
      %v1460 = vsel %vm1454, %v1443, %v1241
      %v1461 = vsel %vm1454, %v1444, %v1243
      %v1462 = vsel %vm1454, %v1445, %v1245
      %v1463 = vsel %vm1454, %v1446, %v1247
      %v1464 = vsel %vm1454, %v1447, %v1249
      %v1465 = vsel %vm1454, %v1448, %v1251
      %v1466 = vsel %vm1454, %v1449, %v1253
      %v1467 = vsel %vm1454, %v1450, %v1255
      %v1468 = vsel %vm1454, %v1451, %v1257
      %v1469 = vsel %vm1454, %v1452, %v1259
      %v1470 = vsel %vm1454, %v1453, %v1261
      %vm1471 = vcmask 785408
      %v1472 = vsel %vm1471, %v1455, %v1280
      %v1473 = vsel %vm1471, %v1456, %v1282
      %v1474 = vsel %vm1471, %v1457, %v1284
      %v1475 = vsel %vm1471, %v1458, %v1286
      %v1476 = vsel %vm1471, %v1459, %v1288
      %v1477 = vsel %vm1471, %v1460, %v1290
      %v1478 = vsel %vm1471, %v1461, %v1292
      %v1479 = vsel %vm1471, %v1462, %v1294
      %v1480 = vsel %vm1471, %v1463, %v1296
      %v1481 = vsel %vm1471, %v1464, %v1298
      %v1482 = vsel %vm1471, %v1465, %v1300
      %v1483 = vsel %vm1471, %v1466, %v1302
      %v1484 = vsel %vm1471, %v1467, %v1304
      %v1485 = vsel %vm1471, %v1468, %v1306
      %v1486 = vsel %vm1471, %v1469, %v1308
      %v1487 = vsel %vm1471, %v1470, %v1310
      %vm1488 = vcmask 916480
      %v1489 = vsel %vm1488, %v1472, %v1334
      %v1490 = vsel %vm1488, %v1473, %v1336
      %v1491 = vsel %vm1488, %v1474, %v1338
      %v1492 = vsel %vm1488, %v1475, %v1340
      %v1493 = vsel %vm1488, %v1476, %v1342
      %v1494 = vsel %vm1488, %v1477, %v1344
      %v1495 = vsel %vm1488, %v1478, %v1346
      %v1496 = vsel %vm1488, %v1479, %v1348
      %v1497 = vsel %vm1488, %v1480, %v1350
      %v1498 = vsel %vm1488, %v1481, %v1352
      %v1499 = vsel %vm1488, %v1482, %v1354
      %v1500 = vsel %vm1488, %v1483, %v1356
      %v1501 = vsel %vm1488, %v1484, %v1358
      %v1502 = vsel %vm1488, %v1485, %v1360
      %v1503 = vsel %vm1488, %v1486, %v1362
      %v1504 = vsel %vm1488, %v1487, %v1364
      %v1506 = vlaneseq
      %v1507 = vshrl.u32 %v1506, 7
      %v1508 = vsub.s32 0, %v1507
      %v1509 = vrot.slane %v828, %v1508
      %v1511 = vsel %vm1386, %v1046, 0
      %v1513 = vsel %vm1386, %v1048, 0
      %v1515 = vsel %vm1386, %v1051, 0
      %v1517 = vsel %vm1386, %v1053, 0
      %v1519 = vsel %vm1386, %v1056, 0
      %v1521 = vsel %vm1386, %v1058, 0
      %v1523 = vsel %vm1386, %v1061, 0
      %v1525 = vsel %vm1386, %v1063, 0
      %v1527 = vsel %vm1386, %v1066, 0
      %v1529 = vsel %vm1386, %v1068, 0
      %v1531 = vsel %vm1386, %v1071, 0
      %v1533 = vsel %vm1386, %v1073, 0
      %v1535 = vsel %vm1386, %v1227, 0
      %v1537 = vsel %vm1386, %v1229, 0
      %v1539 = vsel %vm1386, %v1383, 0
      %v1541 = vsel %vm1386, %v1385, 0
      %1543 = vmatprep.subr.mxu0 0.0
      %1544 = vmatpush1.msra.mxu0 %v825
      %1545 = vmatprep.subr.mxu0 0.0
      %1546 = vmatpush1.msra.mxu0 %v824
      %1547 = vmatprep.subr.mxu0 0.0
      %1548 = vmatpush1.msra.mxu0 %v823
      %1549 = vmatprep.subr.mxu0 0.0
      %1550 = vmatpush1.msra.mxu0 %v822
      %1551 = vmatprep.subr.mxu0 0.0
      %1552 = vmatpush1.msra.mxu0 %v821
      %1553 = vmatprep.subr.mxu0 0.0
      %1554 = vmatpush1.msra.mxu0 %v820
      %1555 = vmatprep.subr.mxu0 0.0
      %1556 = vmatpush1.msra.mxu0 %v819
      %1557 = vmatprep.subr.mxu0 0.0
      %1558 = vmatpush1.msra.mxu0 %v818
      %1559 = vmatprep.subr.mxu0 0.0
      %1560 = vmatpush1.msra.mxu0 %v817
      %1561 = vmatprep.subr.mxu0 0.0
      %1562 = vmatpush1.msra.mxu0 %v816
      %1563 = vmatprep.subr.mxu0 0.0
      %1564 = vmatpush1.msra.mxu0 %v815
      %1565 = vmatprep.subr.mxu0 0.0
      %1566 = vmatpush1.msra.mxu0 %v814
      %1567 = vmatprep.subr.mxu0 0.0
      %1568 = vmatpush1.msra.mxu0 %v813
      %1569 = vmatprep.subr.mxu0 0.0
      %1570 = vmatpush1.msra.mxu0 %v812
      %1571 = vmatprep.subr.mxu0 0.0
      %1572 = vmatpush1.msra.mxu0 %v811
      %1573 = vmatprep.subr.mxu0 0.0
      %1574 = vmatpush1.msra.mxu0 %v810
      %1575 = vmatprep.subr.mxu0 0.0
      %1576 = vmatpush2.msra.mxu0 0.0
      %1577 = vmatprep.subr.mxu0 0.0
      %1578 = vmatpush2.msra.mxu0 0.0
      %1579 = vmatprep.subr.mxu0 0.0
      %1580 = vmatpush2.msra.mxu0 0.0
      %1581 = vmatprep.subr.mxu0 0.0
      %1582 = vmatpush2.msra.mxu0 0.0
      %1583 = vmatprep.subr.mxu0 0.0
      %1584 = vmatpush2.msra.mxu0 0.0
      %1585 = vmatprep.subr.mxu0 0.0
      %1586 = vmatpush2.msra.mxu0 0.0
      %1587 = vmatprep.subr.mxu0 0.0
      %1588 = vmatpush2.msra.mxu0 0.0
      %1589 = vmatprep.subr.mxu0 0.0
      %1590 = vmatpush2.msra.mxu0 0.0
      %1591 = vmatprep.subr.mxu0 0.0
      %1592 = vmatpush2.msra.mxu0 0.0
      %1593 = vmatprep.subr.mxu0 0.0
      %1594 = vmatpush2.msra.mxu0 0.0
      %1595 = vmatprep.subr.mxu0 0.0
      %1596 = vmatpush2.msra.mxu0 0.0
      %1597 = vmatprep.subr.mxu0 0.0
      %1598 = vmatpush2.msra.mxu0 0.0
      %1599 = vmatprep.subr.mxu0 0.0
      %1600 = vmatpush2.msra.mxu0 0.0
      %1601 = vmatprep.subr.mxu0 0.0
      %1602 = vmatpush2.msra.mxu0 0.0
      %1603 = vmatprep.subr.mxu0 0.0
      %1604 = vmatpush2.msra.mxu0 %v827
      %1605 = vmatprep.subr.mxu0 0.0
      %1606 = vmatpush2.msra.mxu0 %v826
      %1607 = vmatprep.mubr.f32.mxu0 %v1511
      %1608 = vmatmul.mubr.f32.gmra.mxu0 %v1489
      %v1609 = vpop.f32.mrf.mxu0
      %v1610 = vadd.f32 %v1509, %v1609
      %v1611 = vpop.f32.mrf.mxu0
      %1612 = vmatprep.mubr.f32.mxu0 %v1513
      %1613 = vmatmul.mubr.f32.gmra.mxu0 %v1490
      %v1614 = vpop.f32.mrf.mxu0
      %v1615 = vadd.f32 %v1509, %v1614
      %v1616 = vpop.f32.mrf.mxu0
      %1617 = vmatprep.mubr.f32.mxu0 %v1515
      %1618 = vmatmul.mubr.f32.gmra.mxu0 %v1491
      %v1619 = vpop.f32.mrf.mxu0
      %v1620 = vadd.f32 %v1509, %v1619
      %v1621 = vpop.f32.mrf.mxu0
      %1622 = vmatprep.mubr.f32.mxu0 %v1517
      %1623 = vmatmul.mubr.f32.gmra.mxu0 %v1492
      %v1624 = vpop.f32.mrf.mxu0
      %v1625 = vadd.f32 %v1509, %v1624
      %v1626 = vpop.f32.mrf.mxu0
      %1627 = vmatprep.mubr.f32.mxu0 %v1519
      %1628 = vmatmul.mubr.f32.gmra.mxu0 %v1493
      %v1629 = vpop.f32.mrf.mxu0
      %v1630 = vadd.f32 %v1509, %v1629
      %v1631 = vpop.f32.mrf.mxu0
      %1632 = vmatprep.mubr.f32.mxu0 %v1521
      %1633 = vmatmul.mubr.f32.gmra.mxu0 %v1494
      %v1634 = vpop.f32.mrf.mxu0
      %v1635 = vadd.f32 %v1509, %v1634
      %v1636 = vpop.f32.mrf.mxu0
      %1637 = vmatprep.mubr.f32.mxu0 %v1523
      %1638 = vmatmul.mubr.f32.gmra.mxu0 %v1495
      %v1639 = vpop.f32.mrf.mxu0
      %v1640 = vadd.f32 %v1509, %v1639
      %v1641 = vpop.f32.mrf.mxu0
      %1642 = vmatprep.mubr.f32.mxu0 %v1525
      %1643 = vmatmul.mubr.f32.gmra.mxu0 %v1496
      %v1644 = vpop.f32.mrf.mxu0
      %v1645 = vadd.f32 %v1509, %v1644
      %v1646 = vpop.f32.mrf.mxu0
      %1647 = vmatprep.mubr.f32.mxu0 %v1527
      %1648 = vmatmul.mubr.f32.gmra.mxu0 %v1497
      %v1649 = vpop.f32.mrf.mxu0
      %v1650 = vadd.f32 %v1509, %v1649
      %v1651 = vpop.f32.mrf.mxu0
      %1652 = vmatprep.mubr.f32.mxu0 %v1529
      %1653 = vmatmul.mubr.f32.gmra.mxu0 %v1498
      %v1654 = vpop.f32.mrf.mxu0
      %v1655 = vadd.f32 %v1509, %v1654
      %v1656 = vpop.f32.mrf.mxu0
      %1657 = vmatprep.mubr.f32.mxu0 %v1531
      %1658 = vmatmul.mubr.f32.gmra.mxu0 %v1499
      %v1659 = vpop.f32.mrf.mxu0
      %v1660 = vadd.f32 %v1509, %v1659
      %v1661 = vpop.f32.mrf.mxu0
      %1662 = vmatprep.mubr.f32.mxu0 %v1533
      %1663 = vmatmul.mubr.f32.gmra.mxu0 %v1500
      %v1664 = vpop.f32.mrf.mxu0
      %v1665 = vadd.f32 %v1509, %v1664
      %v1666 = vpop.f32.mrf.mxu0
      %1667 = vmatprep.mubr.f32.mxu0 %v1535
      %1668 = vmatmul.mubr.f32.gmra.mxu0 %v1501
      %v1669 = vpop.f32.mrf.mxu0
      %v1670 = vadd.f32 %v1509, %v1669
      %v1671 = vpop.f32.mrf.mxu0
      %1672 = vmatprep.mubr.f32.mxu0 %v1537
      %1673 = vmatmul.mubr.f32.gmra.mxu0 %v1502
      %v1674 = vpop.f32.mrf.mxu0
      %v1675 = vadd.f32 %v1509, %v1674
      %v1676 = vpop.f32.mrf.mxu0
      %1677 = vmatprep.mubr.f32.mxu0 %v1539
      %1678 = vmatmul.mubr.f32.gmra.mxu0 %v1503
      %v1679 = vpop.f32.mrf.mxu0
      %v1680 = vadd.f32 %v1509, %v1679
      %v1681 = vpop.f32.mrf.mxu0
      %1682 = vmatprep.mubr.f32.mxu0 %v1541
      %1683 = vmatmul.mubr.f32.gmra.mxu0 %v1504
      %v1684 = vpop.f32.mrf.mxu0
      %v1685 = vadd.f32 %v1509, %v1684
      %v1686 = vpop.f32.mrf.mxu0
      %1687 = vdwg.mxu0
      %v1688 = vmax.f32 %v1610, 0.0
      %v1689 = vmax.f32 %v1615, 0.0
      %v1690 = vmax.f32 %v1620, 0.0
      %v1691 = vmax.f32 %v1625, 0.0
      %v1692 = vmax.f32 %v1630, 0.0
      %v1693 = vmax.f32 %v1635, 0.0
      %v1694 = vmax.f32 %v1640, 0.0
      %v1695 = vmax.f32 %v1645, 0.0
      %v1696 = vmax.f32 %v1650, 0.0
      %v1697 = vmax.f32 %v1655, 0.0
      %v1698 = vmax.f32 %v1660, 0.0
      %v1699 = vmax.f32 %v1665, 0.0
      %v1700 = vmax.f32 %v1670, 0.0
      %v1701 = vmax.f32 %v1675, 0.0
      %v1702 = vmax.f32 %v1680, 0.0
      %v1703 = vmax.f32 %v1685, 0.0
      %1704 = vst.msk [vmem:[%s635] sm:$0xff] %vm757, %v1688
      %1705 = vst.msk [vmem:[%s635 + $0x8] sm:$0xff] %vm757, %v1689
      %1706 = vst.msk [vmem:[%s635 + $0x10] sm:$0xff] %vm757, %v1690
      %1707 = vst.msk [vmem:[%s635 + $0x18] sm:$0xff] %vm757, %v1691
      %1708 = vst.msk [vmem:[%s635 + $0x20] sm:$0xff] %vm757, %v1692
      %1709 = vst.msk [vmem:[%s635 + $0x28] sm:$0xff] %vm757, %v1693
      %1710 = vst.msk [vmem:[%s635 + $0x30] sm:$0xff] %vm757, %v1694
      %1711 = vst.msk [vmem:[%s635 + $0x38] sm:$0xff] %vm757, %v1695
      %1712 = vst.msk [vmem:[%s635 + $0x40] sm:$0xff] %vm757, %v1696
      %1713 = vst.msk [vmem:[%s635 + $0x48] sm:$0xff] %vm757, %v1697
      %1714 = vst.msk [vmem:[%s635 + $0x50] sm:$0xff] %vm757, %v1698
      %1715 = vst.msk [vmem:[%s635 + $0x58] sm:$0xff] %vm757, %v1699
      %1716 = vst.msk [vmem:[%s635 + $0x60] sm:$0xff] %vm757, %v1700
      %1717 = vst.msk [vmem:[%s635 + $0x68] sm:$0xff] %vm757, %v1701
      %1718 = vst.msk [vmem:[%s635 + $0x70] sm:$0xff] %vm757, %v1702
      %1719 = vst.msk [vmem:[%s635 + $0x78] sm:$0xff] %vm757, %v1703
      %s1720 = smul.u32 8, %s24
      %p1721 = scmp.lt.s32.totalorder %s23, 1
      %s1722 = scalar_select %p1721, %s23, 1
      %p1723 = scmp.lt.s32.totalorder %s1720, 15
      %s1724 = scalar_select %p1723, %s1720, 15
      %s1725 = smul.addr %s1724, 2
      %s1726 = smul.addr %s1722, 32
      %s1727 = sadd.s32 %s1725, %s1726
      %s1728 = smul.addr %s1727, 8
      %s1729 = scalar_lea.vmem %s8, %s1728
      // Predicated region
      $region53: #{up_block_forward.4} parent=51 // pred_check
        %p1730 = pneg %p293
      $region54: #{up_block_forward.4} parent=51 // pred_check_branch
        %1732 = sbr.rel (%p1730) target = $region56
      $region55: #{up_block_forward.4} parent=51 // pred_region
        %s1733 = smul.u32 8, %s24
      $region56: #{up_block_forward.4} parent=51 // pred_fallthru
        _
    $region52: #{up_block_forward.4} parent=5 // pred_fallthru
      _
    %p1734 = scmp.le.s32.totalorder 2, %s14
    // Predicated region
    $region57: #{up_block_forward.4} parent=5 // pred_check
      %p1735 = pneg %p1734
    $region58: #{up_block_forward.4} parent=5 // pred_check_branch
      %1737 = sbr.rel (%p1735) target = $region60
    $region59: #{up_block_forward.4} parent=5 // pred_region
      %s1738 = ssub.s32 %s14, 2
      // Predicated region
      $region61: #{up_block_forward.4} parent=59 // pred_check
        %p1739 = pneg %p299
      $region62: #{up_block_forward.4} parent=59 // pred_check_branch
        %1741 = sbr.rel (%p1739) target = $region64
      $region63: #{up_block_forward.4} parent=59 // pred_region
        %s1742 = smul.u32 8, %s26
        %p1743 = scmp.lt.s32.totalorder %s25, 1
        %s1744 = scalar_select %p1743, %s25, 1
        %p1745 = scmp.lt.s32.totalorder %s1742, 15
        %s1746 = scalar_select %p1745, %s1742, 15
        %s1747 = smul.addr %s1746, 2
        %s1748 = smul.addr %s1744, 32
        %s1749 = sadd.s32 %s1747, %s1748
        %s1750 = smul.addr %s1749, 8
        %s1751 = scalar_lea.vmem %s8, %s1750
      $region64: #{up_block_forward.4} parent=59 // pred_fallthru
        _
    $region60: #{up_block_forward.4} parent=5 // pred_fallthru
      _
  $region6: #{up_block_forward.4} parent=0 // loop_footer
    %s18 = sadd.s32 1, %s14
  $region7: #{up_block_forward.4} parent=0 // loop_footer_branch
    %13 = sbr.rel target = $region3
  $region8: #{up_block_forward.4} parent=0 // loop_exit
    _

</llo_original>
